<compile_context>
chip_gen: v7x
topology: tpu7x:2x2x1
jax: 0.10.0
libtpu: 0.0.40
codegen_flags: <defaults>
</compile_context>

<pallas_src>
import functools

import jax
import jax.numpy as jnp
from jax import lax
from jax.experimental import pallas as pl
from jax.experimental.pallas import tpu as pltpu


# ------------------------------ fused kernel ------------------------------- #

def _decoder_kernel(high_ref, x2_ref, mask_ref, psum_ref,
                    upw_ref, upb_ref,
                    w1_ref, b1_ref, g1_ref, be1_ref,
                    w2_ref, b2_ref, g2_ref, be2_ref,
                    out_ref, *, n_mid, n_out, PAD, RW, C16, inv_npix):
    """Whole decoder stage on lane-packed, zero-spacer-rastered slabs.

    Rows raster the low-res grid (b, y, x) with a zero spacer column per image
    row (stride RW = Wh+1) and a zero spacer row per image, plus zero margins
    (2*PAD on inputs, PAD on the mid layer, 0 on the output).  Lanes are
    parity x channel (p = 2*pi + pj major).  The 9 taps of a 3x3 "same" conv on
    the full-res image are exactly 9 static row shifts d = u*RW + v of the slab,
    and the zero spacers implement the conv's zero padding for free.
    """
    f32, bf16 = jnp.float32, jnp.bfloat16
    mask = mask_ref[...]                    # (n_in, 1) f32: 1.0 on real-pixel rows
    psum = psum_ref[...]                    # (C16, C16) f32 parity-pooling matrix

    # ---- ConvTranspose2d(k=2, s=2): ONE lane-packed matmul --------------------
    x1 = jnp.dot(high_ref[...], upw_ref[...], preferred_element_type=f32)
    x1 = (x1 + upb_ref[...]) * mask         # re-zero spacer / margin rows
    # concat([x1, skip]) fused on the lane axis -> conv1 lhs (never hits HBM)
    lhs1 = jnp.concatenate([x1.astype(bf16), x2_ref[...]], axis=1)   # (n_in, 32)

    def conv3x3(slab, w_ref, bias16, n):
        # slab: (n + 2*PAD, K) bf16; w_ref: (9, K, C16) bf16 shift-packed taps.
        # 9 full-lane matmuls, no per-tap masks / casts.
        pad_in = (slab.shape[0] - n) // 2
        acc = jnp.zeros((n, C16), f32)
        s = 0
        for u in (-1, 0, 1):
            for v in (-1, 0, 1):
                d = u * RW + v
                acc = acc + jnp.dot(slab[pad_in + d: pad_in + d + n, :], w_ref[s],
                                    preferred_element_type=f32)
                s += 1
        return acc + bias16

    def bn_relu(y, gamma16, beta16, m):
        # Training-mode BatchNorm (biased batch stats, eps=1e-5) + ReLU on the
        # packed slab.  Per-channel stats pool the 4 parity lane groups with one
        # tiny matmul against `psum` (result is already tiled back to 16 lanes).
        ym = y * m                                               # zero non-real rows
        csum = jnp.sum(ym, axis=0, keepdims=True)                # (1, C16)
        mean16 = jnp.dot(csum, psum, preferred_element_type=f32) * inv_npix
        d = (ym - mean16) * m
        vsum = jnp.sum(d * d, axis=0, keepdims=True)
        var16 = jnp.dot(vsum, psum, preferred_element_type=f32) * inv_npix
        scale16 = lax.rsqrt(var16 + 1e-5) * gamma16
        # spacer / margin rows end up exactly 0 -> valid zero padding for conv2
        return jnp.maximum(d * scale16 + beta16, 0.0) * m

    y = conv3x3(lhs1, w1_ref, b1_ref[...], n_mid)
    y = bn_relu(y, g1_ref[...], be1_ref[...], mask[PAD: PAD + n_mid, :])
    y = conv3x3(y.astype(bf16), w2_ref, b2_ref[...], n_out)
    y = bn_relu(y, g2_ref[...], be2_ref[...], mask[2 * PAD: 2 * PAD + n_out, :])

    out_ref[...] = y                                             # (n_out, C16) f32


# --------------------------------- wrapper --------------------------------- #

def init_decoder_params(key, in_channels, out_channels):
    ks = jax.random.split(key, 4)
    return {
        "up_w": 0.1 * jax.random.normal(ks[0], (in_channels, out_channels, 2, 2), jnp.float32),
        "up_b": jnp.zeros((out_channels,), jnp.float32),
        "c1_w": 0.1 * jax.random.normal(ks[1], (out_channels, in_channels, 3, 3), jnp.float32),
        "c1_b": jnp.zeros((out_channels,), jnp.float32),
        "bn1_g": jnp.ones((out_channels,), jnp.float32),
        "bn1_b": jnp.zeros((out_channels,), jnp.float32),
        "c2_w": 0.1 * jax.random.normal(ks[2], (out_channels, out_channels, 3, 3), jnp.float32),
        "c2_b": jnp.zeros((out_channels,), jnp.float32),
        "bn2_g": jnp.ones((out_channels,), jnp.float32),
        "bn2_b": jnp.zeros((out_channels,), jnp.float32),
    }


def decoder_forward(p, high_nchw, low_nchw):
    B, Cin, Hh, Wh = high_nchw.shape
    Cout = p["up_b"].shape[0]
    Cskip = low_nchw.shape[1]
    assert Cout + Cskip == Cin, "concat channels must equal in_channels"
    H, W = 2 * Hh, 2 * Wh
    RW = Wh + 1                       # raster row stride (one zero spacer column)
    Simg = (Hh + 1) * RW              # rows per image incl. trailing zero row
    R = B * Simg                      # "real region" rows
    PAD = Wh + 2                      # max |row shift| of a 3x3 tap in the raster
    n_out, n_mid, n_in = R, R + 2 * PAD, R + 4 * PAD
    C16 = 4 * Cout
    inv_npix = 1.0 / float(B * H * W)

    # ---- skip padding exactly like the torch module (odd offset -> extra col on
    #      W-right and extra row on H-top); lax.pad crops for negative offsets.
    off = H - low_nchw.shape[2]
    a = off // 2
    wl, wr, ht, hb = a, a, a, a
    if off % 2 == 1:
        wr += 1
        ht += 1
    zero = jnp.array(0.0, low_nchw.dtype)
    x2 = lax.pad(low_nchw, zero, ((0, 0, 0), (0, 0, 0), (ht, hb, 0), (wl, wr, 0)))
    assert x2.shape[2] == H and x2.shape[3] == W, "skip does not match upsampled size"

    # ---- zero-spacer raster: (B, Hh, Wh, C) real data embedded in (B, Hh+1, Wh+1, C)
    def to_raster(x_bhwc):
        Cc = x_bhwc.shape[-1]
        buf = jnp.zeros((B, Hh + 1, Wh + 1, Cc), x_bhwc.dtype)
        buf = buf.at[:, :Hh, :Wh, :].set(x_bhwc)
        return jnp.pad(buf.reshape(R, Cc), ((2 * PAD, 2 * PAD), (0, 0)))

    high_slab = to_raster(jnp.transpose(high_nchw, (0, 2, 3, 1))).astype(jnp.bfloat16)

    # skip: parity planes packed on lanes (lane = (2*pi+pj)*Cskip + c), bf16
    x2_planes = jnp.concatenate(
        [jnp.transpose(x2[:, :, pi::2, pj::2], (0, 2, 3, 1))
         for pi in (0, 1) for pj in (0, 1)], axis=-1)            # (B, Hh, Wh, 4*Cskip)
    x2_slab = to_raster(x2_planes).astype(jnp.bfloat16)

    # real-pixel row mask (1.0 on real rows, 0.0 on spacers / margins)
    mask = to_raster(jnp.ones((B, Hh, Wh, 1), jnp.float32))

    # parity-pooling matrix for BN stats: P[i, j] = (i % Cout == j % Cout)
    lane = jnp.arange(C16)
    psum = ((lane[:, None] % Cout) == (lane[None, :] % Cout)).astype(jnp.float32)

    # ---- weights as lane/shift-packed MXU operands ----------------------------
    # ConvT: (Cin, 4*Cout), column (2*pi+pj)*Cout + o = up_w[c, o, pi, pj]
    upw = jnp.transpose(p["up_w"], (0, 2, 3, 1)).reshape(Cin, C16).astype(jnp.bfloat16)

    def pack_taps(w_g):
        # w_g: (Co, Cg, 3, 3) -> (9, 4*Cg, 4*Co), shift index s = (u+1)*3 + (v+1);
        # row = q*Cg + c (input parity q), col = p*Co + o (output parity p).
        Co, Cg = w_g.shape[0], w_g.shape[1]
        shifts = []
        for u in (-1, 0, 1):
            for v in (-1, 0, 1):
                rows = []
                for qi in (0, 1):
                    for qj in (0, 1):
                        cols = []
                        for pi in (0, 1):
                            for pj in (0, 1):
                                dy, dx = 2 * u + qi - pi, 2 * v + qj - pj
                                if -1 <= dy <= 1 and -1 <= dx <= 1:
                                    cols.append(jnp.transpose(w_g[:, :, dy + 1, dx + 1]))
                                else:
                                    cols.append(jnp.zeros((Cg, Co), w_g.dtype))
                        rows.append(jnp.concatenate(cols, axis=1))
                shifts.append(jnp.concatenate(rows, axis=0))
        return jnp.stack(shifts)

    # conv1 fuses the concat: K axis = [x1 group (4*Cout) | skip group (4*Cskip)]
    w1 = jnp.concatenate([pack_taps(p["c1_w"][:, :Cout]),
                          pack_taps(p["c1_w"][:, Cout:])], axis=1).astype(jnp.bfloat16)
    w2 = pack_taps(p["c2_w"]).astype(jnp.bfloat16)

    tile4 = lambda v: jnp.tile(v.reshape(1, Cout).astype(jnp.float32), (1, 4))
    upb, b1, b2 = tile4(p["up_b"]), tile4(p["c1_b"]), tile4(p["c2_b"])
    g1, be1 = tile4(p["bn1_g"]), tile4(p["bn1_b"])
    g2, be2 = tile4(p["bn2_g"]), tile4(p["bn2_b"])

    vmem = pl.BlockSpec(memory_space=pltpu.MemorySpace.VMEM)
    out = pl.pallas_call(
        functools.partial(_decoder_kernel, n_mid=n_mid, n_out=n_out,
                          PAD=PAD, RW=RW, C16=C16, inv_npix=inv_npix),
        out_shape=jax.ShapeDtypeStruct((n_out, C16), jnp.float32),
        in_specs=[vmem] * 14,
        out_specs=vmem,
    )(high_slab, x2_slab, mask, psum, upw, upb, w1, b1, g1, be1, w2, b2, g2, be2)

    # lane-packed raster -> NCHW (one small relayout of the final output only)
    out = out.reshape(B, Hh + 1, Wh + 1, 2, 2, Cout)[:, :Hh, :Wh]   # drop spacers
    out = jnp.transpose(out, (0, 5, 1, 3, 2, 4))                    # (b,o,y,pi,x,pj)
    return out.reshape(B, Cout, H, W)


# ------------------------- pure-JAX reference (f32) ------------------------- #

def decoder_reference(p, high, low):
    B, Cin, Hh, Wh = high.shape
    Cout = p["up_b"].shape[0]
    x1 = jnp.einsum("bcyx,copq->boypxq", high, p["up_w"]).reshape(B, Cout, 2 * Hh, 2 * Wh)
    x1 = x1 + p["up_b"].reshape(1, -1, 1, 1)
    off = x1.shape[2] - low.shape[2]
    a = off // 2
    wl, wr, ht, hb = a, a, a, a
    if off % 2 == 1:
        wr += 1
        ht += 1
    zero = jnp.array(0.0, low.dtype)
    x2 = lax.pad(low, zero, ((0, 0, 0), (0, 0, 0), (ht, hb, 0), (wl, wr, 0)))
    x = jnp.concatenate([x1, x2], axis=1)

    def conv_bn_relu(x, w, b, g, be):
        y = lax.conv_general_dilated(x, w, (1, 1), "SAME",
                                     dimension_numbers=("NCHW", "OIHW", "NCHW"))
        y = y + b.reshape(1, -1, 1, 1)
        mu = jnp.mean(y, axis=(0, 2, 3), keepdims=True)
        var = jnp.mean((y - mu) ** 2, axis=(0, 2, 3), keepdims=True)
        y = (y - mu) * lax.rsqrt(var + 1e-5) * g.reshape(1, -1, 1, 1) + be.reshape(1, -1, 1, 1)
        return jnp.maximum(y, 0.0)

    x = conv_bn_relu(x, p["c1_w"], p["c1_b"], p["bn1_g"], p["bn1_b"])
    x = conv_bn_relu(x, p["c2_w"], p["c2_b"], p["bn2_g"], p["bn2_b"])
    return x


if __name__ == "__main__":
    key = jax.random.PRNGKey(0)
    in_channels, out_channels = 8, 4
    B, Hh, Wh = 2, 8, 8                       # high spatial; output spatial = 16x16

    kp, kh, kl = jax.random.split(key, 3)
    params = init_decoder_params(kp, in_channels, out_channels)
    high = jax.random.normal(kh, (B, in_channels, Hh, Wh), jnp.float32)
    # skip carries in_channels - out_channels channels so the post-concat tensor
    # has exactly `in_channels` channels, as the module requires.
    low = jax.random.normal(kl, (B, in_channels - out_channels, 2 * Hh, 2 * Wh), jnp.float32)

    fwd = jax.jit(decoder_forward)
    out = fwd(params, high, low)
    jax.block_until_ready(out)
    assert out.shape == (B, out_channels, 2 * Hh, 2 * Wh)

    # numerics check vs. a pure-JAX f32 reference (bf16 MXU operands -> loose tol)
    ref = decoder_reference(params, high, low)
    err_max = float(jnp.max(jnp.abs(out - ref)))
    err_mean = float(jnp.mean(jnp.abs(out - ref)))
    assert err_max < 0.5 and err_mean < 0.05, (err_max, err_mean)

    print("KERNEL_OK")
</pallas_src>

<mosaic_0001>
module attributes {stable_mosaic.version = 11 : i64} {
  func.func @_decoder_kernel(%arg0: memref<202x8xbf16, #tpu.memory_space<vmem>>, %arg1: memref<202x16xbf16, #tpu.memory_space<vmem>>, %arg2: memref<202x1xf32, #tpu.memory_space<vmem>>, %arg3: memref<16x16xf32, #tpu.memory_space<vmem>>, %arg4: memref<8x16xbf16, #tpu.memory_space<vmem>>, %arg5: memref<1x16xf32, #tpu.memory_space<vmem>>, %arg6: memref<9x32x16xbf16, #tpu.memory_space<vmem>>, %arg7: memref<1x16xf32, #tpu.memory_space<vmem>>, %arg8: memref<1x16xf32, #tpu.memory_space<vmem>>, %arg9: memref<1x16xf32, #tpu.memory_space<vmem>>, %arg10: memref<9x16x16xbf16, #tpu.memory_space<vmem>>, %arg11: memref<1x16xf32, #tpu.memory_space<vmem>>, %arg12: memref<1x16xf32, #tpu.memory_space<vmem>>, %arg13: memref<1x16xf32, #tpu.memory_space<vmem>>, %arg14: memref<162x16xf32, #tpu.memory_space<vmem>>) attributes {dimension_semantics = [], scalar_prefetch = 0 : i64, scratch_operands = 0 : i64, tpu.core_type = #tpu.core_type<tc>} {
    %c0 = arith.constant 0 : index
    %c0_0 = arith.constant 0 : index
    %0 = vector.load %arg2[%c0, %c0_0] : memref<202x1xf32, #tpu.memory_space<vmem>>, vector<202x1xf32>
    %c0_1 = arith.constant 0 : index
    %c0_2 = arith.constant 0 : index
    %1 = vector.load %arg3[%c0_1, %c0_2] : memref<16x16xf32, #tpu.memory_space<vmem>>, vector<16x16xf32>
    %c0_3 = arith.constant 0 : index
    %c0_4 = arith.constant 0 : index
    %2 = vector.load %arg0[%c0_3, %c0_4] : memref<202x8xbf16, #tpu.memory_space<vmem>>, vector<202x8xbf16>
    %c0_5 = arith.constant 0 : index
    %c0_6 = arith.constant 0 : index
    %3 = vector.load %arg4[%c0_5, %c0_6] : memref<8x16xbf16, #tpu.memory_space<vmem>>, vector<8x16xbf16>
    %cst = arith.constant dense<0.000000e+00> : vector<202x16xf32>
    %4 = tpu.matmul %2, %3, %cst {dimension_numbers = #tpu.dot_dimension_numbers<[1], [0], [0], [1], [0, 0, 1, 1], [], []>} : vector<202x8xbf16>, vector<8x16xbf16>, vector<202x16xf32> -> vector<202x16xf32>
    %c0_7 = arith.constant 0 : index
    %c0_8 = arith.constant 0 : index
    %5 = vector.load %arg5[%c0_7, %c0_8] : memref<1x16xf32, #tpu.memory_space<vmem>>, vector<1x16xf32>
    %6 = vector.broadcast %5 : vector<1x16xf32> to vector<202x16xf32>
    %7 = arith.addf %4, %6 : vector<202x16xf32>
    %8 = vector.broadcast %0 : vector<202x1xf32> to vector<202x16xf32>
    %9 = arith.mulf %7, %8 : vector<202x16xf32>
    %10 = arith.truncf %9 : vector<202x16xf32> to vector<202x16xbf16>
    %c0_9 = arith.constant 0 : index
    %c0_10 = arith.constant 0 : index
    %11 = vector.load %arg1[%c0_9, %c0_10] : memref<202x16xbf16, #tpu.memory_space<vmem>>, vector<202x16xbf16>
    %12 = tpu.concatenate %10, %11 in 1 : vector<202x16xbf16>, vector<202x16xbf16> -> vector<202x32xbf16>
    %c0_11 = arith.constant 0 : index
    %c0_12 = arith.constant 0 : index
    %13 = vector.load %arg7[%c0_11, %c0_12] : memref<1x16xf32, #tpu.memory_space<vmem>>, vector<1x16xf32>
    %cst_13 = arith.constant 0.000000e+00 : f32
    %14 = vector.broadcast %cst_13 : f32 to vector<182x16xf32>
    %15 = vector.extract_strided_slice %12 {offsets = [0, 0], sizes = [182, 32], strides = [1, 1]} : vector<202x32xbf16> to vector<182x32xbf16>
    %c0_14 = arith.constant 0 : index
    %c0_15 = arith.constant 0 : index
    %c0_16 = arith.constant 0 : index
    %16 = vector.load %arg6[%c0_14, %c0_15, %c0_16] : memref<9x32x16xbf16, #tpu.memory_space<vmem>>, vector<1x32x16xbf16>
    %17 = vector.shape_cast %16 : vector<1x32x16xbf16> to vector<32x16xbf16>
    %cst_17 = arith.constant dense<0.000000e+00> : vector<182x16xf32>
    %18 = tpu.matmul %15, %17, %cst_17 {dimension_numbers = #tpu.dot_dimension_numbers<[1], [0], [0], [1], [0, 0, 1, 1], [], []>} : vector<182x32xbf16>, vector<32x16xbf16>, vector<182x16xf32> -> vector<182x16xf32>
    %19 = arith.addf %14, %18 : vector<182x16xf32>
    %20 = vector.extract_strided_slice %12 {offsets = [1, 0], sizes = [182, 32], strides = [1, 1]} : vector<202x32xbf16> to vector<182x32xbf16>
    %c1 = arith.constant 1 : index
    %c0_18 = arith.constant 0 : index
    %c0_19 = arith.constant 0 : index
    %21 = vector.load %arg6[%c1, %c0_18, %c0_19] : memref<9x32x16xbf16, #tpu.memory_space<vmem>>, vector<1x32x16xbf16>
    %22 = vector.shape_cast %21 : vector<1x32x16xbf16> to vector<32x16xbf16>
    %cst_20 = arith.constant dense<0.000000e+00> : vector<182x16xf32>
    %23 = tpu.matmul %20, %22, %cst_20 {dimension_numbers = #tpu.dot_dimension_numbers<[1], [0], [0], [1], [0, 0, 1, 1], [], []>} : vector<182x32xbf16>, vector<32x16xbf16>, vector<182x16xf32> -> vector<182x16xf32>
    %24 = arith.addf %19, %23 : vector<182x16xf32>
    %25 = vector.extract_strided_slice %12 {offsets = [2, 0], sizes = [182, 32], strides = [1, 1]} : vector<202x32xbf16> to vector<182x32xbf16>
    %c2 = arith.constant 2 : index
    %c0_21 = arith.constant 0 : index
    %c0_22 = arith.constant 0 : index
    %26 = vector.load %arg6[%c2, %c0_21, %c0_22] : memref<9x32x16xbf16, #tpu.memory_space<vmem>>, vector<1x32x16xbf16>
    %27 = vector.shape_cast %26 : vector<1x32x16xbf16> to vector<32x16xbf16>
    %cst_23 = arith.constant dense<0.000000e+00> : vector<182x16xf32>
    %28 = tpu.matmul %25, %27, %cst_23 {dimension_numbers = #tpu.dot_dimension_numbers<[1], [0], [0], [1], [0, 0, 1, 1], [], []>} : vector<182x32xbf16>, vector<32x16xbf16>, vector<182x16xf32> -> vector<182x16xf32>
    %29 = arith.addf %24, %28 : vector<182x16xf32>
    %30 = vector.extract_strided_slice %12 {offsets = [9, 0], sizes = [182, 32], strides = [1, 1]} : vector<202x32xbf16> to vector<182x32xbf16>
    %c3 = arith.constant 3 : index
    %c0_24 = arith.constant 0 : index
    %c0_25 = arith.constant 0 : index
    %31 = vector.load %arg6[%c3, %c0_24, %c0_25] : memref<9x32x16xbf16, #tpu.memory_space<vmem>>, vector<1x32x16xbf16>
    %32 = vector.shape_cast %31 : vector<1x32x16xbf16> to vector<32x16xbf16>
    %cst_26 = arith.constant dense<0.000000e+00> : vector<182x16xf32>
    %33 = tpu.matmul %30, %32, %cst_26 {dimension_numbers = #tpu.dot_dimension_numbers<[1], [0], [0], [1], [0, 0, 1, 1], [], []>} : vector<182x32xbf16>, vector<32x16xbf16>, vector<182x16xf32> -> vector<182x16xf32>
    %34 = arith.addf %29, %33 : vector<182x16xf32>
    %35 = vector.extract_strided_slice %12 {offsets = [10, 0], sizes = [182, 32], strides = [1, 1]} : vector<202x32xbf16> to vector<182x32xbf16>
    %c4 = arith.constant 4 : index
    %c0_27 = arith.constant 0 : index
    %c0_28 = arith.constant 0 : index
    %36 = vector.load %arg6[%c4, %c0_27, %c0_28] : memref<9x32x16xbf16, #tpu.memory_space<vmem>>, vector<1x32x16xbf16>
    %37 = vector.shape_cast %36 : vector<1x32x16xbf16> to vector<32x16xbf16>
    %cst_29 = arith.constant dense<0.000000e+00> : vector<182x16xf32>
    %38 = tpu.matmul %35, %37, %cst_29 {dimension_numbers = #tpu.dot_dimension_numbers<[1], [0], [0], [1], [0, 0, 1, 1], [], []>} : vector<182x32xbf16>, vector<32x16xbf16>, vector<182x16xf32> -> vector<182x16xf32>
    %39 = arith.addf %34, %38 : vector<182x16xf32>
    %40 = vector.extract_strided_slice %12 {offsets = [11, 0], sizes = [182, 32], strides = [1, 1]} : vector<202x32xbf16> to vector<182x32xbf16>
    %c5 = arith.constant 5 : index
    %c0_30 = arith.constant 0 : index
    %c0_31 = arith.constant 0 : index
    %41 = vector.load %arg6[%c5, %c0_30, %c0_31] : memref<9x32x16xbf16, #tpu.memory_space<vmem>>, vector<1x32x16xbf16>
    %42 = vector.shape_cast %41 : vector<1x32x16xbf16> to vector<32x16xbf16>
    %cst_32 = arith.constant dense<0.000000e+00> : vector<182x16xf32>
    %43 = tpu.matmul %40, %42, %cst_32 {dimension_numbers = #tpu.dot_dimension_numbers<[1], [0], [0], [1], [0, 0, 1, 1], [], []>} : vector<182x32xbf16>, vector<32x16xbf16>, vector<182x16xf32> -> vector<182x16xf32>
    %44 = arith.addf %39, %43 : vector<182x16xf32>
    %45 = vector.extract_strided_slice %12 {offsets = [18, 0], sizes = [182, 32], strides = [1, 1]} : vector<202x32xbf16> to vector<182x32xbf16>
    %c6 = arith.constant 6 : index
    %c0_33 = arith.constant 0 : index
    %c0_34 = arith.constant 0 : index
    %46 = vector.load %arg6[%c6, %c0_33, %c0_34] : memref<9x32x16xbf16, #tpu.memory_space<vmem>>, vector<1x32x16xbf16>
    %47 = vector.shape_cast %46 : vector<1x32x16xbf16> to vector<32x16xbf16>
    %cst_35 = arith.constant dense<0.000000e+00> : vector<182x16xf32>
    %48 = tpu.matmul %45, %47, %cst_35 {dimension_numbers = #tpu.dot_dimension_numbers<[1], [0], [0], [1], [0, 0, 1, 1], [], []>} : vector<182x32xbf16>, vector<32x16xbf16>, vector<182x16xf32> -> vector<182x16xf32>
    %49 = arith.addf %44, %48 : vector<182x16xf32>
    %50 = vector.extract_strided_slice %12 {offsets = [19, 0], sizes = [182, 32], strides = [1, 1]} : vector<202x32xbf16> to vector<182x32xbf16>
    %c7 = arith.constant 7 : index
    %c0_36 = arith.constant 0 : index
    %c0_37 = arith.constant 0 : index
    %51 = vector.load %arg6[%c7, %c0_36, %c0_37] : memref<9x32x16xbf16, #tpu.memory_space<vmem>>, vector<1x32x16xbf16>
    %52 = vector.shape_cast %51 : vector<1x32x16xbf16> to vector<32x16xbf16>
    %cst_38 = arith.constant dense<0.000000e+00> : vector<182x16xf32>
    %53 = tpu.matmul %50, %52, %cst_38 {dimension_numbers = #tpu.dot_dimension_numbers<[1], [0], [0], [1], [0, 0, 1, 1], [], []>} : vector<182x32xbf16>, vector<32x16xbf16>, vector<182x16xf32> -> vector<182x16xf32>
    %54 = arith.addf %49, %53 : vector<182x16xf32>
    %55 = vector.extract_strided_slice %12 {offsets = [20, 0], sizes = [182, 32], strides = [1, 1]} : vector<202x32xbf16> to vector<182x32xbf16>
    %c8 = arith.constant 8 : index
    %c0_39 = arith.constant 0 : index
    %c0_40 = arith.constant 0 : index
    %56 = vector.load %arg6[%c8, %c0_39, %c0_40] : memref<9x32x16xbf16, #tpu.memory_space<vmem>>, vector<1x32x16xbf16>
    %57 = vector.shape_cast %56 : vector<1x32x16xbf16> to vector<32x16xbf16>
    %cst_41 = arith.constant dense<0.000000e+00> : vector<182x16xf32>
    %58 = tpu.matmul %55, %57, %cst_41 {dimension_numbers = #tpu.dot_dimension_numbers<[1], [0], [0], [1], [0, 0, 1, 1], [], []>} : vector<182x32xbf16>, vector<32x16xbf16>, vector<182x16xf32> -> vector<182x16xf32>
    %59 = arith.addf %54, %58 : vector<182x16xf32>
    %60 = vector.broadcast %13 : vector<1x16xf32> to vector<182x16xf32>
    %61 = arith.addf %59, %60 : vector<182x16xf32>
    %c0_42 = arith.constant 0 : index
    %c0_43 = arith.constant 0 : index
    %62 = vector.load %arg8[%c0_42, %c0_43] : memref<1x16xf32, #tpu.memory_space<vmem>>, vector<1x16xf32>
    %c0_44 = arith.constant 0 : index
    %c0_45 = arith.constant 0 : index
    %63 = vector.load %arg9[%c0_44, %c0_45] : memref<1x16xf32, #tpu.memory_space<vmem>>, vector<1x16xf32>
    %64 = vector.extract_strided_slice %0 {offsets = [10, 0], sizes = [182, 1], strides = [1, 1]} : vector<202x1xf32> to vector<182x1xf32>
    %65 = vector.broadcast %64 : vector<182x1xf32> to vector<182x16xf32>
    %66 = arith.mulf %61, %65 : vector<182x16xf32>
    %cst_46 = arith.constant dense<0.000000e+00> : vector<16xf32>
    %67 = vector.multi_reduction <add>, %66, %cst_46 [0] : vector<182x16xf32> to vector<16xf32>
    %68 = vector.shape_cast %67 : vector<16xf32> to vector<1x16xf32>
    %cst_47 = arith.constant dense<0.000000e+00> : vector<1x16xf32>
    %69 = tpu.matmul %68, %1, %cst_47 {dimension_numbers = #tpu.dot_dimension_numbers<[1], [0], [0], [1], [0, 0, 1, 1], [], []>} : vector<1x16xf32>, vector<16x16xf32>, vector<1x16xf32> -> vector<1x16xf32>
    %cst_48 = arith.constant 0.001953125 : f32
    %70 = vector.broadcast %cst_48 : f32 to vector<1x16xf32>
    %71 = arith.mulf %69, %70 : vector<1x16xf32>
    %72 = vector.broadcast %71 : vector<1x16xf32> to vector<182x16xf32>
    %73 = arith.subf %66, %72 : vector<182x16xf32>
    %74 = vector.broadcast %64 : vector<182x1xf32> to vector<182x16xf32>
    %75 = arith.mulf %73, %74 : vector<182x16xf32>
    %76 = arith.mulf %75, %75 : vector<182x16xf32>
    %cst_49 = arith.constant dense<0.000000e+00> : vector<16xf32>
    %77 = vector.multi_reduction <add>, %76, %cst_49 [0] : vector<182x16xf32> to vector<16xf32>
    %78 = vector.shape_cast %77 : vector<16xf32> to vector<1x16xf32>
    %cst_50 = arith.constant dense<0.000000e+00> : vector<1x16xf32>
    %79 = tpu.matmul %78, %1, %cst_50 {dimension_numbers = #tpu.dot_dimension_numbers<[1], [0], [0], [1], [0, 0, 1, 1], [], []>} : vector<1x16xf32>, vector<16x16xf32>, vector<1x16xf32> -> vector<1x16xf32>
    %cst_51 = arith.constant 0.001953125 : f32
    %80 = vector.broadcast %cst_51 : f32 to vector<1x16xf32>
    %81 = arith.mulf %79, %80 : vector<1x16xf32>
    %cst_52 = arith.constant 9.99999974E-6 : f32
    %82 = vector.broadcast %cst_52 : f32 to vector<1x16xf32>
    %83 = arith.addf %81, %82 : vector<1x16xf32>
    %84 = math.rsqrt %83 : vector<1x16xf32>
    %85 = arith.mulf %84, %62 : vector<1x16xf32>
    %86 = vector.broadcast %85 : vector<1x16xf32> to vector<182x16xf32>
    %87 = arith.mulf %75, %86 : vector<182x16xf32>
    %88 = vector.broadcast %63 : vector<1x16xf32> to vector<182x16xf32>
    %89 = arith.addf %87, %88 : vector<182x16xf32>
    %cst_53 = arith.constant 0.000000e+00 : f32
    %90 = vector.broadcast %cst_53 : f32 to vector<182x16xf32>
    %91 = arith.maximumf %89, %90 : vector<182x16xf32>
    %92 = vector.broadcast %64 : vector<182x1xf32> to vector<182x16xf32>
    %93 = arith.mulf %91, %92 : vector<182x16xf32>
    %94 = arith.truncf %93 : vector<182x16xf32> to vector<182x16xbf16>
    %c0_54 = arith.constant 0 : index
    %c0_55 = arith.constant 0 : index
    %95 = vector.load %arg11[%c0_54, %c0_55] : memref<1x16xf32, #tpu.memory_space<vmem>>, vector<1x16xf32>
    %cst_56 = arith.constant 0.000000e+00 : f32
    %96 = vector.broadcast %cst_56 : f32 to vector<162x16xf32>
    %97 = vector.extract_strided_slice %94 {offsets = [0, 0], sizes = [162, 16], strides = [1, 1]} : vector<182x16xbf16> to vector<162x16xbf16>
    %c0_57 = arith.constant 0 : index
    %c0_58 = arith.constant 0 : index
    %c0_59 = arith.constant 0 : index
    %98 = vector.load %arg10[%c0_57, %c0_58, %c0_59] : memref<9x16x16xbf16, #tpu.memory_space<vmem>>, vector<1x16x16xbf16>
    %99 = vector.shape_cast %98 : vector<1x16x16xbf16> to vector<16x16xbf16>
    %cst_60 = arith.constant dense<0.000000e+00> : vector<162x16xf32>
    %100 = tpu.matmul %97, %99, %cst_60 {dimension_numbers = #tpu.dot_dimension_numbers<[1], [0], [0], [1], [0, 0, 1, 1], [], []>} : vector<162x16xbf16>, vector<16x16xbf16>, vector<162x16xf32> -> vector<162x16xf32>
    %101 = arith.addf %96, %100 : vector<162x16xf32>
    %102 = vector.extract_strided_slice %94 {offsets = [1, 0], sizes = [162, 16], strides = [1, 1]} : vector<182x16xbf16> to vector<162x16xbf16>
    %c1_61 = arith.constant 1 : index
    %c0_62 = arith.constant 0 : index
    %c0_63 = arith.constant 0 : index
    %103 = vector.load %arg10[%c1_61, %c0_62, %c0_63] : memref<9x16x16xbf16, #tpu.memory_space<vmem>>, vector<1x16x16xbf16>
    %104 = vector.shape_cast %103 : vector<1x16x16xbf16> to vector<16x16xbf16>
    %cst_64 = arith.constant dense<0.000000e+00> : vector<162x16xf32>
    %105 = tpu.matmul %102, %104, %cst_64 {dimension_numbers = #tpu.dot_dimension_numbers<[1], [0], [0], [1], [0, 0, 1, 1], [], []>} : vector<162x16xbf16>, vector<16x16xbf16>, vector<162x16xf32> -> vector<162x16xf32>
    %106 = arith.addf %101, %105 : vector<162x16xf32>
    %107 = vector.extract_strided_slice %94 {offsets = [2, 0], sizes = [162, 16], strides = [1, 1]} : vector<182x16xbf16> to vector<162x16xbf16>
    %c2_65 = arith.constant 2 : index
    %c0_66 = arith.constant 0 : index
    %c0_67 = arith.constant 0 : index
    %108 = vector.load %arg10[%c2_65, %c0_66, %c0_67] : memref<9x16x16xbf16, #tpu.memory_space<vmem>>, vector<1x16x16xbf16>
    %109 = vector.shape_cast %108 : vector<1x16x16xbf16> to vector<16x16xbf16>
    %cst_68 = arith.constant dense<0.000000e+00> : vector<162x16xf32>
    %110 = tpu.matmul %107, %109, %cst_68 {dimension_numbers = #tpu.dot_dimension_numbers<[1], [0], [0], [1], [0, 0, 1, 1], [], []>} : vector<162x16xbf16>, vector<16x16xbf16>, vector<162x16xf32> -> vector<162x16xf32>
    %111 = arith.addf %106, %110 : vector<162x16xf32>
    %112 = vector.extract_strided_slice %94 {offsets = [9, 0], sizes = [162, 16], strides = [1, 1]} : vector<182x16xbf16> to vector<162x16xbf16>
    %c3_69 = arith.constant 3 : index
    %c0_70 = arith.constant 0 : index
    %c0_71 = arith.constant 0 : index
    %113 = vector.load %arg10[%c3_69, %c0_70, %c0_71] : memref<9x16x16xbf16, #tpu.memory_space<vmem>>, vector<1x16x16xbf16>
    %114 = vector.shape_cast %113 : vector<1x16x16xbf16> to vector<16x16xbf16>
    %cst_72 = arith.constant dense<0.000000e+00> : vector<162x16xf32>
    %115 = tpu.matmul %112, %114, %cst_72 {dimension_numbers = #tpu.dot_dimension_numbers<[1], [0], [0], [1], [0, 0, 1, 1], [], []>} : vector<162x16xbf16>, vector<16x16xbf16>, vector<162x16xf32> -> vector<162x16xf32>
    %116 = arith.addf %111, %115 : vector<162x16xf32>
    %117 = vector.extract_strided_slice %94 {offsets = [10, 0], sizes = [162, 16], strides = [1, 1]} : vector<182x16xbf16> to vector<162x16xbf16>
    %c4_73 = arith.constant 4 : index
    %c0_74 = arith.constant 0 : index
    %c0_75 = arith.constant 0 : index
    %118 = vector.load %arg10[%c4_73, %c0_74, %c0_75] : memref<9x16x16xbf16, #tpu.memory_space<vmem>>, vector<1x16x16xbf16>
    %119 = vector.shape_cast %118 : vector<1x16x16xbf16> to vector<16x16xbf16>
    %cst_76 = arith.constant dense<0.000000e+00> : vector<162x16xf32>
    %120 = tpu.matmul %117, %119, %cst_76 {dimension_numbers = #tpu.dot_dimension_numbers<[1], [0], [0], [1], [0, 0, 1, 1], [], []>} : vector<162x16xbf16>, vector<16x16xbf16>, vector<162x16xf32> -> vector<162x16xf32>
    %121 = arith.addf %116, %120 : vector<162x16xf32>
    %122 = vector.extract_strided_slice %94 {offsets = [11, 0], sizes = [162, 16], strides = [1, 1]} : vector<182x16xbf16> to vector<162x16xbf16>
    %c5_77 = arith.constant 5 : index
    %c0_78 = arith.constant 0 : index
    %c0_79 = arith.constant 0 : index
    %123 = vector.load %arg10[%c5_77, %c0_78, %c0_79] : memref<9x16x16xbf16, #tpu.memory_space<vmem>>, vector<1x16x16xbf16>
    %124 = vector.shape_cast %123 : vector<1x16x16xbf16> to vector<16x16xbf16>
    %cst_80 = arith.constant dense<0.000000e+00> : vector<162x16xf32>
    %125 = tpu.matmul %122, %124, %cst_80 {dimension_numbers = #tpu.dot_dimension_numbers<[1], [0], [0], [1], [0, 0, 1, 1], [], []>} : vector<162x16xbf16>, vector<16x16xbf16>, vector<162x16xf32> -> vector<162x16xf32>
    %126 = arith.addf %121, %125 : vector<162x16xf32>
    %127 = vector.extract_strided_slice %94 {offsets = [18, 0], sizes = [162, 16], strides = [1, 1]} : vector<182x16xbf16> to vector<162x16xbf16>
    %c6_81 = arith.constant 6 : index
    %c0_82 = arith.constant 0 : index
    %c0_83 = arith.constant 0 : index
    %128 = vector.load %arg10[%c6_81, %c0_82, %c0_83] : memref<9x16x16xbf16, #tpu.memory_space<vmem>>, vector<1x16x16xbf16>
    %129 = vector.shape_cast %128 : vector<1x16x16xbf16> to vector<16x16xbf16>
    %cst_84 = arith.constant dense<0.000000e+00> : vector<162x16xf32>
    %130 = tpu.matmul %127, %129, %cst_84 {dimension_numbers = #tpu.dot_dimension_numbers<[1], [0], [0], [1], [0, 0, 1, 1], [], []>} : vector<162x16xbf16>, vector<16x16xbf16>, vector<162x16xf32> -> vector<162x16xf32>
    %131 = arith.addf %126, %130 : vector<162x16xf32>
    %132 = vector.extract_strided_slice %94 {offsets = [19, 0], sizes = [162, 16], strides = [1, 1]} : vector<182x16xbf16> to vector<162x16xbf16>
    %c7_85 = arith.constant 7 : index
    %c0_86 = arith.constant 0 : index
    %c0_87 = arith.constant 0 : index
    %133 = vector.load %arg10[%c7_85, %c0_86, %c0_87] : memref<9x16x16xbf16, #tpu.memory_space<vmem>>, vector<1x16x16xbf16>
    %134 = vector.shape_cast %133 : vector<1x16x16xbf16> to vector<16x16xbf16>
    %cst_88 = arith.constant dense<0.000000e+00> : vector<162x16xf32>
    %135 = tpu.matmul %132, %134, %cst_88 {dimension_numbers = #tpu.dot_dimension_numbers<[1], [0], [0], [1], [0, 0, 1, 1], [], []>} : vector<162x16xbf16>, vector<16x16xbf16>, vector<162x16xf32> -> vector<162x16xf32>
    %136 = arith.addf %131, %135 : vector<162x16xf32>
    %137 = vector.extract_strided_slice %94 {offsets = [20, 0], sizes = [162, 16], strides = [1, 1]} : vector<182x16xbf16> to vector<162x16xbf16>
    %c8_89 = arith.constant 8 : index
    %c0_90 = arith.constant 0 : index
    %c0_91 = arith.constant 0 : index
    %138 = vector.load %arg10[%c8_89, %c0_90, %c0_91] : memref<9x16x16xbf16, #tpu.memory_space<vmem>>, vector<1x16x16xbf16>
    %139 = vector.shape_cast %138 : vector<1x16x16xbf16> to vector<16x16xbf16>
    %cst_92 = arith.constant dense<0.000000e+00> : vector<162x16xf32>
    %140 = tpu.matmul %137, %139, %cst_92 {dimension_numbers = #tpu.dot_dimension_numbers<[1], [0], [0], [1], [0, 0, 1, 1], [], []>} : vector<162x16xbf16>, vector<16x16xbf16>, vector<162x16xf32> -> vector<162x16xf32>
    %141 = arith.addf %136, %140 : vector<162x16xf32>
    %142 = vector.broadcast %95 : vector<1x16xf32> to vector<162x16xf32>
    %143 = arith.addf %141, %142 : vector<162x16xf32>
    %c0_93 = arith.constant 0 : index
    %c0_94 = arith.constant 0 : index
    %144 = vector.load %arg12[%c0_93, %c0_94] : memref<1x16xf32, #tpu.memory_space<vmem>>, vector<1x16xf32>
    %c0_95 = arith.constant 0 : index
    %c0_96 = arith.constant 0 : index
    %145 = vector.load %arg13[%c0_95, %c0_96] : memref<1x16xf32, #tpu.memory_space<vmem>>, vector<1x16xf32>
    %146 = vector.extract_strided_slice %0 {offsets = [20, 0], sizes = [162, 1], strides = [1, 1]} : vector<202x1xf32> to vector<162x1xf32>
    %147 = vector.broadcast %146 : vector<162x1xf32> to vector<162x16xf32>
    %148 = arith.mulf %143, %147 : vector<162x16xf32>
    %cst_97 = arith.constant dense<0.000000e+00> : vector<16xf32>
    %149 = vector.multi_reduction <add>, %148, %cst_97 [0] : vector<162x16xf32> to vector<16xf32>
    %150 = vector.shape_cast %149 : vector<16xf32> to vector<1x16xf32>
    %cst_98 = arith.constant dense<0.000000e+00> : vector<1x16xf32>
    %151 = tpu.matmul %150, %1, %cst_98 {dimension_numbers = #tpu.dot_dimension_numbers<[1], [0], [0], [1], [0, 0, 1, 1], [], []>} : vector<1x16xf32>, vector<16x16xf32>, vector<1x16xf32> -> vector<1x16xf32>
    %cst_99 = arith.constant 0.001953125 : f32
    %152 = vector.broadcast %cst_99 : f32 to vector<1x16xf32>
    %153 = arith.mulf %151, %152 : vector<1x16xf32>
    %154 = vector.broadcast %153 : vector<1x16xf32> to vector<162x16xf32>
    %155 = arith.subf %148, %154 : vector<162x16xf32>
    %156 = vector.broadcast %146 : vector<162x1xf32> to vector<162x16xf32>
    %157 = arith.mulf %155, %156 : vector<162x16xf32>
    %158 = arith.mulf %157, %157 : vector<162x16xf32>
    %cst_100 = arith.constant dense<0.000000e+00> : vector<16xf32>
    %159 = vector.multi_reduction <add>, %158, %cst_100 [0] : vector<162x16xf32> to vector<16xf32>
    %160 = vector.shape_cast %159 : vector<16xf32> to vector<1x16xf32>
    %cst_101 = arith.constant dense<0.000000e+00> : vector<1x16xf32>
    %161 = tpu.matmul %160, %1, %cst_101 {dimension_numbers = #tpu.dot_dimension_numbers<[1], [0], [0], [1], [0, 0, 1, 1], [], []>} : vector<1x16xf32>, vector<16x16xf32>, vector<1x16xf32> -> vector<1x16xf32>
    %cst_102 = arith.constant 0.001953125 : f32
    %162 = vector.broadcast %cst_102 : f32 to vector<1x16xf32>
    %163 = arith.mulf %161, %162 : vector<1x16xf32>
    %cst_103 = arith.constant 9.99999974E-6 : f32
    %164 = vector.broadcast %cst_103 : f32 to vector<1x16xf32>
    %165 = arith.addf %163, %164 : vector<1x16xf32>
    %166 = math.rsqrt %165 : vector<1x16xf32>
    %167 = arith.mulf %166, %144 : vector<1x16xf32>
    %168 = vector.broadcast %167 : vector<1x16xf32> to vector<162x16xf32>
    %169 = arith.mulf %157, %168 : vector<162x16xf32>
    %170 = vector.broadcast %145 : vector<1x16xf32> to vector<162x16xf32>
    %171 = arith.addf %169, %170 : vector<162x16xf32>
    %cst_104 = arith.constant 0.000000e+00 : f32
    %172 = vector.broadcast %cst_104 : f32 to vector<162x16xf32>
    %173 = arith.maximumf %171, %172 : vector<162x16xf32>
    %174 = vector.broadcast %146 : vector<162x1xf32> to vector<162x16xf32>
    %175 = arith.mulf %173, %174 : vector<162x16xf32>
    %c0_105 = arith.constant 0 : index
    %c0_106 = arith.constant 0 : index
    %176 = vector.load %arg14[%c0_105, %c0_106] : memref<162x16xf32, #tpu.memory_space<vmem>>, vector<162x16xf32>
    tpu.vector_store %arg14[%c0_105, %c0_106], %175 {strides = array<i32>} : memref<162x16xf32, #tpu.memory_space<vmem>>, vector<162x16xf32>,
    return
  }
}

</mosaic_0001>

<llo_original>
// kernel: decoder_forward.1
$region0: #{decoder_forward.1}
  #allocation0 [shape = 'u32[]', space=smem, size = 0x4, offset = 0x4, fixed_abs, tag = 'smem constant byte address 0x4 - core index']
  #allocation1 [shape = 'u32[144,128]{1,0:T(1,128)}', space=vmem, size = 0x12000, scoped, tag = 'internal scratch']
  %s0 = inlined_call_operand.vmem [shape: bf16[202,8], index: 0, kind: input, shape index: {}]
  %s1 = inlined_call_operand.vmem [shape: bf16[202,16], index: 1, kind: input, shape index: {}]
  %s2 = inlined_call_operand.vmem [shape: f32[202,1], index: 2, kind: input, shape index: {}]
  %s3 = inlined_call_operand.vmem [shape: f32[16,16], index: 3, kind: input, shape index: {}]
  %s4 = inlined_call_operand.vmem [shape: bf16[8,16], index: 4, kind: input, shape index: {}]
  %s5 = inlined_call_operand.vmem [shape: f32[1,16], index: 5, kind: input, shape index: {}]
  %s6 = inlined_call_operand.vmem [shape: bf16[9,32,16], index: 6, kind: input, shape index: {}]
  %s7 = inlined_call_operand.vmem [shape: f32[1,16], index: 7, kind: input, shape index: {}]
  %s8 = inlined_call_operand.vmem [shape: f32[1,16], index: 8, kind: input, shape index: {}]
  %s9 = inlined_call_operand.vmem [shape: f32[1,16], index: 9, kind: input, shape index: {}]
  %s10 = inlined_call_operand.vmem [shape: bf16[9,16,16], index: 10, kind: input, shape index: {}]
  %s11 = inlined_call_operand.vmem [shape: f32[1,16], index: 11, kind: input, shape index: {}]
  %s12 = inlined_call_operand.vmem [shape: f32[1,16], index: 12, kind: input, shape index: {}]
  %s13 = inlined_call_operand.vmem [shape: f32[1,16], index: 13, kind: input, shape index: {}]
  %s14 = inlined_call_operand.vmem [shape: f32[162,16], index: 14, kind: output, shape index: {}]
  %s15 = sld [smem:[#allocation0]]
  $region66: #{decoder_forward.1} parent=0
    _
  %s17 = ssub.s32 1, %s15
  %s18 = scalar_select 0, %s17, %s15
  // Predicated region
  $region2: #{decoder_forward.1} parent=0 // pred_check
    _
  $region3: #{decoder_forward.1} parent=0 // pred_check_branch
    %20 = sbr.rel (0) target = $region5
  $region4: #{decoder_forward.1} parent=0 // pred_region
    _
  $region5: #{decoder_forward.1} parent=0 // pred_fallthru
    _
  // Predicated region
  $region6: #{decoder_forward.1} parent=0 // pred_check
    _
  $region7: #{decoder_forward.1} parent=0 // pred_check_branch
    %22 = sbr.rel (0) target = $region9
  $region8: #{decoder_forward.1} parent=0 // pred_region
    _
  $region9: #{decoder_forward.1} parent=0 // pred_fallthru
    _
  // Predicated region
  $region10: #{decoder_forward.1} parent=0 // pred_check
    _
  $region11: #{decoder_forward.1} parent=0 // pred_check_branch
    %24 = sbr.rel (0) target = $region13
  $region12: #{decoder_forward.1} parent=0 // pred_region
    _
  $region13: #{decoder_forward.1} parent=0 // pred_fallthru
    _
  // Predicated region
  $region14: #{decoder_forward.1} parent=0 // pred_check
    _
  $region15: #{decoder_forward.1} parent=0 // pred_check_branch
    %26 = sbr.rel (0) target = $region17
  $region16: #{decoder_forward.1} parent=0 // pred_region
    _
  $region17: #{decoder_forward.1} parent=0 // pred_fallthru
    _
  // Predicated region
  $region18: #{decoder_forward.1} parent=0 // pred_check
    _
  $region19: #{decoder_forward.1} parent=0 // pred_check_branch
    %28 = sbr.rel (0) target = $region21
  $region20: #{decoder_forward.1} parent=0 // pred_region
    _
  $region21: #{decoder_forward.1} parent=0 // pred_fallthru
    _
  // Predicated region
  $region22: #{decoder_forward.1} parent=0 // pred_check
    _
  $region23: #{decoder_forward.1} parent=0 // pred_check_branch
    %30 = sbr.rel (0) target = $region25
  $region24: #{decoder_forward.1} parent=0 // pred_region
    _
  $region25: #{decoder_forward.1} parent=0 // pred_fallthru
    _
  // Predicated region
  $region26: #{decoder_forward.1} parent=0 // pred_check
    _
  $region27: #{decoder_forward.1} parent=0 // pred_check_branch
    %32 = sbr.rel (0) target = $region29
  $region28: #{decoder_forward.1} parent=0 // pred_region
    _
  $region29: #{decoder_forward.1} parent=0 // pred_fallthru
    _
  // Predicated region
  $region30: #{decoder_forward.1} parent=0 // pred_check
    _
  $region31: #{decoder_forward.1} parent=0 // pred_check_branch
    %34 = sbr.rel (0) target = $region33
  $region32: #{decoder_forward.1} parent=0 // pred_region
    _
  $region33: #{decoder_forward.1} parent=0 // pred_fallthru
    _
  // Predicated region
  $region34: #{decoder_forward.1} parent=0 // pred_check
    _
  $region35: #{decoder_forward.1} parent=0 // pred_check_branch
    %36 = sbr.rel (0) target = $region37
  $region36: #{decoder_forward.1} parent=0 // pred_region
    _
  $region37: #{decoder_forward.1} parent=0 // pred_fallthru
    _
  // Predicated region
  $region38: #{decoder_forward.1} parent=0 // pred_check
    _
  $region39: #{decoder_forward.1} parent=0 // pred_check_branch
    %38 = sbr.rel (0) target = $region41
  $region40: #{decoder_forward.1} parent=0 // pred_region
    _
  $region41: #{decoder_forward.1} parent=0 // pred_fallthru
    _
  // Predicated region
  $region42: #{decoder_forward.1} parent=0 // pred_check
    _
  $region43: #{decoder_forward.1} parent=0 // pred_check_branch
    %40 = sbr.rel (0) target = $region45
  $region44: #{decoder_forward.1} parent=0 // pred_region
    _
  $region45: #{decoder_forward.1} parent=0 // pred_fallthru
    _
  // Predicated region
  $region46: #{decoder_forward.1} parent=0 // pred_check
    _
  $region47: #{decoder_forward.1} parent=0 // pred_check_branch
    %42 = sbr.rel (0) target = $region49
  $region48: #{decoder_forward.1} parent=0 // pred_region
    _
  $region49: #{decoder_forward.1} parent=0 // pred_fallthru
    _
  // Predicated region
  $region50: #{decoder_forward.1} parent=0 // pred_check
    _
  $region51: #{decoder_forward.1} parent=0 // pred_check_branch
    %44 = sbr.rel (0) target = $region53
  $region52: #{decoder_forward.1} parent=0 // pred_region
    _
  $region53: #{decoder_forward.1} parent=0 // pred_fallthru
    _
  // Predicated region
  $region54: #{decoder_forward.1} parent=0 // pred_check
    _
  $region55: #{decoder_forward.1} parent=0 // pred_check_branch
    %46 = sbr.rel (0) target = $region57
  $region56: #{decoder_forward.1} parent=0 // pred_region
    _
  $region57: #{decoder_forward.1} parent=0 // pred_fallthru
    _
  %v48 = vld [vmem:[%s2] sm:$0xff]
  %v49 = vld [vmem:[%s2 + $0x8] sm:$0xff]
  %v50 = vld [vmem:[%s2 + $0x10] sm:$0xff]
  %v51 = vld [vmem:[%s2 + $0x18] sm:$0xff]
  %v52 = vld [vmem:[%s2 + $0x20] sm:$0xff]
  %v53 = vld [vmem:[%s2 + $0x28] sm:$0xff]
  %v54 = vld [vmem:[%s2 + $0x30] sm:$0xff]
  %v55 = vld [vmem:[%s2 + $0x38] sm:$0xff]
  %v56 = vld [vmem:[%s2 + $0x40] sm:$0xff]
  %v57 = vld [vmem:[%s2 + $0x48] sm:$0xff]
  %v58 = vld [vmem:[%s2 + $0x50] sm:$0xff]
  %v59 = vld [vmem:[%s2 + $0x58] sm:$0xff]
  %v60 = vld [vmem:[%s2 + $0x60] sm:$0xff]
  %v61 = vld [vmem:[%s2 + $0x68] sm:$0xff]
  %v62 = vld [vmem:[%s2 + $0x70] sm:$0xff]
  %v63 = vld [vmem:[%s2 + $0x78] sm:$0xff]
  %v64 = vld [vmem:[%s2 + $0x80] sm:$0xff]
  %v65 = vld [vmem:[%s2 + $0x88] sm:$0xff]
  %v66 = vld [vmem:[%s2 + $0x90] sm:$0xff]
  %v67 = vld [vmem:[%s2 + $0x98] sm:$0xff]
  %v68 = vld [vmem:[%s2 + $0xa0] sm:$0xff]
  %v69 = vld [vmem:[%s2 + $0xa8] sm:$0xff]
  %v70 = vld [vmem:[%s2 + $0xb0] sm:$0xff]
  %v71 = vld [vmem:[%s2 + $0xb8] sm:$0xff]
  %v72 = vld [vmem:[%s2 + $0xc0] sm:$0xff]
  %v73 = vld [vmem:[%s2 + $0xc8] sm:$0x3]
  %v74 = vld [vmem:[%s3] sm:$0xff]
  %v75 = vld [vmem:[%s3 + $0x8] sm:$0xff]
  %v76 = vld [vmem:[%s0] sm:$0xf]
  %v77 = vld [vmem:[%s0 + $0x4] sm:$0xf]
  %v78 = vld [vmem:[%s0 + $0x8] sm:$0xf]
  %v79 = vld [vmem:[%s0 + $0xc] sm:$0xf]
  %v80 = vld [vmem:[%s0 + $0x10] sm:$0xf]
  %v81 = vld [vmem:[%s0 + $0x14] sm:$0xf]
  %v82 = vld [vmem:[%s0 + $0x18] sm:$0xf]
  %v83 = vld [vmem:[%s0 + $0x1c] sm:$0xf]
  %v84 = vld [vmem:[%s0 + $0x20] sm:$0xf]
  %v85 = vld [vmem:[%s0 + $0x24] sm:$0xf]
  %v86 = vld [vmem:[%s0 + $0x28] sm:$0xf]
  %v87 = vld [vmem:[%s0 + $0x2c] sm:$0xf]
  %v88 = vld [vmem:[%s0 + $0x30] sm:$0xf]
  %v89 = vld [vmem:[%s0 + $0x34] sm:$0xf]
  %v90 = vld [vmem:[%s0 + $0x38] sm:$0xf]
  %v91 = vld [vmem:[%s0 + $0x3c] sm:$0xf]
  %v92 = vld [vmem:[%s0 + $0x40] sm:$0xf]
  %v93 = vld [vmem:[%s0 + $0x44] sm:$0xf]
  %v94 = vld [vmem:[%s0 + $0x48] sm:$0xf]
  %v95 = vld [vmem:[%s0 + $0x4c] sm:$0xf]
  %v96 = vld [vmem:[%s0 + $0x50] sm:$0xf]
  %v97 = vld [vmem:[%s0 + $0x54] sm:$0xf]
  %v98 = vld [vmem:[%s0 + $0x58] sm:$0xf]
  %v99 = vld [vmem:[%s0 + $0x5c] sm:$0xf]
  %v100 = vld [vmem:[%s0 + $0x60] sm:$0xf]
  %v101 = vld [vmem:[%s0 + $0x64] sm:$0x1]
  %v102 = vld [vmem:[%s4] sm:$0xf]
  %v103 = vld [vmem:[%s5] sm:$0x1]
  %v105 = vlaneseq
  %v106 = vshrl.u32 %v105, 7
  %v107 = vsub.s32 0, %v106
  %v108 = vrot.slane %v103, %v107
  %v136 = vunpack.c.l.b16 %v76
  %v137 = vunpack.c.l.b16 %v77
  %v138 = vunpack.c.l.b16 %v78
  %v139 = vunpack.c.l.b16 %v79
  %v140 = vunpack.c.l.b16 %v80
  %v141 = vunpack.c.l.b16 %v81
  %v142 = vunpack.c.l.b16 %v82
  %v143 = vunpack.c.l.b16 %v83
  %v144 = vunpack.c.l.b16 %v84
  %v145 = vunpack.c.l.b16 %v85
  %v146 = vunpack.c.l.b16 %v86
  %v147 = vunpack.c.l.b16 %v87
  %v148 = vunpack.c.l.b16 %v88
  %v149 = vunpack.c.l.b16 %v89
  %v150 = vunpack.c.l.b16 %v90
  %v151 = vunpack.c.l.b16 %v91
  %v152 = vunpack.c.l.b16 %v92
  %v153 = vunpack.c.l.b16 %v93
  %v154 = vunpack.c.l.b16 %v94
  %v155 = vunpack.c.l.b16 %v95
  %v156 = vunpack.c.l.b16 %v96
  %v157 = vunpack.c.l.b16 %v97
  %v158 = vunpack.c.l.b16 %v98
  %v159 = vunpack.c.l.b16 %v99
  %v160 = vunpack.c.l.b16 %v100
  %v161 = vunpack.c.l.b16 %v101
  %v162 = vpack.c.b16 %v137, %v136
  %v163 = vpack.c.b16 %v139, %v138
  %v164 = vpack.c.b16 %v141, %v140
  %v165 = vpack.c.b16 %v143, %v142
  %v166 = vpack.c.b16 %v145, %v144
  %v167 = vpack.c.b16 %v147, %v146
  %v168 = vpack.c.b16 %v149, %v148
  %v169 = vpack.c.b16 %v151, %v150
  %v170 = vpack.c.b16 %v153, %v152
  %v171 = vpack.c.b16 %v155, %v154
  %v172 = vpack.c.b16 %v157, %v156
  %v173 = vpack.c.b16 %v159, %v158
  %v174 = vpack.c.b16 %v161, %v160
  %vm175 = vcmask 64512
  %v177 = vsel %vm175, %v162, 0
  %v180 = vsel %vm175, %v163, 0
  %v183 = vsel %vm175, %v164, 0
  %v186 = vsel %vm175, %v165, 0
  %v189 = vsel %vm175, %v166, 0
  %v192 = vsel %vm175, %v167, 0
  %v195 = vsel %vm175, %v168, 0
  %v198 = vsel %vm175, %v169, 0
  %v201 = vsel %vm175, %v170, 0
  %v204 = vsel %vm175, %v171, 0
  %v207 = vsel %vm175, %v172, 0
  %v210 = vsel %vm175, %v173, 0
  %v213 = vsel %vm175, %v174, 0
  %vm215 = vcmask 1043456
  %v217 = vsel %vm215, %v102, 0
  %219 = vmatprep.subr.bf16.mxu0 0
  %220 = vmatpush1.bf16.msra.mxu0 %v217
  %221 = vmatprep.subr.bf16.mxu0 0
  %222 = vmatpush1.bf16.msra.mxu0 0
  %223 = vmatprep.subr.bf16.mxu0 0
  %224 = vmatpush1.bf16.msra.mxu0 0
  %225 = vmatprep.subr.bf16.mxu0 0
  %226 = vmatpush1.bf16.msra.mxu0 0
  %227 = vmatprep.subr.bf16.mxu0 0
  %228 = vmatpush1.bf16.msra.mxu0 0
  %229 = vmatprep.subr.bf16.mxu0 0
  %230 = vmatpush1.bf16.msra.mxu0 0
  %231 = vmatprep.subr.bf16.mxu0 0
  %232 = vmatpush1.bf16.msra.mxu0 0
  %233 = vmatprep.subr.bf16.mxu0 0
  %234 = vmatpush1.bf16.msra.mxu0 0
  %235 = vmatprep.subr.bf16.mxu0 0
  %236 = vmatpush1.bf16.msra.mxu0 0
  %237 = vmatprep.subr.bf16.mxu0 0
  %238 = vmatpush1.bf16.msra.mxu0 0
  %239 = vmatprep.subr.bf16.mxu0 0
  %240 = vmatpush1.bf16.msra.mxu0 0
  %241 = vmatprep.subr.bf16.mxu0 0
  %242 = vmatpush1.bf16.msra.mxu0 0
  %243 = vmatprep.subr.bf16.mxu0 0
  %244 = vmatpush1.bf16.msra.mxu0 0
  %245 = vmatprep.subr.bf16.mxu0 0
  %246 = vmatpush1.bf16.msra.mxu0 0
  %247 = vmatprep.subr.bf16.mxu0 0
  %248 = vmatpush1.bf16.msra.mxu0 0
  %249 = vmatprep.subr.bf16.mxu0 0
  %250 = vmatpush1.bf16.msra.mxu0 0
  %251 = vmatprep.mubr.bf16.mxu0 0
  %252 = vmatmul.mubr.bf16.gmra.mrb[0].mxu0 %v177
  %v253 = vpop.f32.mrb[0].mxu0
  %v254 = vadd.f32 %v108, %v253
  %v255 = vpop.f32.mrb[0].mxu0
  %v256 = vpop.f32.mrb[0].mxu0
  %v257 = vadd.f32 %v108, %v256
  %v258 = vpop.f32.mrb[0].mxu0
  %259 = vmatprep.mubr.bf16.mxu0 0
  %260 = vmatmul.mubr.bf16.gmra.mrb[0].mxu0 %v180
  %v261 = vpop.f32.mrb[0].mxu0
  %v262 = vadd.f32 %v108, %v261
  %v263 = vpop.f32.mrb[0].mxu0
  %v264 = vpop.f32.mrb[0].mxu0
  %v265 = vadd.f32 %v108, %v264
  %v266 = vpop.f32.mrb[0].mxu0
  %267 = vmatprep.mubr.bf16.mxu0 0
  %268 = vmatmul.mubr.bf16.gmra.mrb[0].mxu0 %v183
  %v269 = vpop.f32.mrb[0].mxu0
  %v270 = vadd.f32 %v108, %v269
  %v271 = vpop.f32.mrb[0].mxu0
  %v272 = vpop.f32.mrb[0].mxu0
  %v273 = vadd.f32 %v108, %v272
  %v274 = vpop.f32.mrb[0].mxu0
  %275 = vmatprep.mubr.bf16.mxu0 0
  %276 = vmatmul.mubr.bf16.gmra.mrb[0].mxu0 %v186
  %v277 = vpop.f32.mrb[0].mxu0
  %v278 = vadd.f32 %v108, %v277
  %v279 = vpop.f32.mrb[0].mxu0
  %v280 = vpop.f32.mrb[0].mxu0
  %v281 = vadd.f32 %v108, %v280
  %v282 = vpop.f32.mrb[0].mxu0
  %283 = vmatprep.mubr.bf16.mxu0 0
  %284 = vmatmul.mubr.bf16.gmra.mrb[0].mxu0 %v189
  %v285 = vpop.f32.mrb[0].mxu0
  %v286 = vadd.f32 %v108, %v285
  %v287 = vpop.f32.mrb[0].mxu0
  %v288 = vpop.f32.mrb[0].mxu0
  %v289 = vadd.f32 %v108, %v288
  %v290 = vpop.f32.mrb[0].mxu0
  %291 = vmatprep.mubr.bf16.mxu0 0
  %292 = vmatmul.mubr.bf16.gmra.mrb[0].mxu0 %v192
  %v293 = vpop.f32.mrb[0].mxu0
  %v294 = vadd.f32 %v108, %v293
  %v295 = vpop.f32.mrb[0].mxu0
  %v296 = vpop.f32.mrb[0].mxu0
  %v297 = vadd.f32 %v108, %v296
  %v298 = vpop.f32.mrb[0].mxu0
  %299 = vmatprep.mubr.bf16.mxu0 0
  %300 = vmatmul.mubr.bf16.gmra.mrb[0].mxu0 %v195
  %v301 = vpop.f32.mrb[0].mxu0
  %v302 = vadd.f32 %v108, %v301
  %v303 = vpop.f32.mrb[0].mxu0
  %v304 = vpop.f32.mrb[0].mxu0
  %v305 = vadd.f32 %v108, %v304
  %v306 = vpop.f32.mrb[0].mxu0
  %307 = vmatprep.mubr.bf16.mxu0 0
  %308 = vmatmul.mubr.bf16.gmra.mrb[0].mxu0 %v198
  %v309 = vpop.f32.mrb[0].mxu0
  %v310 = vadd.f32 %v108, %v309
  %v311 = vpop.f32.mrb[0].mxu0
  %v312 = vpop.f32.mrb[0].mxu0
  %v313 = vadd.f32 %v108, %v312
  %v314 = vpop.f32.mrb[0].mxu0
  %315 = vmatprep.mubr.bf16.mxu0 0
  %316 = vmatmul.mubr.bf16.gmra.mrb[0].mxu0 %v201
  %v317 = vpop.f32.mrb[0].mxu0
  %v318 = vadd.f32 %v108, %v317
  %v319 = vpop.f32.mrb[0].mxu0
  %v320 = vpop.f32.mrb[0].mxu0
  %v321 = vadd.f32 %v108, %v320
  %v322 = vpop.f32.mrb[0].mxu0
  %323 = vmatprep.mubr.bf16.mxu0 0
  %324 = vmatmul.mubr.bf16.gmra.mrb[0].mxu0 %v204
  %v325 = vpop.f32.mrb[0].mxu0
  %v326 = vadd.f32 %v108, %v325
  %v327 = vpop.f32.mrb[0].mxu0
  %v328 = vpop.f32.mrb[0].mxu0
  %v329 = vadd.f32 %v108, %v328
  %v330 = vpop.f32.mrb[0].mxu0
  %331 = vmatprep.mubr.bf16.mxu0 0
  %332 = vmatmul.mubr.bf16.gmra.mrb[0].mxu0 %v207
  %v333 = vpop.f32.mrb[0].mxu0
  %v334 = vadd.f32 %v108, %v333
  %v335 = vpop.f32.mrb[0].mxu0
  %v336 = vpop.f32.mrb[0].mxu0
  %v337 = vadd.f32 %v108, %v336
  %v338 = vpop.f32.mrb[0].mxu0
  %339 = vmatprep.mubr.bf16.mxu0 0
  %340 = vmatmul.mubr.bf16.gmra.mrb[0].mxu0 %v210
  %v341 = vpop.f32.mrb[0].mxu0
  %v342 = vadd.f32 %v108, %v341
  %v343 = vpop.f32.mrb[0].mxu0
  %v344 = vpop.f32.mrb[0].mxu0
  %v345 = vadd.f32 %v108, %v344
  %v346 = vpop.f32.mrb[0].mxu0
  %347 = vmatprep.mubr.bf16.mxu0 0
  %348 = vmatmul.mubr.bf16.gmra.mrb[0].mxu0 %v213
  %v349 = vpop.f32.mrb[0].mxu0
  %v350 = vadd.f32 %v108, %v349
  %v351 = vpop.f32.mrb[0].mxu0
  %v352 = vpop.f32.mrb[0].mxu0
  %v353 = vadd.f32 %v108, %v352
  %v354 = vpop.f32.mrb[0].mxu0
  %355 = vdwg.mxu0
  %357 = vset.pattern.permute.xlu0 0
  %358 = vperm.xlu0 %357, %v48
  %v359 = vpop.permute.xlu0 %358
  %362 = vset.pattern.permute.xlu0 0
  %363 = vperm.xlu0 %362, %v49
  %v364 = vpop.permute.xlu0 %363
  %367 = vset.pattern.permute.xlu0 0
  %368 = vperm.xlu0 %367, %v50
  %v369 = vpop.permute.xlu0 %368
  %372 = vset.pattern.permute.xlu0 0
  %373 = vperm.xlu0 %372, %v51
  %v374 = vpop.permute.xlu0 %373
  %377 = vset.pattern.permute.xlu0 0
  %378 = vperm.xlu0 %377, %v52
  %v379 = vpop.permute.xlu0 %378
  %382 = vset.pattern.permute.xlu0 0
  %383 = vperm.xlu0 %382, %v53
  %v384 = vpop.permute.xlu0 %383
  %387 = vset.pattern.permute.xlu0 0
  %388 = vperm.xlu0 %387, %v54
  %v389 = vpop.permute.xlu0 %388
  %392 = vset.pattern.permute.xlu0 0
  %393 = vperm.xlu0 %392, %v55
  %v394 = vpop.permute.xlu0 %393
  %397 = vset.pattern.permute.xlu0 0
  %398 = vperm.xlu0 %397, %v56
  %v399 = vpop.permute.xlu0 %398
  %402 = vset.pattern.permute.xlu0 0
  %403 = vperm.xlu0 %402, %v57
  %v404 = vpop.permute.xlu0 %403
  %407 = vset.pattern.permute.xlu0 0
  %408 = vperm.xlu0 %407, %v58
  %v409 = vpop.permute.xlu0 %408
  %412 = vset.pattern.permute.xlu0 0
  %413 = vperm.xlu0 %412, %v59
  %v414 = vpop.permute.xlu0 %413
  %417 = vset.pattern.permute.xlu0 0
  %418 = vperm.xlu0 %417, %v60
  %v419 = vpop.permute.xlu0 %418
  %422 = vset.pattern.permute.xlu0 0
  %423 = vperm.xlu0 %422, %v61
  %v424 = vpop.permute.xlu0 %423
  %427 = vset.pattern.permute.xlu0 0
  %428 = vperm.xlu0 %427, %v62
  %v429 = vpop.permute.xlu0 %428
  %432 = vset.pattern.permute.xlu0 0
  %433 = vperm.xlu0 %432, %v63
  %v434 = vpop.permute.xlu0 %433
  %437 = vset.pattern.permute.xlu0 0
  %438 = vperm.xlu0 %437, %v64
  %v439 = vpop.permute.xlu0 %438
  %442 = vset.pattern.permute.xlu0 0
  %443 = vperm.xlu0 %442, %v65
  %v444 = vpop.permute.xlu0 %443
  %447 = vset.pattern.permute.xlu0 0
  %448 = vperm.xlu0 %447, %v66
  %v449 = vpop.permute.xlu0 %448
  %452 = vset.pattern.permute.xlu0 0
  %453 = vperm.xlu0 %452, %v67
  %v454 = vpop.permute.xlu0 %453
  %457 = vset.pattern.permute.xlu0 0
  %458 = vperm.xlu0 %457, %v68
  %v459 = vpop.permute.xlu0 %458
  %462 = vset.pattern.permute.xlu0 0
  %463 = vperm.xlu0 %462, %v69
  %v464 = vpop.permute.xlu0 %463
  %467 = vset.pattern.permute.xlu0 0
  %468 = vperm.xlu0 %467, %v70
  %v469 = vpop.permute.xlu0 %468
  %472 = vset.pattern.permute.xlu0 0
  %473 = vperm.xlu0 %472, %v71
  %v474 = vpop.permute.xlu0 %473
  %477 = vset.pattern.permute.xlu0 0
  %478 = vperm.xlu0 %477, %v72
  %v479 = vpop.permute.xlu0 %478
  %482 = vset.pattern.permute.xlu0 0
  %483 = vperm.xlu0 %482, %v73
  %v484 = vpop.permute.xlu0 %483
  %v486 = vmul.f32 %v254, %v359
  %v487 = vmul.f32 %v257, %v364
  %v488 = vmul.f32 %v262, %v369
  %v489 = vmul.f32 %v265, %v374
  %v490 = vmul.f32 %v270, %v379
  %v491 = vmul.f32 %v273, %v384
  %v492 = vmul.f32 %v278, %v389
  %v493 = vmul.f32 %v281, %v394
  %v494 = vmul.f32 %v286, %v399
  %v495 = vmul.f32 %v289, %v404
  %v496 = vmul.f32 %v294, %v409
  %v497 = vmul.f32 %v297, %v414
  %v498 = vmul.f32 %v302, %v419
  %v499 = vmul.f32 %v305, %v424
  %v500 = vmul.f32 %v310, %v429
  %v501 = vmul.f32 %v313, %v434
  %v502 = vmul.f32 %v318, %v439
  %v503 = vmul.f32 %v321, %v444
  %v504 = vmul.f32 %v326, %v449
  %v505 = vmul.f32 %v329, %v454
  %v506 = vmul.f32 %v334, %v459
  %v507 = vmul.f32 %v337, %v464
  %v508 = vmul.f32 %v342, %v469
  %v509 = vmul.f32 %v345, %v474
  %v510 = vmul.f32 %v350, %v479
  %v511 = vmul.f32 %v353, %v484
  %v512 = vpack.c.bf16 %v487, %v486
  %v513 = vpack.c.bf16 %v489, %v488
  %v514 = vpack.c.bf16 %v491, %v490
  %v515 = vpack.c.bf16 %v493, %v492
  %v516 = vpack.c.bf16 %v495, %v494
  %v517 = vpack.c.bf16 %v497, %v496
  %v518 = vpack.c.bf16 %v499, %v498
  %v519 = vpack.c.bf16 %v501, %v500
  %v520 = vpack.c.bf16 %v503, %v502
  %v521 = vpack.c.bf16 %v505, %v504
  %v522 = vpack.c.bf16 %v507, %v506
  %v523 = vpack.c.bf16 %v509, %v508
  %v524 = vpack.c.bf16 %v511, %v510
  %v525 = vld [vmem:[%s1] sm:$0xf]
  %v526 = vld [vmem:[%s1 + $0x4] sm:$0xf]
  %v527 = vld [vmem:[%s1 + $0x8] sm:$0xf]
  %v528 = vld [vmem:[%s1 + $0xc] sm:$0xf]
  %v529 = vld [vmem:[%s1 + $0x10] sm:$0xf]
  %v530 = vld [vmem:[%s1 + $0x14] sm:$0xf]
  %v531 = vld [vmem:[%s1 + $0x18] sm:$0xf]
  %v532 = vld [vmem:[%s1 + $0x1c] sm:$0xf]
  %v533 = vld [vmem:[%s1 + $0x20] sm:$0xf]
  %v534 = vld [vmem:[%s1 + $0x24] sm:$0xf]
  %v535 = vld [vmem:[%s1 + $0x28] sm:$0xf]
  %v536 = vld [vmem:[%s1 + $0x2c] sm:$0xf]
  %v537 = vld [vmem:[%s1 + $0x30] sm:$0xf]
  %v538 = vld [vmem:[%s1 + $0x34] sm:$0xf]
  %v539 = vld [vmem:[%s1 + $0x38] sm:$0xf]
  %v540 = vld [vmem:[%s1 + $0x3c] sm:$0xf]
  %v541 = vld [vmem:[%s1 + $0x40] sm:$0xf]
  %v542 = vld [vmem:[%s1 + $0x44] sm:$0xf]
  %v543 = vld [vmem:[%s1 + $0x48] sm:$0xf]
  %v544 = vld [vmem:[%s1 + $0x4c] sm:$0xf]
  %v545 = vld [vmem:[%s1 + $0x50] sm:$0xf]
  %v546 = vld [vmem:[%s1 + $0x54] sm:$0xf]
  %v547 = vld [vmem:[%s1 + $0x58] sm:$0xf]
  %v548 = vld [vmem:[%s1 + $0x5c] sm:$0xf]
  %v549 = vld [vmem:[%s1 + $0x60] sm:$0xf]
  %v550 = vld [vmem:[%s1 + $0x64] sm:$0x1]
  %v577 = vunpack.c.l.b16 %v525
  %v578 = vunpack.c.l.b16 %v526
  %v579 = vunpack.c.l.b16 %v527
  %v580 = vunpack.c.l.b16 %v528
  %v581 = vunpack.c.l.b16 %v529
  %v582 = vunpack.c.l.b16 %v530
  %v583 = vunpack.c.l.b16 %v531
  %v584 = vunpack.c.l.b16 %v532
  %v585 = vunpack.c.l.b16 %v533
  %v586 = vunpack.c.l.b16 %v534
  %v587 = vunpack.c.l.b16 %v535
  %v588 = vunpack.c.l.b16 %v536
  %v589 = vunpack.c.l.b16 %v537
  %v590 = vunpack.c.l.b16 %v538
  %v591 = vunpack.c.l.b16 %v539
  %v592 = vunpack.c.l.b16 %v540
  %v593 = vunpack.c.l.b16 %v541
  %v594 = vunpack.c.l.b16 %v542
  %v595 = vunpack.c.l.b16 %v543
  %v596 = vunpack.c.l.b16 %v544
  %v597 = vunpack.c.l.b16 %v545
  %v598 = vunpack.c.l.b16 %v546
  %v599 = vunpack.c.l.b16 %v547
  %v600 = vunpack.c.l.b16 %v548
  %v601 = vunpack.c.l.b16 %v549
  %v602 = vunpack.c.l.b16 %v550
  %v603 = vpack.c.b16 %v578, %v577
  %v604 = vpack.c.b16 %v580, %v579
  %v605 = vpack.c.b16 %v582, %v581
  %v606 = vpack.c.b16 %v584, %v583
  %v607 = vpack.c.b16 %v586, %v585
  %v608 = vpack.c.b16 %v588, %v587
  %v609 = vpack.c.b16 %v590, %v589
  %v610 = vpack.c.b16 %v592, %v591
  %v611 = vpack.c.b16 %v594, %v593
  %v612 = vpack.c.b16 %v596, %v595
  %v613 = vpack.c.b16 %v598, %v597
  %v614 = vpack.c.b16 %v600, %v599
  %v615 = vpack.c.b16 %v602, %v601
  %616 = vrot.lane.b32.xlu0 %v603, 16
  %v617 = vpop.permute.xlu0 %616
  %618 = vrot.lane.b32.xlu0 %v604, 16
  %v619 = vpop.permute.xlu0 %618
  %620 = vrot.lane.b32.xlu0 %v605, 16
  %v621 = vpop.permute.xlu0 %620
  %622 = vrot.lane.b32.xlu0 %v606, 16
  %v623 = vpop.permute.xlu0 %622
  %624 = vrot.lane.b32.xlu0 %v607, 16
  %v625 = vpop.permute.xlu0 %624
  %626 = vrot.lane.b32.xlu0 %v608, 16
  %v627 = vpop.permute.xlu0 %626
  %628 = vrot.lane.b32.xlu0 %v609, 16
  %v629 = vpop.permute.xlu0 %628
  %630 = vrot.lane.b32.xlu0 %v610, 16
  %v631 = vpop.permute.xlu0 %630
  %632 = vrot.lane.b32.xlu0 %v611, 16
  %v633 = vpop.permute.xlu0 %632
  %634 = vrot.lane.b32.xlu0 %v612, 16
  %v635 = vpop.permute.xlu0 %634
  %636 = vrot.lane.b32.xlu0 %v613, 16
  %v637 = vpop.permute.xlu0 %636
  %638 = vrot.lane.b32.xlu0 %v614, 16
  %v639 = vpop.permute.xlu0 %638
  %640 = vrot.lane.b32.xlu0 %v615, 16
  %v641 = vpop.permute.xlu0 %640
  %vm642 = vcmask 130048
  %v645 = vsel %vm642, %v512, %v617
  %v648 = vsel %vm642, %v513, %v619
  %v651 = vsel %vm642, %v514, %v621
  %v654 = vsel %vm642, %v515, %v623
  %v657 = vsel %vm642, %v516, %v625
  %v660 = vsel %vm642, %v517, %v627
  %v663 = vsel %vm642, %v518, %v629
  %v666 = vsel %vm642, %v519, %v631
  %v669 = vsel %vm642, %v520, %v633
  %v672 = vsel %vm642, %v521, %v635
  %v675 = vsel %vm642, %v522, %v637
  %v678 = vsel %vm642, %v523, %v639
  %v681 = vsel %vm642, %v524, %v641
  %v682 = vld [vmem:[%s7] sm:$0x1]
  %v683 = vld [vmem:[%s6] sm:$0xf]
  %v684 = vld [vmem:[%s6 + $0x4] sm:$0xf]
  %v685 = vld [vmem:[%s6 + $0x8] sm:$0xf]
  %v686 = vld [vmem:[%s6 + $0xc] sm:$0xf]
  %s687 = scalar_lea.vmem %s6, 16
  %v688 = vld [vmem:[%s687] sm:$0xf]
  %v689 = vld [vmem:[%s687 + $0x4] sm:$0xf]
  %v690 = vld [vmem:[%s687 + $0x8] sm:$0xf]
  %v691 = vld [vmem:[%s687 + $0xc] sm:$0xf]
  %vm692 = vsmask.f32 7424
  %v693 = vshrl.u32 %v645, 16
  %v695 = vshll.u32 %v645, 16
  %v697 = vrot.slane %v695, 1
  %v698 = vor.u32 %v693, %v697
  %v699 = vshll.u32 %v648, 16
  %v701 = vrot.slane %v699, 1
  %v702 = vsel %vm692, %v698, %v701
  %v703 = vshrl.u32 %v648, 16
  %v705 = vor.u32 %v703, %v701
  %v706 = vshll.u32 %v651, 16
  %v708 = vrot.slane %v706, 1
  %v709 = vsel %vm692, %v705, %v708
  %v710 = vshrl.u32 %v651, 16
  %v712 = vor.u32 %v710, %v708
  %v713 = vshll.u32 %v654, 16
  %v715 = vrot.slane %v713, 1
  %v716 = vsel %vm692, %v712, %v715
  %v717 = vshrl.u32 %v654, 16
  %v719 = vor.u32 %v717, %v715
  %v720 = vshll.u32 %v657, 16
  %v722 = vrot.slane %v720, 1
  %v723 = vsel %vm692, %v719, %v722
  %v724 = vshrl.u32 %v657, 16
  %v726 = vor.u32 %v724, %v722
  %v727 = vshll.u32 %v660, 16
  %v729 = vrot.slane %v727, 1
  %v730 = vsel %vm692, %v726, %v729
  %v731 = vshrl.u32 %v660, 16
  %v733 = vor.u32 %v731, %v729
  %v734 = vshll.u32 %v663, 16
  %v736 = vrot.slane %v734, 1
  %v737 = vsel %vm692, %v733, %v736
  %v738 = vshrl.u32 %v663, 16
  %v740 = vor.u32 %v738, %v736
  %v741 = vshll.u32 %v666, 16
  %v743 = vrot.slane %v741, 1
  %v744 = vsel %vm692, %v740, %v743
  %v745 = vshrl.u32 %v666, 16
  %v747 = vor.u32 %v745, %v743
  %v748 = vshll.u32 %v669, 16
  %v750 = vrot.slane %v748, 1
  %v751 = vsel %vm692, %v747, %v750
  %v752 = vshrl.u32 %v669, 16
  %v754 = vor.u32 %v752, %v750
  %v755 = vshll.u32 %v672, 16
  %v757 = vrot.slane %v755, 1
  %v758 = vsel %vm692, %v754, %v757
  %v759 = vshrl.u32 %v672, 16
  %v761 = vor.u32 %v759, %v757
  %v762 = vshll.u32 %v675, 16
  %v764 = vrot.slane %v762, 1
  %v765 = vsel %vm692, %v761, %v764
  %v766 = vshrl.u32 %v675, 16
  %v768 = vor.u32 %v766, %v764
  %v769 = vshll.u32 %v678, 16
  %v771 = vrot.slane %v769, 1
  %v772 = vsel %vm692, %v768, %v771
  %v773 = vshrl.u32 %v678, 16
  %v775 = vor.u32 %v773, %v771
  %v780 = vunpack.c.l.b16 %v688
  %v781 = vunpack.c.l.b16 %v689
  %v782 = vunpack.c.l.b16 %v690
  %v783 = vunpack.c.l.b16 %v691
  %v784 = vpack.c.b16 %v781, %v780
  %v785 = vpack.c.b16 %v783, %v782
  %vm788 = vcmask 261120
  %v790 = vsel %vm788, %v702, 0
  %v793 = vsel %vm788, %v709, 0
  %v796 = vsel %vm788, %v716, 0
  %v799 = vsel %vm788, %v723, 0
  %v802 = vsel %vm788, %v730, 0
  %v805 = vsel %vm788, %v737, 0
  %v808 = vsel %vm788, %v744, 0
  %v811 = vsel %vm788, %v751, 0
  %v814 = vsel %vm788, %v758, 0
  %v817 = vsel %vm788, %v765, 0
  %v820 = vsel %vm788, %v772, 0
  %v823 = vsel %vm788, %v775, 0
  %825 = vmatprep.subr.bf16.mxu0 0
  %826 = vmatpush1.bf16.msra.mxu0 %v784
  %827 = vmatprep.subr.bf16.mxu0 0
  %828 = vmatpush1.bf16.msra.mxu0 %v785
  %829 = vmatprep.subr.bf16.mxu0 0
  %830 = vmatpush1.bf16.msra.mxu0 0
  %831 = vmatprep.subr.bf16.mxu0 0
  %832 = vmatpush1.bf16.msra.mxu0 0
  %833 = vmatprep.subr.bf16.mxu0 0
  %834 = vmatpush1.bf16.msra.mxu0 0
  %835 = vmatprep.subr.bf16.mxu0 0
  %836 = vmatpush1.bf16.msra.mxu0 0
  %837 = vmatprep.subr.bf16.mxu0 0
  %838 = vmatpush1.bf16.msra.mxu0 0
  %839 = vmatprep.subr.bf16.mxu0 0
  %840 = vmatpush1.bf16.msra.mxu0 0
  %841 = vmatprep.subr.bf16.mxu0 0
  %842 = vmatpush1.bf16.msra.mxu0 0
  %843 = vmatprep.subr.bf16.mxu0 0
  %844 = vmatpush1.bf16.msra.mxu0 0
  %845 = vmatprep.subr.bf16.mxu0 0
  %846 = vmatpush1.bf16.msra.mxu0 0
  %847 = vmatprep.subr.bf16.mxu0 0
  %848 = vmatpush1.bf16.msra.mxu0 0
  %849 = vmatprep.subr.bf16.mxu0 0
  %850 = vmatpush1.bf16.msra.mxu0 0
  %851 = vmatprep.subr.bf16.mxu0 0
  %852 = vmatpush1.bf16.msra.mxu0 0
  %853 = vmatprep.subr.bf16.mxu0 0
  %854 = vmatpush1.bf16.msra.mxu0 0
  %855 = vmatprep.subr.bf16.mxu0 0
  %856 = vmatpush1.bf16.msra.mxu0 0
  %857 = vmatprep.mubr.bf16.mxu0 0
  %858 = vmatmul.mubr.bf16.gmra.mrb[0].mxu0 %v790
  %v859 = vpop.f32.mrb[0].mxu0
  %v860 = vadd.f32 0.0, %v859
  %v861 = vpop.f32.mrb[0].mxu0
  %v862 = vpop.f32.mrb[0].mxu0
  %v863 = vadd.f32 0.0, %v862
  %v864 = vpop.f32.mrb[0].mxu0
  %865 = vmatprep.mubr.bf16.mxu0 0
  %866 = vmatmul.mubr.bf16.gmra.mrb[0].mxu0 %v793
  %v867 = vpop.f32.mrb[0].mxu0
  %v868 = vadd.f32 0.0, %v867
  %v869 = vpop.f32.mrb[0].mxu0
  %v870 = vpop.f32.mrb[0].mxu0
  %v871 = vadd.f32 0.0, %v870
  %v872 = vpop.f32.mrb[0].mxu0
  %873 = vmatprep.mubr.bf16.mxu0 0
  %874 = vmatmul.mubr.bf16.gmra.mrb[0].mxu0 %v796
  %v875 = vpop.f32.mrb[0].mxu0
  %v876 = vadd.f32 0.0, %v875
  %v877 = vpop.f32.mrb[0].mxu0
  %v878 = vpop.f32.mrb[0].mxu0
  %v879 = vadd.f32 0.0, %v878
  %v880 = vpop.f32.mrb[0].mxu0
  %881 = vmatprep.mubr.bf16.mxu0 0
  %882 = vmatmul.mubr.bf16.gmra.mrb[0].mxu0 %v799
  %v883 = vpop.f32.mrb[0].mxu0
  %v884 = vadd.f32 0.0, %v883
  %v885 = vpop.f32.mrb[0].mxu0
  %v886 = vpop.f32.mrb[0].mxu0
  %v887 = vadd.f32 0.0, %v886
  %v888 = vpop.f32.mrb[0].mxu0
  %889 = vmatprep.mubr.bf16.mxu0 0
  %890 = vmatmul.mubr.bf16.gmra.mrb[0].mxu0 %v802
  %v891 = vpop.f32.mrb[0].mxu0
  %v892 = vadd.f32 0.0, %v891
  %v893 = vpop.f32.mrb[0].mxu0
  %v894 = vpop.f32.mrb[0].mxu0
  %v895 = vadd.f32 0.0, %v894
  %v896 = vpop.f32.mrb[0].mxu0
  %897 = vmatprep.mubr.bf16.mxu0 0
  %898 = vmatmul.mubr.bf16.gmra.mrb[0].mxu0 %v805
  %v899 = vpop.f32.mrb[0].mxu0
  %v900 = vadd.f32 0.0, %v899
  %v901 = vpop.f32.mrb[0].mxu0
  %v902 = vpop.f32.mrb[0].mxu0
  %v903 = vadd.f32 0.0, %v902
  %v904 = vpop.f32.mrb[0].mxu0
  %905 = vmatprep.mubr.bf16.mxu0 0
  %906 = vmatmul.mubr.bf16.gmra.mrb[0].mxu0 %v808
  %v907 = vpop.f32.mrb[0].mxu0
  %v908 = vadd.f32 0.0, %v907
  %v909 = vpop.f32.mrb[0].mxu0
  %v910 = vpop.f32.mrb[0].mxu0
  %v911 = vadd.f32 0.0, %v910
  %v912 = vpop.f32.mrb[0].mxu0
  %913 = vmatprep.mubr.bf16.mxu0 0
  %914 = vmatmul.mubr.bf16.gmra.mrb[0].mxu0 %v811
  %v915 = vpop.f32.mrb[0].mxu0
  %v916 = vadd.f32 0.0, %v915
  %v917 = vpop.f32.mrb[0].mxu0
  %v918 = vpop.f32.mrb[0].mxu0
  %v919 = vadd.f32 0.0, %v918
  %v920 = vpop.f32.mrb[0].mxu0
  %921 = vmatprep.mubr.bf16.mxu0 0
  %922 = vmatmul.mubr.bf16.gmra.mrb[0].mxu0 %v814
  %v923 = vpop.f32.mrb[0].mxu0
  %v924 = vadd.f32 0.0, %v923
  %v925 = vpop.f32.mrb[0].mxu0
  %v926 = vpop.f32.mrb[0].mxu0
  %v927 = vadd.f32 0.0, %v926
  %v928 = vpop.f32.mrb[0].mxu0
  %929 = vmatprep.mubr.bf16.mxu0 0
  %930 = vmatmul.mubr.bf16.gmra.mrb[0].mxu0 %v817
  %v931 = vpop.f32.mrb[0].mxu0
  %v932 = vadd.f32 0.0, %v931
  %v933 = vpop.f32.mrb[0].mxu0
  %v934 = vpop.f32.mrb[0].mxu0
  %v935 = vadd.f32 0.0, %v934
  %v936 = vpop.f32.mrb[0].mxu0
  %937 = vmatprep.mubr.bf16.mxu0 0
  %938 = vmatmul.mubr.bf16.gmra.mrb[0].mxu0 %v820
  %v939 = vpop.f32.mrb[0].mxu0
  %v940 = vadd.f32 0.0, %v939
  %v941 = vpop.f32.mrb[0].mxu0
  %v942 = vpop.f32.mrb[0].mxu0
  %v943 = vadd.f32 0.0, %v942
  %v944 = vpop.f32.mrb[0].mxu0
  %945 = vmatprep.mubr.bf16.mxu0 0
  %946 = vmatmul.mubr.bf16.gmra.mrb[0].mxu0 %v823
  %v947 = vpop.f32.mrb[0].mxu0
  %v948 = vadd.f32 0.0, %v947
  %v949 = vpop.f32.mrb[0].mxu0
  %v950 = vpop.f32.mrb[0].mxu0
  %v951 = vpop.f32.mrb[0].mxu0
  %952 = vdwg.mxu0
  %v957 = vunpack.c.l.b16 %v683
  %v958 = vunpack.c.l.b16 %v684
  %v959 = vunpack.c.l.b16 %v685
  %v960 = vunpack.c.l.b16 %v686
  %v961 = vpack.c.b16 %v958, %v957
  %v962 = vpack.c.b16 %v960, %v959
  %v965 = vsel %vm788, %v645, 0
  %v967 = vsel %vm788, %v648, 0
  %v969 = vsel %vm788, %v651, 0
  %v971 = vsel %vm788, %v654, 0
  %v973 = vsel %vm788, %v657, 0
  %v975 = vsel %vm788, %v660, 0
  %v977 = vsel %vm788, %v663, 0
  %v979 = vsel %vm788, %v666, 0
  %v981 = vsel %vm788, %v669, 0
  %v983 = vsel %vm788, %v672, 0
  %v985 = vsel %vm788, %v675, 0
  %v987 = vsel %vm788, %v678, 0
  %989 = vmatprep.subr.bf16.mxu0 0
  %990 = vmatpush1.bf16.msra.mxu0 %v961
  %991 = vmatprep.subr.bf16.mxu0 0
  %992 = vmatpush1.bf16.msra.mxu0 %v962
  %993 = vmatprep.subr.bf16.mxu0 0
  %994 = vmatpush1.bf16.msra.mxu0 0
  %995 = vmatprep.subr.bf16.mxu0 0
  %996 = vmatpush1.bf16.msra.mxu0 0
  %997 = vmatprep.subr.bf16.mxu0 0
  %998 = vmatpush1.bf16.msra.mxu0 0
  %999 = vmatprep.subr.bf16.mxu0 0
  %1000 = vmatpush1.bf16.msra.mxu0 0
  %1001 = vmatprep.subr.bf16.mxu0 0
  %1002 = vmatpush1.bf16.msra.mxu0 0
  %1003 = vmatprep.subr.bf16.mxu0 0
  %1004 = vmatpush1.bf16.msra.mxu0 0
  %1005 = vmatprep.subr.bf16.mxu0 0
  %1006 = vmatpush1.bf16.msra.mxu0 0
  %1007 = vmatprep.subr.bf16.mxu0 0
  %1008 = vmatpush1.bf16.msra.mxu0 0
  %1009 = vmatprep.subr.bf16.mxu0 0
  %1010 = vmatpush1.bf16.msra.mxu0 0
  %1011 = vmatprep.subr.bf16.mxu0 0
  %1012 = vmatpush1.bf16.msra.mxu0 0
  %1013 = vmatprep.subr.bf16.mxu0 0
  %1014 = vmatpush1.bf16.msra.mxu0 0
  %1015 = vmatprep.subr.bf16.mxu0 0
  %1016 = vmatpush1.bf16.msra.mxu0 0
  %1017 = vmatprep.subr.bf16.mxu0 0
  %1018 = vmatpush1.bf16.msra.mxu0 0
  %1019 = vmatprep.subr.bf16.mxu0 0
  %1020 = vmatpush1.bf16.msra.mxu0 0
  %1021 = vmatprep.mubr.bf16.mxu0 0
  %1022 = vmatmul.mubr.bf16.gmra.mrb[0].mxu0 %v965
  %v1023 = vpop.f32.mrb[0].mxu0
  %v1024 = vadd.f32 %v860, %v1023
  %v1025 = vpop.f32.mrb[0].mxu0
  %v1026 = vpop.f32.mrb[0].mxu0
  %v1027 = vadd.f32 %v863, %v1026
  %v1028 = vpop.f32.mrb[0].mxu0
  %1029 = vmatprep.mubr.bf16.mxu0 0
  %1030 = vmatmul.mubr.bf16.gmra.mrb[0].mxu0 %v967
  %v1031 = vpop.f32.mrb[0].mxu0
  %v1032 = vadd.f32 %v868, %v1031
  %v1033 = vpop.f32.mrb[0].mxu0
  %v1034 = vpop.f32.mrb[0].mxu0
  %v1035 = vadd.f32 %v871, %v1034
  %v1036 = vpop.f32.mrb[0].mxu0
  %1037 = vmatprep.mubr.bf16.mxu0 0
  %1038 = vmatmul.mubr.bf16.gmra.mrb[0].mxu0 %v969
  %v1039 = vpop.f32.mrb[0].mxu0
  %v1040 = vadd.f32 %v876, %v1039
  %v1041 = vpop.f32.mrb[0].mxu0
  %v1042 = vpop.f32.mrb[0].mxu0
  %v1043 = vadd.f32 %v879, %v1042
  %v1044 = vpop.f32.mrb[0].mxu0
  %1045 = vmatprep.mubr.bf16.mxu0 0
  %1046 = vmatmul.mubr.bf16.gmra.mrb[0].mxu0 %v971
  %v1047 = vpop.f32.mrb[0].mxu0
  %v1048 = vadd.f32 %v884, %v1047
  %v1049 = vpop.f32.mrb[0].mxu0
  %v1050 = vpop.f32.mrb[0].mxu0
  %v1051 = vadd.f32 %v887, %v1050
  %v1052 = vpop.f32.mrb[0].mxu0
  %1053 = vmatprep.mubr.bf16.mxu0 0
  %1054 = vmatmul.mubr.bf16.gmra.mrb[0].mxu0 %v973
  %v1055 = vpop.f32.mrb[0].mxu0
  %v1056 = vadd.f32 %v892, %v1055
  %v1057 = vpop.f32.mrb[0].mxu0
  %v1058 = vpop.f32.mrb[0].mxu0
  %v1059 = vadd.f32 %v895, %v1058
  %v1060 = vpop.f32.mrb[0].mxu0
  %1061 = vmatprep.mubr.bf16.mxu0 0
  %1062 = vmatmul.mubr.bf16.gmra.mrb[0].mxu0 %v975
  %v1063 = vpop.f32.mrb[0].mxu0
  %v1064 = vadd.f32 %v900, %v1063
  %v1065 = vpop.f32.mrb[0].mxu0
  %v1066 = vpop.f32.mrb[0].mxu0
  %v1067 = vadd.f32 %v903, %v1066
  %v1068 = vpop.f32.mrb[0].mxu0
  %1069 = vmatprep.mubr.bf16.mxu0 0
  %1070 = vmatmul.mubr.bf16.gmra.mrb[0].mxu0 %v977
  %v1071 = vpop.f32.mrb[0].mxu0
  %v1072 = vadd.f32 %v908, %v1071
  %v1073 = vpop.f32.mrb[0].mxu0
  %v1074 = vpop.f32.mrb[0].mxu0
  %v1075 = vadd.f32 %v911, %v1074
  %v1076 = vpop.f32.mrb[0].mxu0
  %1077 = vmatprep.mubr.bf16.mxu0 0
  %1078 = vmatmul.mubr.bf16.gmra.mrb[0].mxu0 %v979
  %v1079 = vpop.f32.mrb[0].mxu0
  %v1080 = vadd.f32 %v916, %v1079
  %v1081 = vpop.f32.mrb[0].mxu0
  %v1082 = vpop.f32.mrb[0].mxu0
  %v1083 = vadd.f32 %v919, %v1082
  %v1084 = vpop.f32.mrb[0].mxu0
  %1085 = vmatprep.mubr.bf16.mxu0 0
  %1086 = vmatmul.mubr.bf16.gmra.mrb[0].mxu0 %v981
  %v1087 = vpop.f32.mrb[0].mxu0
  %v1088 = vadd.f32 %v924, %v1087
  %v1089 = vpop.f32.mrb[0].mxu0
  %v1090 = vpop.f32.mrb[0].mxu0
  %v1091 = vadd.f32 %v927, %v1090
  %v1092 = vpop.f32.mrb[0].mxu0
  %1093 = vmatprep.mubr.bf16.mxu0 0
  %1094 = vmatmul.mubr.bf16.gmra.mrb[0].mxu0 %v983
  %v1095 = vpop.f32.mrb[0].mxu0
  %v1096 = vadd.f32 %v932, %v1095
  %v1097 = vpop.f32.mrb[0].mxu0
  %v1098 = vpop.f32.mrb[0].mxu0
  %v1099 = vadd.f32 %v935, %v1098
  %v1100 = vpop.f32.mrb[0].mxu0
  %1101 = vmatprep.mubr.bf16.mxu0 0
  %1102 = vmatmul.mubr.bf16.gmra.mrb[0].mxu0 %v985
  %v1103 = vpop.f32.mrb[0].mxu0
  %v1104 = vadd.f32 %v940, %v1103
  %v1105 = vpop.f32.mrb[0].mxu0
  %v1106 = vpop.f32.mrb[0].mxu0
  %v1107 = vadd.f32 %v943, %v1106
  %v1108 = vpop.f32.mrb[0].mxu0
  %1109 = vmatprep.mubr.bf16.mxu0 0
  %1110 = vmatmul.mubr.bf16.gmra.mrb[0].mxu0 %v987
  %v1111 = vpop.f32.mrb[0].mxu0
  %v1112 = vadd.f32 %v948, %v1111
  %v1113 = vpop.f32.mrb[0].mxu0
  %v1114 = vpop.f32.mrb[0].mxu0
  %v1115 = vpop.f32.mrb[0].mxu0
  %1116 = vdwg.mxu0
  %s1117 = scalar_lea.vmem %s6, 32
  %v1118 = vld [vmem:[%s1117] sm:$0xf]
  %v1119 = vld [vmem:[%s1117 + $0x4] sm:$0xf]
  %v1120 = vld [vmem:[%s1117 + $0x8] sm:$0xf]
  %v1121 = vld [vmem:[%s1117 + $0xc] sm:$0xf]
  %vm1134 = vcmask 1046528
  %v1135 = vrot.slane %v645, 1
  %v1136 = vrot.slane %v648, 1
  %v1137 = vsel %vm1134, %v1135, %v1136
  %v1138 = vrot.slane %v651, 1
  %v1139 = vsel %vm1134, %v1136, %v1138
  %v1140 = vrot.slane %v654, 1
  %v1141 = vsel %vm1134, %v1138, %v1140
  %v1142 = vrot.slane %v657, 1
  %v1143 = vsel %vm1134, %v1140, %v1142
  %v1144 = vrot.slane %v660, 1
  %v1145 = vsel %vm1134, %v1142, %v1144
  %v1146 = vrot.slane %v663, 1
  %v1147 = vsel %vm1134, %v1144, %v1146
  %v1148 = vrot.slane %v666, 1
  %v1149 = vsel %vm1134, %v1146, %v1148
  %v1150 = vrot.slane %v669, 1
  %v1151 = vsel %vm1134, %v1148, %v1150
  %v1152 = vrot.slane %v672, 1
  %v1153 = vsel %vm1134, %v1150, %v1152
  %v1154 = vrot.slane %v675, 1
  %v1155 = vsel %vm1134, %v1152, %v1154
  %v1156 = vrot.slane %v678, 1
  %v1157 = vsel %vm1134, %v1154, %v1156
  %v1162 = vunpack.c.l.b16 %v1118
  %v1163 = vunpack.c.l.b16 %v1119
  %v1164 = vunpack.c.l.b16 %v1120
  %v1165 = vunpack.c.l.b16 %v1121
  %v1166 = vpack.c.b16 %v1163, %v1162
  %v1167 = vpack.c.b16 %v1165, %v1164
  %v1171 = vsel %vm788, %v1137, 0
  %v1174 = vsel %vm788, %v1139, 0
  %v1177 = vsel %vm788, %v1141, 0
  %v1180 = vsel %vm788, %v1143, 0
  %v1183 = vsel %vm788, %v1145, 0
  %v1186 = vsel %vm788, %v1147, 0
  %v1189 = vsel %vm788, %v1149, 0
  %v1192 = vsel %vm788, %v1151, 0
  %v1195 = vsel %vm788, %v1153, 0
  %v1198 = vsel %vm788, %v1155, 0
  %v1201 = vsel %vm788, %v1157, 0
  %v1204 = vsel %vm788, %v1156, 0
  %1206 = vmatprep.subr.bf16.mxu0 0
  %1207 = vmatpush1.bf16.msra.mxu0 %v1166
  %1208 = vmatprep.subr.bf16.mxu0 0
  %1209 = vmatpush1.bf16.msra.mxu0 %v1167
  %1210 = vmatprep.subr.bf16.mxu0 0
  %1211 = vmatpush1.bf16.msra.mxu0 0
  %1212 = vmatprep.subr.bf16.mxu0 0
  %1213 = vmatpush1.bf16.msra.mxu0 0
  %1214 = vmatprep.subr.bf16.mxu0 0
  %1215 = vmatpush1.bf16.msra.mxu0 0
  %1216 = vmatprep.subr.bf16.mxu0 0
  %1217 = vmatpush1.bf16.msra.mxu0 0
  %1218 = vmatprep.subr.bf16.mxu0 0
  %1219 = vmatpush1.bf16.msra.mxu0 0
  %1220 = vmatprep.subr.bf16.mxu0 0
  %1221 = vmatpush1.bf16.msra.mxu0 0
  %1222 = vmatprep.subr.bf16.mxu0 0
  %1223 = vmatpush1.bf16.msra.mxu0 0
  %1224 = vmatprep.subr.bf16.mxu0 0
  %1225 = vmatpush1.bf16.msra.mxu0 0
  %1226 = vmatprep.subr.bf16.mxu0 0
  %1227 = vmatpush1.bf16.msra.mxu0 0
  %1228 = vmatprep.subr.bf16.mxu0 0
  %1229 = vmatpush1.bf16.msra.mxu0 0
  %1230 = vmatprep.subr.bf16.mxu0 0
  %1231 = vmatpush1.bf16.msra.mxu0 0
  %1232 = vmatprep.subr.bf16.mxu0 0
  %1233 = vmatpush1.bf16.msra.mxu0 0
  %1234 = vmatprep.subr.bf16.mxu0 0
  %1235 = vmatpush1.bf16.msra.mxu0 0
  %1236 = vmatprep.subr.bf16.mxu0 0
  %1237 = vmatpush1.bf16.msra.mxu0 0
  %1238 = vmatprep.mubr.bf16.mxu0 0
  %1239 = vmatmul.mubr.bf16.gmra.mrb[0].mxu0 %v1171
  %v1240 = vpop.f32.mrb[0].mxu0
  %v1241 = vadd.f32 0.0, %v1240
  %v1242 = vpop.f32.mrb[0].mxu0
  %v1243 = vpop.f32.mrb[0].mxu0
  %v1244 = vadd.f32 0.0, %v1243
  %v1245 = vpop.f32.mrb[0].mxu0
  %1246 = vmatprep.mubr.bf16.mxu0 0
  %1247 = vmatmul.mubr.bf16.gmra.mrb[0].mxu0 %v1174
  %v1248 = vpop.f32.mrb[0].mxu0
  %v1249 = vadd.f32 0.0, %v1248
  %v1250 = vpop.f32.mrb[0].mxu0
  %v1251 = vpop.f32.mrb[0].mxu0
  %v1252 = vadd.f32 0.0, %v1251
  %v1253 = vpop.f32.mrb[0].mxu0
  %1254 = vmatprep.mubr.bf16.mxu0 0
  %1255 = vmatmul.mubr.bf16.gmra.mrb[0].mxu0 %v1177
  %v1256 = vpop.f32.mrb[0].mxu0
  %v1257 = vadd.f32 0.0, %v1256
  %v1258 = vpop.f32.mrb[0].mxu0
  %v1259 = vpop.f32.mrb[0].mxu0
  %v1260 = vadd.f32 0.0, %v1259
  %v1261 = vpop.f32.mrb[0].mxu0
  %1262 = vmatprep.mubr.bf16.mxu0 0
  %1263 = vmatmul.mubr.bf16.gmra.mrb[0].mxu0 %v1180
  %v1264 = vpop.f32.mrb[0].mxu0
  %v1265 = vadd.f32 0.0, %v1264
  %v1266 = vpop.f32.mrb[0].mxu0
  %v1267 = vpop.f32.mrb[0].mxu0
  %v1268 = vadd.f32 0.0, %v1267
  %v1269 = vpop.f32.mrb[0].mxu0
  %1270 = vmatprep.mubr.bf16.mxu0 0
  %1271 = vmatmul.mubr.bf16.gmra.mrb[0].mxu0 %v1183
  %v1272 = vpop.f32.mrb[0].mxu0
  %v1273 = vadd.f32 0.0, %v1272
  %v1274 = vpop.f32.mrb[0].mxu0
  %v1275 = vpop.f32.mrb[0].mxu0
  %v1276 = vadd.f32 0.0, %v1275
  %v1277 = vpop.f32.mrb[0].mxu0
  %1278 = vmatprep.mubr.bf16.mxu0 0
  %1279 = vmatmul.mubr.bf16.gmra.mrb[0].mxu0 %v1186
  %v1280 = vpop.f32.mrb[0].mxu0
  %v1281 = vadd.f32 0.0, %v1280
  %v1282 = vpop.f32.mrb[0].mxu0
  %v1283 = vpop.f32.mrb[0].mxu0
  %v1284 = vadd.f32 0.0, %v1283
  %v1285 = vpop.f32.mrb[0].mxu0
  %1286 = vmatprep.mubr.bf16.mxu0 0
  %1287 = vmatmul.mubr.bf16.gmra.mrb[0].mxu0 %v1189
  %v1288 = vpop.f32.mrb[0].mxu0
  %v1289 = vadd.f32 0.0, %v1288
  %v1290 = vpop.f32.mrb[0].mxu0
  %v1291 = vpop.f32.mrb[0].mxu0
  %v1292 = vadd.f32 0.0, %v1291
  %v1293 = vpop.f32.mrb[0].mxu0
  %1294 = vmatprep.mubr.bf16.mxu0 0
  %1295 = vmatmul.mubr.bf16.gmra.mrb[0].mxu0 %v1192
  %v1296 = vpop.f32.mrb[0].mxu0
  %v1297 = vadd.f32 0.0, %v1296
  %v1298 = vpop.f32.mrb[0].mxu0
  %v1299 = vpop.f32.mrb[0].mxu0
  %v1300 = vadd.f32 0.0, %v1299
  %v1301 = vpop.f32.mrb[0].mxu0
  %1302 = vmatprep.mubr.bf16.mxu0 0
  %1303 = vmatmul.mubr.bf16.gmra.mrb[0].mxu0 %v1195
  %v1304 = vpop.f32.mrb[0].mxu0
  %v1305 = vadd.f32 0.0, %v1304
  %v1306 = vpop.f32.mrb[0].mxu0
  %v1307 = vpop.f32.mrb[0].mxu0
  %v1308 = vadd.f32 0.0, %v1307
  %v1309 = vpop.f32.mrb[0].mxu0
  %1310 = vmatprep.mubr.bf16.mxu0 0
  %1311 = vmatmul.mubr.bf16.gmra.mrb[0].mxu0 %v1198
  %v1312 = vpop.f32.mrb[0].mxu0
  %v1313 = vadd.f32 0.0, %v1312
  %v1314 = vpop.f32.mrb[0].mxu0
  %v1315 = vpop.f32.mrb[0].mxu0
  %v1316 = vadd.f32 0.0, %v1315
  %v1317 = vpop.f32.mrb[0].mxu0
  %1318 = vmatprep.mubr.bf16.mxu0 0
  %1319 = vmatmul.mubr.bf16.gmra.mrb[0].mxu0 %v1201
  %v1320 = vpop.f32.mrb[0].mxu0
  %v1321 = vadd.f32 0.0, %v1320
  %v1322 = vpop.f32.mrb[0].mxu0
  %v1323 = vpop.f32.mrb[0].mxu0
  %v1324 = vadd.f32 0.0, %v1323
  %v1325 = vpop.f32.mrb[0].mxu0
  %1326 = vmatprep.mubr.bf16.mxu0 0
  %1327 = vmatmul.mubr.bf16.gmra.mrb[0].mxu0 %v1204
  %v1328 = vpop.f32.mrb[0].mxu0
  %v1329 = vadd.f32 0.0, %v1328
  %v1330 = vpop.f32.mrb[0].mxu0
  %v1331 = vpop.f32.mrb[0].mxu0
  %v1332 = vpop.f32.mrb[0].mxu0
  %1333 = vdwg.mxu0
  %v1334 = vadd.f32 %v1024, %v1241
  %v1335 = vadd.f32 %v1027, %v1244
  %v1336 = vadd.f32 %v1032, %v1249
  %v1337 = vadd.f32 %v1035, %v1252
  %v1338 = vadd.f32 %v1040, %v1257
  %v1339 = vadd.f32 %v1043, %v1260
  %v1340 = vadd.f32 %v1048, %v1265
  %v1341 = vadd.f32 %v1051, %v1268
  %v1342 = vadd.f32 %v1056, %v1273
  %v1343 = vadd.f32 %v1059, %v1276
  %v1344 = vadd.f32 %v1064, %v1281
  %v1345 = vadd.f32 %v1067, %v1284
  %v1346 = vadd.f32 %v1072, %v1289
  %v1347 = vadd.f32 %v1075, %v1292
  %v1348 = vadd.f32 %v1080, %v1297
  %v1349 = vadd.f32 %v1083, %v1300
  %v1350 = vadd.f32 %v1088, %v1305
  %v1351 = vadd.f32 %v1091, %v1308
  %v1352 = vadd.f32 %v1096, %v1313
  %v1353 = vadd.f32 %v1099, %v1316
  %v1354 = vadd.f32 %v1104, %v1321
  %v1355 = vadd.f32 %v1107, %v1324
  %v1356 = vadd.f32 %v1112, %v1329
  %s1357 = scalar_lea.vmem %s6, 48
  %v1358 = vld [vmem:[%s1357] sm:$0xf]
  %v1359 = vld [vmem:[%s1357 + $0x4] sm:$0xf]
  %v1360 = vld [vmem:[%s1357 + $0x8] sm:$0xf]
  %v1361 = vld [vmem:[%s1357 + $0xc] sm:$0xf]
  %vm1362 = vsmask.f32 3328
  %v1363 = vrot.slane %v693, 4
  %v1364 = vrot.slane %v695, 5
  %v1365 = vor.u32 %v1363, %v1364
  %v1366 = vrot.slane %v703, 4
  %v1367 = vrot.slane %v699, 5
  %v1368 = vor.u32 %v1366, %v1367
  %v1369 = vsel %vm1362, %v1365, %v1368
  %v1370 = vrot.slane %v710, 4
  %v1371 = vrot.slane %v706, 5
  %v1372 = vor.u32 %v1370, %v1371
  %v1373 = vsel %vm1362, %v1368, %v1372
  %v1374 = vrot.slane %v717, 4
  %v1375 = vrot.slane %v713, 5
  %v1376 = vor.u32 %v1374, %v1375
  %v1377 = vsel %vm1362, %v1372, %v1376
  %v1378 = vrot.slane %v724, 4
  %v1379 = vrot.slane %v720, 5
  %v1380 = vor.u32 %v1378, %v1379
  %v1381 = vsel %vm1362, %v1376, %v1380
  %v1382 = vrot.slane %v731, 4
  %v1383 = vrot.slane %v727, 5
  %v1384 = vor.u32 %v1382, %v1383
  %v1385 = vsel %vm1362, %v1380, %v1384
  %v1386 = vrot.slane %v738, 4
  %v1387 = vrot.slane %v734, 5
  %v1388 = vor.u32 %v1386, %v1387
  %v1389 = vsel %vm1362, %v1384, %v1388
  %v1390 = vrot.slane %v745, 4
  %v1391 = vrot.slane %v741, 5
  %v1392 = vor.u32 %v1390, %v1391
  %v1393 = vsel %vm1362, %v1388, %v1392
  %v1394 = vrot.slane %v752, 4
  %v1395 = vrot.slane %v748, 5
  %v1396 = vor.u32 %v1394, %v1395
  %v1397 = vsel %vm1362, %v1392, %v1396
  %v1398 = vrot.slane %v759, 4
  %v1399 = vrot.slane %v755, 5
  %v1400 = vor.u32 %v1398, %v1399
  %v1401 = vsel %vm1362, %v1396, %v1400
  %v1402 = vrot.slane %v766, 4
  %v1403 = vrot.slane %v762, 5
  %v1404 = vor.u32 %v1402, %v1403
  %v1405 = vsel %vm1362, %v1400, %v1404
  %v1406 = vrot.slane %v773, 4
  %v1407 = vrot.slane %v769, 5
  %v1408 = vor.u32 %v1406, %v1407
  %v1409 = vsel %vm1362, %v1404, %v1408
  %v1414 = vunpack.c.l.b16 %v1358
  %v1415 = vunpack.c.l.b16 %v1359
  %v1416 = vunpack.c.l.b16 %v1360
  %v1417 = vunpack.c.l.b16 %v1361
  %v1418 = vpack.c.b16 %v1415, %v1414
  %v1419 = vpack.c.b16 %v1417, %v1416
  %v1423 = vsel %vm788, %v1369, 0
  %v1426 = vsel %vm788, %v1373, 0
  %v1429 = vsel %vm788, %v1377, 0
  %v1432 = vsel %vm788, %v1381, 0
  %v1435 = vsel %vm788, %v1385, 0
  %v1438 = vsel %vm788, %v1389, 0
  %v1441 = vsel %vm788, %v1393, 0
  %v1444 = vsel %vm788, %v1397, 0
  %v1447 = vsel %vm788, %v1401, 0
  %v1450 = vsel %vm788, %v1405, 0
  %v1453 = vsel %vm788, %v1409, 0
  %v1456 = vsel %vm788, %v1408, 0
  %1458 = vmatprep.subr.bf16.mxu0 0
  %1459 = vmatpush1.bf16.msra.mxu0 %v1418
  %1460 = vmatprep.subr.bf16.mxu0 0
  %1461 = vmatpush1.bf16.msra.mxu0 %v1419
  %1462 = vmatprep.subr.bf16.mxu0 0
  %1463 = vmatpush1.bf16.msra.mxu0 0
  %1464 = vmatprep.subr.bf16.mxu0 0
  %1465 = vmatpush1.bf16.msra.mxu0 0
  %1466 = vmatprep.subr.bf16.mxu0 0
  %1467 = vmatpush1.bf16.msra.mxu0 0
  %1468 = vmatprep.subr.bf16.mxu0 0
  %1469 = vmatpush1.bf16.msra.mxu0 0
  %1470 = vmatprep.subr.bf16.mxu0 0
  %1471 = vmatpush1.bf16.msra.mxu0 0
  %1472 = vmatprep.subr.bf16.mxu0 0
  %1473 = vmatpush1.bf16.msra.mxu0 0
  %1474 = vmatprep.subr.bf16.mxu0 0
  %1475 = vmatpush1.bf16.msra.mxu0 0
  %1476 = vmatprep.subr.bf16.mxu0 0
  %1477 = vmatpush1.bf16.msra.mxu0 0
  %1478 = vmatprep.subr.bf16.mxu0 0
  %1479 = vmatpush1.bf16.msra.mxu0 0
  %1480 = vmatprep.subr.bf16.mxu0 0
  %1481 = vmatpush1.bf16.msra.mxu0 0
  %1482 = vmatprep.subr.bf16.mxu0 0
  %1483 = vmatpush1.bf16.msra.mxu0 0
  %1484 = vmatprep.subr.bf16.mxu0 0
  %1485 = vmatpush1.bf16.msra.mxu0 0
  %1486 = vmatprep.subr.bf16.mxu0 0
  %1487 = vmatpush1.bf16.msra.mxu0 0
  %1488 = vmatprep.subr.bf16.mxu0 0
  %1489 = vmatpush1.bf16.msra.mxu0 0
  %1490 = vmatprep.mubr.bf16.mxu0 0
  %1491 = vmatmul.mubr.bf16.gmra.mrb[0].mxu0 %v1423
  %v1492 = vpop.f32.mrb[0].mxu0
  %v1493 = vadd.f32 0.0, %v1492
  %v1494 = vpop.f32.mrb[0].mxu0
  %v1495 = vpop.f32.mrb[0].mxu0
  %v1496 = vadd.f32 0.0, %v1495
  %v1497 = vpop.f32.mrb[0].mxu0
  %1498 = vmatprep.mubr.bf16.mxu0 0
  %1499 = vmatmul.mubr.bf16.gmra.mrb[0].mxu0 %v1426
  %v1500 = vpop.f32.mrb[0].mxu0
  %v1501 = vadd.f32 0.0, %v1500
  %v1502 = vpop.f32.mrb[0].mxu0
  %v1503 = vpop.f32.mrb[0].mxu0
  %v1504 = vadd.f32 0.0, %v1503
  %v1505 = vpop.f32.mrb[0].mxu0
  %1506 = vmatprep.mubr.bf16.mxu0 0
  %1507 = vmatmul.mubr.bf16.gmra.mrb[0].mxu0 %v1429
  %v1508 = vpop.f32.mrb[0].mxu0
  %v1509 = vadd.f32 0.0, %v1508
  %v1510 = vpop.f32.mrb[0].mxu0
  %v1511 = vpop.f32.mrb[0].mxu0
  %v1512 = vadd.f32 0.0, %v1511
  %v1513 = vpop.f32.mrb[0].mxu0
  %1514 = vmatprep.mubr.bf16.mxu0 0
  %1515 = vmatmul.mubr.bf16.gmra.mrb[0].mxu0 %v1432
  %v1516 = vpop.f32.mrb[0].mxu0
  %v1517 = vadd.f32 0.0, %v1516
  %v1518 = vpop.f32.mrb[0].mxu0
  %v1519 = vpop.f32.mrb[0].mxu0
  %v1520 = vadd.f32 0.0, %v1519
  %v1521 = vpop.f32.mrb[0].mxu0
  %1522 = vmatprep.mubr.bf16.mxu0 0
  %1523 = vmatmul.mubr.bf16.gmra.mrb[0].mxu0 %v1435
  %v1524 = vpop.f32.mrb[0].mxu0
  %v1525 = vadd.f32 0.0, %v1524
  %v1526 = vpop.f32.mrb[0].mxu0
  %v1527 = vpop.f32.mrb[0].mxu0
  %v1528 = vadd.f32 0.0, %v1527
  %v1529 = vpop.f32.mrb[0].mxu0
  %1530 = vmatprep.mubr.bf16.mxu0 0
  %1531 = vmatmul.mubr.bf16.gmra.mrb[0].mxu0 %v1438
  %v1532 = vpop.f32.mrb[0].mxu0
  %v1533 = vadd.f32 0.0, %v1532
  %v1534 = vpop.f32.mrb[0].mxu0
  %v1535 = vpop.f32.mrb[0].mxu0
  %v1536 = vadd.f32 0.0, %v1535
  %v1537 = vpop.f32.mrb[0].mxu0
  %1538 = vmatprep.mubr.bf16.mxu0 0
  %1539 = vmatmul.mubr.bf16.gmra.mrb[0].mxu0 %v1441
  %v1540 = vpop.f32.mrb[0].mxu0
  %v1541 = vadd.f32 0.0, %v1540
  %v1542 = vpop.f32.mrb[0].mxu0
  %v1543 = vpop.f32.mrb[0].mxu0
  %v1544 = vadd.f32 0.0, %v1543
  %v1545 = vpop.f32.mrb[0].mxu0
  %1546 = vmatprep.mubr.bf16.mxu0 0
  %1547 = vmatmul.mubr.bf16.gmra.mrb[0].mxu0 %v1444
  %v1548 = vpop.f32.mrb[0].mxu0
  %v1549 = vadd.f32 0.0, %v1548
  %v1550 = vpop.f32.mrb[0].mxu0
  %v1551 = vpop.f32.mrb[0].mxu0
  %v1552 = vadd.f32 0.0, %v1551
  %v1553 = vpop.f32.mrb[0].mxu0
  %1554 = vmatprep.mubr.bf16.mxu0 0
  %1555 = vmatmul.mubr.bf16.gmra.mrb[0].mxu0 %v1447
  %v1556 = vpop.f32.mrb[0].mxu0
  %v1557 = vadd.f32 0.0, %v1556
  %v1558 = vpop.f32.mrb[0].mxu0
  %v1559 = vpop.f32.mrb[0].mxu0
  %v1560 = vadd.f32 0.0, %v1559
  %v1561 = vpop.f32.mrb[0].mxu0
  %1562 = vmatprep.mubr.bf16.mxu0 0
  %1563 = vmatmul.mubr.bf16.gmra.mrb[0].mxu0 %v1450
  %v1564 = vpop.f32.mrb[0].mxu0
  %v1565 = vadd.f32 0.0, %v1564
  %v1566 = vpop.f32.mrb[0].mxu0
  %v1567 = vpop.f32.mrb[0].mxu0
  %v1568 = vadd.f32 0.0, %v1567
  %v1569 = vpop.f32.mrb[0].mxu0
  %1570 = vmatprep.mubr.bf16.mxu0 0
  %1571 = vmatmul.mubr.bf16.gmra.mrb[0].mxu0 %v1453
  %v1572 = vpop.f32.mrb[0].mxu0
  %v1573 = vadd.f32 0.0, %v1572
  %v1574 = vpop.f32.mrb[0].mxu0
  %v1575 = vpop.f32.mrb[0].mxu0
  %v1576 = vadd.f32 0.0, %v1575
  %v1577 = vpop.f32.mrb[0].mxu0
  %1578 = vmatprep.mubr.bf16.mxu0 0
  %1579 = vmatmul.mubr.bf16.gmra.mrb[0].mxu0 %v1456
  %v1580 = vpop.f32.mrb[0].mxu0
  %v1581 = vadd.f32 0.0, %v1580
  %v1582 = vpop.f32.mrb[0].mxu0
  %v1583 = vpop.f32.mrb[0].mxu0
  %v1584 = vpop.f32.mrb[0].mxu0
  %1585 = vdwg.mxu0
  %v1586 = vadd.f32 %v1334, %v1493
  %v1587 = vadd.f32 %v1335, %v1496
  %v1588 = vadd.f32 %v1336, %v1501
  %v1589 = vadd.f32 %v1337, %v1504
  %v1590 = vadd.f32 %v1338, %v1509
  %v1591 = vadd.f32 %v1339, %v1512
  %v1592 = vadd.f32 %v1340, %v1517
  %v1593 = vadd.f32 %v1341, %v1520
  %v1594 = vadd.f32 %v1342, %v1525
  %v1595 = vadd.f32 %v1343, %v1528
  %v1596 = vadd.f32 %v1344, %v1533
  %v1597 = vadd.f32 %v1345, %v1536
  %v1598 = vadd.f32 %v1346, %v1541
  %v1599 = vadd.f32 %v1347, %v1544
  %v1600 = vadd.f32 %v1348, %v1549
  %v1601 = vadd.f32 %v1349, %v1552
  %v1602 = vadd.f32 %v1350, %v1557
  %v1603 = vadd.f32 %v1351, %v1560
  %v1604 = vadd.f32 %v1352, %v1565
  %v1605 = vadd.f32 %v1353, %v1568
  %v1606 = vadd.f32 %v1354, %v1573
  %v1607 = vadd.f32 %v1355, %v1576
  %v1608 = vadd.f32 %v1356, %v1581
  %s1609 = scalar_lea.vmem %s6, 64
  %v1610 = vld [vmem:[%s1609] sm:$0xf]
  %v1611 = vld [vmem:[%s1609 + $0x4] sm:$0xf]
  %v1612 = vld [vmem:[%s1609 + $0x8] sm:$0xf]
  %v1613 = vld [vmem:[%s1609 + $0xc] sm:$0xf]
  %vm1614 = vcmask 1042432
  %v1615 = vrot.slane %v645, 5
  %v1616 = vrot.slane %v648, 5
  %v1617 = vsel %vm1614, %v1615, %v1616
  %v1618 = vrot.slane %v651, 5
  %v1619 = vsel %vm1614, %v1616, %v1618
  %v1620 = vrot.slane %v654, 5
  %v1621 = vsel %vm1614, %v1618, %v1620
  %v1622 = vrot.slane %v657, 5
  %v1623 = vsel %vm1614, %v1620, %v1622
  %v1624 = vrot.slane %v660, 5
  %v1625 = vsel %vm1614, %v1622, %v1624
  %v1626 = vrot.slane %v663, 5
  %v1627 = vsel %vm1614, %v1624, %v1626
  %v1628 = vrot.slane %v666, 5
  %v1629 = vsel %vm1614, %v1626, %v1628
  %v1630 = vrot.slane %v669, 5
  %v1631 = vsel %vm1614, %v1628, %v1630
  %v1632 = vrot.slane %v672, 5
  %v1633 = vsel %vm1614, %v1630, %v1632
  %v1634 = vrot.slane %v675, 5
  %v1635 = vsel %vm1614, %v1632, %v1634
  %v1636 = vrot.slane %v678, 5
  %v1637 = vsel %vm1614, %v1634, %v1636
  %v1642 = vunpack.c.l.b16 %v1610
  %v1643 = vunpack.c.l.b16 %v1611
  %v1644 = vunpack.c.l.b16 %v1612
  %v1645 = vunpack.c.l.b16 %v1613
  %v1646 = vpack.c.b16 %v1643, %v1642
  %v1647 = vpack.c.b16 %v1645, %v1644
  %v1651 = vsel %vm788, %v1617, 0
  %v1654 = vsel %vm788, %v1619, 0
  %v1657 = vsel %vm788, %v1621, 0
  %v1660 = vsel %vm788, %v1623, 0
  %v1663 = vsel %vm788, %v1625, 0
  %v1666 = vsel %vm788, %v1627, 0
  %v1669 = vsel %vm788, %v1629, 0
  %v1672 = vsel %vm788, %v1631, 0
  %v1675 = vsel %vm788, %v1633, 0
  %v1678 = vsel %vm788, %v1635, 0
  %v1681 = vsel %vm788, %v1637, 0
  %v1684 = vsel %vm788, %v1636, 0
  %1686 = vmatprep.subr.bf16.mxu0 0
  %1687 = vmatpush1.bf16.msra.mxu0 %v1646
  %1688 = vmatprep.subr.bf16.mxu0 0
  %1689 = vmatpush1.bf16.msra.mxu0 %v1647
  %1690 = vmatprep.subr.bf16.mxu0 0
  %1691 = vmatpush1.bf16.msra.mxu0 0
  %1692 = vmatprep.subr.bf16.mxu0 0
  %1693 = vmatpush1.bf16.msra.mxu0 0
  %1694 = vmatprep.subr.bf16.mxu0 0
  %1695 = vmatpush1.bf16.msra.mxu0 0
  %1696 = vmatprep.subr.bf16.mxu0 0
  %1697 = vmatpush1.bf16.msra.mxu0 0
  %1698 = vmatprep.subr.bf16.mxu0 0
  %1699 = vmatpush1.bf16.msra.mxu0 0
  %1700 = vmatprep.subr.bf16.mxu0 0
  %1701 = vmatpush1.bf16.msra.mxu0 0
  %1702 = vmatprep.subr.bf16.mxu0 0
  %1703 = vmatpush1.bf16.msra.mxu0 0
  %1704 = vmatprep.subr.bf16.mxu0 0
  %1705 = vmatpush1.bf16.msra.mxu0 0
  %1706 = vmatprep.subr.bf16.mxu0 0
  %1707 = vmatpush1.bf16.msra.mxu0 0
  %1708 = vmatprep.subr.bf16.mxu0 0
  %1709 = vmatpush1.bf16.msra.mxu0 0
  %1710 = vmatprep.subr.bf16.mxu0 0
  %1711 = vmatpush1.bf16.msra.mxu0 0
  %1712 = vmatprep.subr.bf16.mxu0 0
  %1713 = vmatpush1.bf16.msra.mxu0 0
  %1714 = vmatprep.subr.bf16.mxu0 0
  %1715 = vmatpush1.bf16.msra.mxu0 0
  %1716 = vmatprep.subr.bf16.mxu0 0
  %1717 = vmatpush1.bf16.msra.mxu0 0
  %1718 = vmatprep.mubr.bf16.mxu0 0
  %1719 = vmatmul.mubr.bf16.gmra.mrb[0].mxu0 %v1651
  %v1720 = vpop.f32.mrb[0].mxu0
  %v1721 = vadd.f32 0.0, %v1720
  %v1722 = vpop.f32.mrb[0].mxu0
  %v1723 = vpop.f32.mrb[0].mxu0
  %v1724 = vadd.f32 0.0, %v1723
  %v1725 = vpop.f32.mrb[0].mxu0
  %1726 = vmatprep.mubr.bf16.mxu0 0
  %1727 = vmatmul.mubr.bf16.gmra.mrb[0].mxu0 %v1654
  %v1728 = vpop.f32.mrb[0].mxu0
  %v1729 = vadd.f32 0.0, %v1728
  %v1730 = vpop.f32.mrb[0].mxu0
  %v1731 = vpop.f32.mrb[0].mxu0
  %v1732 = vadd.f32 0.0, %v1731
  %v1733 = vpop.f32.mrb[0].mxu0
  %1734 = vmatprep.mubr.bf16.mxu0 0
  %1735 = vmatmul.mubr.bf16.gmra.mrb[0].mxu0 %v1657
  %v1736 = vpop.f32.mrb[0].mxu0
  %v1737 = vadd.f32 0.0, %v1736
  %v1738 = vpop.f32.mrb[0].mxu0
  %v1739 = vpop.f32.mrb[0].mxu0
  %v1740 = vadd.f32 0.0, %v1739
  %v1741 = vpop.f32.mrb[0].mxu0
  %1742 = vmatprep.mubr.bf16.mxu0 0
  %1743 = vmatmul.mubr.bf16.gmra.mrb[0].mxu0 %v1660
  %v1744 = vpop.f32.mrb[0].mxu0
  %v1745 = vadd.f32 0.0, %v1744
  %v1746 = vpop.f32.mrb[0].mxu0
  %v1747 = vpop.f32.mrb[0].mxu0
  %v1748 = vadd.f32 0.0, %v1747
  %v1749 = vpop.f32.mrb[0].mxu0
  %1750 = vmatprep.mubr.bf16.mxu0 0
  %1751 = vmatmul.mubr.bf16.gmra.mrb[0].mxu0 %v1663
  %v1752 = vpop.f32.mrb[0].mxu0
  %v1753 = vadd.f32 0.0, %v1752
  %v1754 = vpop.f32.mrb[0].mxu0
  %v1755 = vpop.f32.mrb[0].mxu0
  %v1756 = vadd.f32 0.0, %v1755
  %v1757 = vpop.f32.mrb[0].mxu0
  %1758 = vmatprep.mubr.bf16.mxu0 0
  %1759 = vmatmul.mubr.bf16.gmra.mrb[0].mxu0 %v1666
  %v1760 = vpop.f32.mrb[0].mxu0
  %v1761 = vadd.f32 0.0, %v1760
  %v1762 = vpop.f32.mrb[0].mxu0
  %v1763 = vpop.f32.mrb[0].mxu0
  %v1764 = vadd.f32 0.0, %v1763
  %v1765 = vpop.f32.mrb[0].mxu0
  %1766 = vmatprep.mubr.bf16.mxu0 0
  %1767 = vmatmul.mubr.bf16.gmra.mrb[0].mxu0 %v1669
  %v1768 = vpop.f32.mrb[0].mxu0
  %v1769 = vadd.f32 0.0, %v1768
  %v1770 = vpop.f32.mrb[0].mxu0
  %v1771 = vpop.f32.mrb[0].mxu0
  %v1772 = vadd.f32 0.0, %v1771
  %v1773 = vpop.f32.mrb[0].mxu0
  %1774 = vmatprep.mubr.bf16.mxu0 0
  %1775 = vmatmul.mubr.bf16.gmra.mrb[0].mxu0 %v1672
  %v1776 = vpop.f32.mrb[0].mxu0
  %v1777 = vadd.f32 0.0, %v1776
  %v1778 = vpop.f32.mrb[0].mxu0
  %v1779 = vpop.f32.mrb[0].mxu0
  %v1780 = vadd.f32 0.0, %v1779
  %v1781 = vpop.f32.mrb[0].mxu0
  %1782 = vmatprep.mubr.bf16.mxu0 0
  %1783 = vmatmul.mubr.bf16.gmra.mrb[0].mxu0 %v1675
  %v1784 = vpop.f32.mrb[0].mxu0
  %v1785 = vadd.f32 0.0, %v1784
  %v1786 = vpop.f32.mrb[0].mxu0
  %v1787 = vpop.f32.mrb[0].mxu0
  %v1788 = vadd.f32 0.0, %v1787
  %v1789 = vpop.f32.mrb[0].mxu0
  %1790 = vmatprep.mubr.bf16.mxu0 0
  %1791 = vmatmul.mubr.bf16.gmra.mrb[0].mxu0 %v1678
  %v1792 = vpop.f32.mrb[0].mxu0
  %v1793 = vadd.f32 0.0, %v1792
  %v1794 = vpop.f32.mrb[0].mxu0
  %v1795 = vpop.f32.mrb[0].mxu0
  %v1796 = vadd.f32 0.0, %v1795
  %v1797 = vpop.f32.mrb[0].mxu0
  %1798 = vmatprep.mubr.bf16.mxu0 0
  %1799 = vmatmul.mubr.bf16.gmra.mrb[0].mxu0 %v1681
  %v1800 = vpop.f32.mrb[0].mxu0
  %v1801 = vadd.f32 0.0, %v1800
  %v1802 = vpop.f32.mrb[0].mxu0
  %v1803 = vpop.f32.mrb[0].mxu0
  %v1804 = vadd.f32 0.0, %v1803
  %v1805 = vpop.f32.mrb[0].mxu0
  %1806 = vmatprep.mubr.bf16.mxu0 0
  %1807 = vmatmul.mubr.bf16.gmra.mrb[0].mxu0 %v1684
  %v1808 = vpop.f32.mrb[0].mxu0
  %v1809 = vadd.f32 0.0, %v1808
  %v1810 = vpop.f32.mrb[0].mxu0
  %v1811 = vpop.f32.mrb[0].mxu0
  %v1812 = vpop.f32.mrb[0].mxu0
  %1813 = vdwg.mxu0
  %v1814 = vadd.f32 %v1586, %v1721
  %v1815 = vadd.f32 %v1587, %v1724
  %v1816 = vadd.f32 %v1588, %v1729
  %v1817 = vadd.f32 %v1589, %v1732
  %v1818 = vadd.f32 %v1590, %v1737
  %v1819 = vadd.f32 %v1591, %v1740
  %v1820 = vadd.f32 %v1592, %v1745
  %v1821 = vadd.f32 %v1593, %v1748
  %v1822 = vadd.f32 %v1594, %v1753
  %v1823 = vadd.f32 %v1595, %v1756
  %v1824 = vadd.f32 %v1596, %v1761
  %v1825 = vadd.f32 %v1597, %v1764
  %v1826 = vadd.f32 %v1598, %v1769
  %v1827 = vadd.f32 %v1599, %v1772
  %v1828 = vadd.f32 %v1600, %v1777
  %v1829 = vadd.f32 %v1601, %v1780
  %v1830 = vadd.f32 %v1602, %v1785
  %v1831 = vadd.f32 %v1603, %v1788
  %v1832 = vadd.f32 %v1604, %v1793
  %v1833 = vadd.f32 %v1605, %v1796
  %v1834 = vadd.f32 %v1606, %v1801
  %v1835 = vadd.f32 %v1607, %v1804
  %v1836 = vadd.f32 %v1608, %v1809
  %s1837 = scalar_lea.vmem %s6, 80
  %v1838 = vld [vmem:[%s1837] sm:$0xf]
  %v1839 = vld [vmem:[%s1837 + $0x4] sm:$0xf]
  %v1840 = vld [vmem:[%s1837 + $0x8] sm:$0xf]
  %v1841 = vld [vmem:[%s1837 + $0xc] sm:$0xf]
  %vm1842 = vsmask.f32 2304
  %v1843 = vrot.slane %v693, 5
  %v1844 = vrot.slane %v695, 6
  %v1845 = vor.u32 %v1843, %v1844
  %v1846 = vrot.slane %v703, 5
  %v1847 = vrot.slane %v699, 6
  %v1848 = vor.u32 %v1846, %v1847
  %v1849 = vsel %vm1842, %v1845, %v1848
  %v1850 = vrot.slane %v710, 5
  %v1851 = vrot.slane %v706, 6
  %v1852 = vor.u32 %v1850, %v1851
  %v1853 = vsel %vm1842, %v1848, %v1852
  %v1854 = vrot.slane %v717, 5
  %v1855 = vrot.slane %v713, 6
  %v1856 = vor.u32 %v1854, %v1855
  %v1857 = vsel %vm1842, %v1852, %v1856
  %v1858 = vrot.slane %v724, 5
  %v1859 = vrot.slane %v720, 6
  %v1860 = vor.u32 %v1858, %v1859
  %v1861 = vsel %vm1842, %v1856, %v1860
  %v1862 = vrot.slane %v731, 5
  %v1863 = vrot.slane %v727, 6
  %v1864 = vor.u32 %v1862, %v1863
  %v1865 = vsel %vm1842, %v1860, %v1864
  %v1866 = vrot.slane %v738, 5
  %v1867 = vrot.slane %v734, 6
  %v1868 = vor.u32 %v1866, %v1867
  %v1869 = vsel %vm1842, %v1864, %v1868
  %v1870 = vrot.slane %v745, 5
  %v1871 = vrot.slane %v741, 6
  %v1872 = vor.u32 %v1870, %v1871
  %v1873 = vsel %vm1842, %v1868, %v1872
  %v1874 = vrot.slane %v752, 5
  %v1875 = vrot.slane %v748, 6
  %v1876 = vor.u32 %v1874, %v1875
  %v1877 = vsel %vm1842, %v1872, %v1876
  %v1878 = vrot.slane %v759, 5
  %v1879 = vrot.slane %v755, 6
  %v1880 = vor.u32 %v1878, %v1879
  %v1881 = vsel %vm1842, %v1876, %v1880
  %v1882 = vrot.slane %v766, 5
  %v1883 = vrot.slane %v762, 6
  %v1884 = vor.u32 %v1882, %v1883
  %v1885 = vsel %vm1842, %v1880, %v1884
  %v1886 = vrot.slane %v773, 5
  %v1887 = vrot.slane %v769, 6
  %v1888 = vor.u32 %v1886, %v1887
  %v1889 = vsel %vm1842, %v1884, %v1888
  %v1890 = vshll.u32 %v681, 16
  %v1892 = vrot.slane %v1890, 6
  %v1893 = vsel %vm1842, %v1888, %v1892
  %v1898 = vunpack.c.l.b16 %v1838
  %v1899 = vunpack.c.l.b16 %v1839
  %v1900 = vunpack.c.l.b16 %v1840
  %v1901 = vunpack.c.l.b16 %v1841
  %v1902 = vpack.c.b16 %v1899, %v1898
  %v1903 = vpack.c.b16 %v1901, %v1900
  %v1907 = vsel %vm788, %v1849, 0
  %v1910 = vsel %vm788, %v1853, 0
  %v1913 = vsel %vm788, %v1857, 0
  %v1916 = vsel %vm788, %v1861, 0
  %v1919 = vsel %vm788, %v1865, 0
  %v1922 = vsel %vm788, %v1869, 0
  %v1925 = vsel %vm788, %v1873, 0
  %v1928 = vsel %vm788, %v1877, 0
  %v1931 = vsel %vm788, %v1881, 0
  %v1934 = vsel %vm788, %v1885, 0
  %v1937 = vsel %vm788, %v1889, 0
  %v1940 = vsel %vm788, %v1893, 0
  %1942 = vmatprep.subr.bf16.mxu0 0
  %1943 = vmatpush1.bf16.msra.mxu0 %v1902
  %1944 = vmatprep.subr.bf16.mxu0 0
  %1945 = vmatpush1.bf16.msra.mxu0 %v1903
  %1946 = vmatprep.subr.bf16.mxu0 0
  %1947 = vmatpush1.bf16.msra.mxu0 0
  %1948 = vmatprep.subr.bf16.mxu0 0
  %1949 = vmatpush1.bf16.msra.mxu0 0
  %1950 = vmatprep.subr.bf16.mxu0 0
  %1951 = vmatpush1.bf16.msra.mxu0 0
  %1952 = vmatprep.subr.bf16.mxu0 0
  %1953 = vmatpush1.bf16.msra.mxu0 0
  %1954 = vmatprep.subr.bf16.mxu0 0
  %1955 = vmatpush1.bf16.msra.mxu0 0
  %1956 = vmatprep.subr.bf16.mxu0 0
  %1957 = vmatpush1.bf16.msra.mxu0 0
  %1958 = vmatprep.subr.bf16.mxu0 0
  %1959 = vmatpush1.bf16.msra.mxu0 0
  %1960 = vmatprep.subr.bf16.mxu0 0
  %1961 = vmatpush1.bf16.msra.mxu0 0
  %1962 = vmatprep.subr.bf16.mxu0 0
  %1963 = vmatpush1.bf16.msra.mxu0 0
  %1964 = vmatprep.subr.bf16.mxu0 0
  %1965 = vmatpush1.bf16.msra.mxu0 0
  %1966 = vmatprep.subr.bf16.mxu0 0
  %1967 = vmatpush1.bf16.msra.mxu0 0
  %1968 = vmatprep.subr.bf16.mxu0 0
  %1969 = vmatpush1.bf16.msra.mxu0 0
  %1970 = vmatprep.subr.bf16.mxu0 0
  %1971 = vmatpush1.bf16.msra.mxu0 0
  %1972 = vmatprep.subr.bf16.mxu0 0
  %1973 = vmatpush1.bf16.msra.mxu0 0
  %1974 = vmatprep.mubr.bf16.mxu0 0
  %1975 = vmatmul.mubr.bf16.gmra.mrb[0].mxu0 %v1907
  %v1976 = vpop.f32.mrb[0].mxu0
  %v1977 = vadd.f32 0.0, %v1976
  %v1978 = vpop.f32.mrb[0].mxu0
  %v1979 = vpop.f32.mrb[0].mxu0
  %v1980 = vadd.f32 0.0, %v1979
  %v1981 = vpop.f32.mrb[0].mxu0
  %1982 = vmatprep.mubr.bf16.mxu0 0
  %1983 = vmatmul.mubr.bf16.gmra.mrb[0].mxu0 %v1910
  %v1984 = vpop.f32.mrb[0].mxu0
  %v1985 = vadd.f32 0.0, %v1984
  %v1986 = vpop.f32.mrb[0].mxu0
  %v1987 = vpop.f32.mrb[0].mxu0
  %v1988 = vadd.f32 0.0, %v1987
  %v1989 = vpop.f32.mrb[0].mxu0
  %1990 = vmatprep.mubr.bf16.mxu0 0
  %1991 = vmatmul.mubr.bf16.gmra.mrb[0].mxu0 %v1913
  %v1992 = vpop.f32.mrb[0].mxu0
  %v1993 = vadd.f32 0.0, %v1992
  %v1994 = vpop.f32.mrb[0].mxu0
  %v1995 = vpop.f32.mrb[0].mxu0
  %v1996 = vadd.f32 0.0, %v1995
  %v1997 = vpop.f32.mrb[0].mxu0
  %1998 = vmatprep.mubr.bf16.mxu0 0
  %1999 = vmatmul.mubr.bf16.gmra.mrb[0].mxu0 %v1916
  %v2000 = vpop.f32.mrb[0].mxu0
  %v2001 = vadd.f32 0.0, %v2000
  %v2002 = vpop.f32.mrb[0].mxu0
  %v2003 = vpop.f32.mrb[0].mxu0
  %v2004 = vadd.f32 0.0, %v2003
  %v2005 = vpop.f32.mrb[0].mxu0
  %2006 = vmatprep.mubr.bf16.mxu0 0
  %2007 = vmatmul.mubr.bf16.gmra.mrb[0].mxu0 %v1919
  %v2008 = vpop.f32.mrb[0].mxu0
  %v2009 = vadd.f32 0.0, %v2008
  %v2010 = vpop.f32.mrb[0].mxu0
  %v2011 = vpop.f32.mrb[0].mxu0
  %v2012 = vadd.f32 0.0, %v2011
  %v2013 = vpop.f32.mrb[0].mxu0
  %2014 = vmatprep.mubr.bf16.mxu0 0
  %2015 = vmatmul.mubr.bf16.gmra.mrb[0].mxu0 %v1922
  %v2016 = vpop.f32.mrb[0].mxu0
  %v2017 = vadd.f32 0.0, %v2016
  %v2018 = vpop.f32.mrb[0].mxu0
  %v2019 = vpop.f32.mrb[0].mxu0
  %v2020 = vadd.f32 0.0, %v2019
  %v2021 = vpop.f32.mrb[0].mxu0
  %2022 = vmatprep.mubr.bf16.mxu0 0
  %2023 = vmatmul.mubr.bf16.gmra.mrb[0].mxu0 %v1925
  %v2024 = vpop.f32.mrb[0].mxu0
  %v2025 = vadd.f32 0.0, %v2024
  %v2026 = vpop.f32.mrb[0].mxu0
  %v2027 = vpop.f32.mrb[0].mxu0
  %v2028 = vadd.f32 0.0, %v2027
  %v2029 = vpop.f32.mrb[0].mxu0
  %2030 = vmatprep.mubr.bf16.mxu0 0
  %2031 = vmatmul.mubr.bf16.gmra.mrb[0].mxu0 %v1928
  %v2032 = vpop.f32.mrb[0].mxu0
  %v2033 = vadd.f32 0.0, %v2032
  %v2034 = vpop.f32.mrb[0].mxu0
  %v2035 = vpop.f32.mrb[0].mxu0
  %v2036 = vadd.f32 0.0, %v2035
  %v2037 = vpop.f32.mrb[0].mxu0
  %2038 = vmatprep.mubr.bf16.mxu0 0
  %2039 = vmatmul.mubr.bf16.gmra.mrb[0].mxu0 %v1931
  %v2040 = vpop.f32.mrb[0].mxu0
  %v2041 = vadd.f32 0.0, %v2040
  %v2042 = vpop.f32.mrb[0].mxu0
  %v2043 = vpop.f32.mrb[0].mxu0
  %v2044 = vadd.f32 0.0, %v2043
  %v2045 = vpop.f32.mrb[0].mxu0
  %2046 = vmatprep.mubr.bf16.mxu0 0
  %2047 = vmatmul.mubr.bf16.gmra.mrb[0].mxu0 %v1934
  %v2048 = vpop.f32.mrb[0].mxu0
  %v2049 = vadd.f32 0.0, %v2048
  %v2050 = vpop.f32.mrb[0].mxu0
  %v2051 = vpop.f32.mrb[0].mxu0
  %v2052 = vadd.f32 0.0, %v2051
  %v2053 = vpop.f32.mrb[0].mxu0
  %2054 = vmatprep.mubr.bf16.mxu0 0
  %2055 = vmatmul.mubr.bf16.gmra.mrb[0].mxu0 %v1937
  %v2056 = vpop.f32.mrb[0].mxu0
  %v2057 = vadd.f32 0.0, %v2056
  %v2058 = vpop.f32.mrb[0].mxu0
  %v2059 = vpop.f32.mrb[0].mxu0
  %v2060 = vadd.f32 0.0, %v2059
  %v2061 = vpop.f32.mrb[0].mxu0
  %2062 = vmatprep.mubr.bf16.mxu0 0
  %2063 = vmatmul.mubr.bf16.gmra.mrb[0].mxu0 %v1940
  %v2064 = vpop.f32.mrb[0].mxu0
  %v2065 = vadd.f32 0.0, %v2064
  %v2066 = vpop.f32.mrb[0].mxu0
  %v2067 = vpop.f32.mrb[0].mxu0
  %v2068 = vpop.f32.mrb[0].mxu0
  %2069 = vdwg.mxu0
  %v2070 = vadd.f32 %v1814, %v1977
  %v2071 = vadd.f32 %v1815, %v1980
  %v2072 = vadd.f32 %v1816, %v1985
  %v2073 = vadd.f32 %v1817, %v1988
  %v2074 = vadd.f32 %v1818, %v1993
  %v2075 = vadd.f32 %v1819, %v1996
  %v2076 = vadd.f32 %v1820, %v2001
  %v2077 = vadd.f32 %v1821, %v2004
  %v2078 = vadd.f32 %v1822, %v2009
  %v2079 = vadd.f32 %v1823, %v2012
  %v2080 = vadd.f32 %v1824, %v2017
  %v2081 = vadd.f32 %v1825, %v2020
  %v2082 = vadd.f32 %v1826, %v2025
  %v2083 = vadd.f32 %v1827, %v2028
  %v2084 = vadd.f32 %v1828, %v2033
  %v2085 = vadd.f32 %v1829, %v2036
  %v2086 = vadd.f32 %v1830, %v2041
  %v2087 = vadd.f32 %v1831, %v2044
  %v2088 = vadd.f32 %v1832, %v2049
  %v2089 = vadd.f32 %v1833, %v2052
  %v2090 = vadd.f32 %v1834, %v2057
  %v2091 = vadd.f32 %v1835, %v2060
  %v2092 = vadd.f32 %v1836, %v2065
  %s2093 = scalar_lea.vmem %s6, 96
  %v2094 = vld [vmem:[%s2093] sm:$0xf]
  %v2095 = vld [vmem:[%s2093 + $0x4] sm:$0xf]
  %v2096 = vld [vmem:[%s2093 + $0x8] sm:$0xf]
  %v2097 = vld [vmem:[%s2093 + $0xc] sm:$0xf]
  %v2099 = vrot.slane %v681, 1
  %v2100 = vsel %vm1134, %v1156, %v2099
  %v2105 = vunpack.c.l.b16 %v2094
  %v2106 = vunpack.c.l.b16 %v2095
  %v2107 = vunpack.c.l.b16 %v2096
  %v2108 = vunpack.c.l.b16 %v2097
  %v2109 = vpack.c.b16 %v2106, %v2105
  %v2110 = vpack.c.b16 %v2108, %v2107
  %v2114 = vsel %vm788, %v2100, 0
  %v2117 = vsel %vm788, %v2099, 0
  %2119 = vmatprep.subr.bf16.mxu0 0
  %2120 = vmatpush1.bf16.msra.mxu0 %v2109
  %2121 = vmatprep.subr.bf16.mxu0 0
  %2122 = vmatpush1.bf16.msra.mxu0 %v2110
  %2123 = vmatprep.subr.bf16.mxu0 0
  %2124 = vmatpush1.bf16.msra.mxu0 0
  %2125 = vmatprep.subr.bf16.mxu0 0
  %2126 = vmatpush1.bf16.msra.mxu0 0
  %2127 = vmatprep.subr.bf16.mxu0 0
  %2128 = vmatpush1.bf16.msra.mxu0 0
  %2129 = vmatprep.subr.bf16.mxu0 0
  %2130 = vmatpush1.bf16.msra.mxu0 0
  %2131 = vmatprep.subr.bf16.mxu0 0
  %2132 = vmatpush1.bf16.msra.mxu0 0
  %2133 = vmatprep.subr.bf16.mxu0 0
  %2134 = vmatpush1.bf16.msra.mxu0 0
  %2135 = vmatprep.subr.bf16.mxu0 0
  %2136 = vmatpush1.bf16.msra.mxu0 0
  %2137 = vmatprep.subr.bf16.mxu0 0
  %2138 = vmatpush1.bf16.msra.mxu0 0
  %2139 = vmatprep.subr.bf16.mxu0 0
  %2140 = vmatpush1.bf16.msra.mxu0 0
  %2141 = vmatprep.subr.bf16.mxu0 0
  %2142 = vmatpush1.bf16.msra.mxu0 0
  %2143 = vmatprep.subr.bf16.mxu0 0
  %2144 = vmatpush1.bf16.msra.mxu0 0
  %2145 = vmatprep.subr.bf16.mxu0 0
  %2146 = vmatpush1.bf16.msra.mxu0 0
  %2147 = vmatprep.subr.bf16.mxu0 0
  %2148 = vmatpush1.bf16.msra.mxu0 0
  %2149 = vmatprep.subr.bf16.mxu0 0
  %2150 = vmatpush1.bf16.msra.mxu0 0
  %2151 = vmatprep.mubr.bf16.mxu0 0
  %2152 = vmatmul.mubr.bf16.gmra.mrb[0].mxu0 %v1174
  %v2153 = vpop.f32.mrb[0].mxu0
  %v2154 = vadd.f32 0.0, %v2153
  %v2155 = vpop.f32.mrb[0].mxu0
  %v2156 = vpop.f32.mrb[0].mxu0
  %v2157 = vadd.f32 0.0, %v2156
  %v2158 = vpop.f32.mrb[0].mxu0
  %2159 = vmatprep.mubr.bf16.mxu0 0
  %2160 = vmatmul.mubr.bf16.gmra.mrb[0].mxu0 %v1177
  %v2161 = vpop.f32.mrb[0].mxu0
  %v2162 = vadd.f32 0.0, %v2161
  %v2163 = vpop.f32.mrb[0].mxu0
  %v2164 = vpop.f32.mrb[0].mxu0
  %v2165 = vadd.f32 0.0, %v2164
  %v2166 = vpop.f32.mrb[0].mxu0
  %2167 = vmatprep.mubr.bf16.mxu0 0
  %2168 = vmatmul.mubr.bf16.gmra.mrb[0].mxu0 %v1180
  %v2169 = vpop.f32.mrb[0].mxu0
  %v2170 = vadd.f32 0.0, %v2169
  %v2171 = vpop.f32.mrb[0].mxu0
  %v2172 = vpop.f32.mrb[0].mxu0
  %v2173 = vadd.f32 0.0, %v2172
  %v2174 = vpop.f32.mrb[0].mxu0
  %2175 = vmatprep.mubr.bf16.mxu0 0
  %2176 = vmatmul.mubr.bf16.gmra.mrb[0].mxu0 %v1183
  %v2177 = vpop.f32.mrb[0].mxu0
  %v2178 = vadd.f32 0.0, %v2177
  %v2179 = vpop.f32.mrb[0].mxu0
  %v2180 = vpop.f32.mrb[0].mxu0
  %v2181 = vadd.f32 0.0, %v2180
  %v2182 = vpop.f32.mrb[0].mxu0
  %2183 = vmatprep.mubr.bf16.mxu0 0
  %2184 = vmatmul.mubr.bf16.gmra.mrb[0].mxu0 %v1186
  %v2185 = vpop.f32.mrb[0].mxu0
  %v2186 = vadd.f32 0.0, %v2185
  %v2187 = vpop.f32.mrb[0].mxu0
  %v2188 = vpop.f32.mrb[0].mxu0
  %v2189 = vadd.f32 0.0, %v2188
  %v2190 = vpop.f32.mrb[0].mxu0
  %2191 = vmatprep.mubr.bf16.mxu0 0
  %2192 = vmatmul.mubr.bf16.gmra.mrb[0].mxu0 %v1189
  %v2193 = vpop.f32.mrb[0].mxu0
  %v2194 = vadd.f32 0.0, %v2193
  %v2195 = vpop.f32.mrb[0].mxu0
  %v2196 = vpop.f32.mrb[0].mxu0
  %v2197 = vadd.f32 0.0, %v2196
  %v2198 = vpop.f32.mrb[0].mxu0
  %2199 = vmatprep.mubr.bf16.mxu0 0
  %2200 = vmatmul.mubr.bf16.gmra.mrb[0].mxu0 %v1192
  %v2201 = vpop.f32.mrb[0].mxu0
  %v2202 = vadd.f32 0.0, %v2201
  %v2203 = vpop.f32.mrb[0].mxu0
  %v2204 = vpop.f32.mrb[0].mxu0
  %v2205 = vadd.f32 0.0, %v2204
  %v2206 = vpop.f32.mrb[0].mxu0
  %2207 = vmatprep.mubr.bf16.mxu0 0
  %2208 = vmatmul.mubr.bf16.gmra.mrb[0].mxu0 %v1195
  %v2209 = vpop.f32.mrb[0].mxu0
  %v2210 = vadd.f32 0.0, %v2209
  %v2211 = vpop.f32.mrb[0].mxu0
  %v2212 = vpop.f32.mrb[0].mxu0
  %v2213 = vadd.f32 0.0, %v2212
  %v2214 = vpop.f32.mrb[0].mxu0
  %2215 = vmatprep.mubr.bf16.mxu0 0
  %2216 = vmatmul.mubr.bf16.gmra.mrb[0].mxu0 %v1198
  %v2217 = vpop.f32.mrb[0].mxu0
  %v2218 = vadd.f32 0.0, %v2217
  %v2219 = vpop.f32.mrb[0].mxu0
  %v2220 = vpop.f32.mrb[0].mxu0
  %v2221 = vadd.f32 0.0, %v2220
  %v2222 = vpop.f32.mrb[0].mxu0
  %2223 = vmatprep.mubr.bf16.mxu0 0
  %2224 = vmatmul.mubr.bf16.gmra.mrb[0].mxu0 %v1201
  %v2225 = vpop.f32.mrb[0].mxu0
  %v2226 = vadd.f32 0.0, %v2225
  %v2227 = vpop.f32.mrb[0].mxu0
  %v2228 = vpop.f32.mrb[0].mxu0
  %v2229 = vadd.f32 0.0, %v2228
  %v2230 = vpop.f32.mrb[0].mxu0
  %2231 = vmatprep.mubr.bf16.mxu0 0
  %2232 = vmatmul.mubr.bf16.gmra.mrb[0].mxu0 %v2114
  %v2233 = vpop.f32.mrb[0].mxu0
  %v2234 = vadd.f32 0.0, %v2233
  %v2235 = vpop.f32.mrb[0].mxu0
  %v2236 = vpop.f32.mrb[0].mxu0
  %v2237 = vadd.f32 0.0, %v2236
  %v2238 = vpop.f32.mrb[0].mxu0
  %2239 = vmatprep.mubr.bf16.mxu0 0
  %2240 = vmatmul.mubr.bf16.gmra.mrb[0].mxu0 %v2117
  %v2241 = vpop.f32.mrb[0].mxu0
  %v2242 = vadd.f32 0.0, %v2241
  %v2243 = vpop.f32.mrb[0].mxu0
  %v2244 = vpop.f32.mrb[0].mxu0
  %v2245 = vpop.f32.mrb[0].mxu0
  %2246 = vdwg.mxu0
  %v2247 = vadd.f32 %v2070, %v2154
  %v2248 = vadd.f32 %v2071, %v2157
  %v2249 = vadd.f32 %v2072, %v2162
  %v2250 = vadd.f32 %v2073, %v2165
  %v2251 = vadd.f32 %v2074, %v2170
  %v2252 = vadd.f32 %v2075, %v2173
  %v2253 = vadd.f32 %v2076, %v2178
  %v2254 = vadd.f32 %v2077, %v2181
  %v2255 = vadd.f32 %v2078, %v2186
  %v2256 = vadd.f32 %v2079, %v2189
  %v2257 = vadd.f32 %v2080, %v2194
  %v2258 = vadd.f32 %v2081, %v2197
  %v2259 = vadd.f32 %v2082, %v2202
  %v2260 = vadd.f32 %v2083, %v2205
  %v2261 = vadd.f32 %v2084, %v2210
  %v2262 = vadd.f32 %v2085, %v2213
  %v2263 = vadd.f32 %v2086, %v2218
  %v2264 = vadd.f32 %v2087, %v2221
  %v2265 = vadd.f32 %v2088, %v2226
  %v2266 = vadd.f32 %v2089, %v2229
  %v2267 = vadd.f32 %v2090, %v2234
  %v2268 = vadd.f32 %v2091, %v2237
  %v2269 = vadd.f32 %v2092, %v2242
  %s2270 = scalar_lea.vmem %s6, 112
  %v2271 = vld [vmem:[%s2270] sm:$0xf]
  %v2272 = vld [vmem:[%s2270 + $0x4] sm:$0xf]
  %v2273 = vld [vmem:[%s2270 + $0x8] sm:$0xf]
  %v2274 = vld [vmem:[%s2270 + $0xc] sm:$0xf]
  %vm2275 = vsmask.f32 6400
  %v2276 = vrot.slane %v703, 1
  %v2277 = vrot.slane %v699, 2
  %v2278 = vor.u32 %v2276, %v2277
  %v2279 = vrot.slane %v710, 1
  %v2280 = vrot.slane %v706, 2
  %v2281 = vor.u32 %v2279, %v2280
  %v2282 = vsel %vm2275, %v2278, %v2281
  %v2283 = vrot.slane %v717, 1
  %v2284 = vrot.slane %v713, 2
  %v2285 = vor.u32 %v2283, %v2284
  %v2286 = vsel %vm2275, %v2281, %v2285
  %v2287 = vrot.slane %v724, 1
  %v2288 = vrot.slane %v720, 2
  %v2289 = vor.u32 %v2287, %v2288
  %v2290 = vsel %vm2275, %v2285, %v2289
  %v2291 = vrot.slane %v731, 1
  %v2292 = vrot.slane %v727, 2
  %v2293 = vor.u32 %v2291, %v2292
  %v2294 = vsel %vm2275, %v2289, %v2293
  %v2295 = vrot.slane %v738, 1
  %v2296 = vrot.slane %v734, 2
  %v2297 = vor.u32 %v2295, %v2296
  %v2298 = vsel %vm2275, %v2293, %v2297
  %v2299 = vrot.slane %v745, 1
  %v2300 = vrot.slane %v741, 2
  %v2301 = vor.u32 %v2299, %v2300
  %v2302 = vsel %vm2275, %v2297, %v2301
  %v2303 = vrot.slane %v752, 1
  %v2304 = vrot.slane %v748, 2
  %v2305 = vor.u32 %v2303, %v2304
  %v2306 = vsel %vm2275, %v2301, %v2305
  %v2307 = vrot.slane %v759, 1
  %v2308 = vrot.slane %v755, 2
  %v2309 = vor.u32 %v2307, %v2308
  %v2310 = vsel %vm2275, %v2305, %v2309
  %v2311 = vrot.slane %v766, 1
  %v2312 = vrot.slane %v762, 2
  %v2313 = vor.u32 %v2311, %v2312
  %v2314 = vsel %vm2275, %v2309, %v2313
  %v2315 = vrot.slane %v773, 1
  %v2316 = vrot.slane %v769, 2
  %v2317 = vor.u32 %v2315, %v2316
  %v2318 = vsel %vm2275, %v2313, %v2317
  %v2319 = vshrl.u32 %v681, 16
  %v2321 = vrot.slane %v2319, 1
  %v2322 = vrot.slane %v1890, 2
  %v2323 = vor.u32 %v2321, %v2322
  %v2324 = vsel %vm2275, %v2317, %v2323
  %v2329 = vunpack.c.l.b16 %v2271
  %v2330 = vunpack.c.l.b16 %v2272
  %v2331 = vunpack.c.l.b16 %v2273
  %v2332 = vunpack.c.l.b16 %v2274
  %v2333 = vpack.c.b16 %v2330, %v2329
  %v2334 = vpack.c.b16 %v2332, %v2331
  %v2338 = vsel %vm788, %v2282, 0
  %v2341 = vsel %vm788, %v2286, 0
  %v2344 = vsel %vm788, %v2290, 0
  %v2347 = vsel %vm788, %v2294, 0
  %v2350 = vsel %vm788, %v2298, 0
  %v2353 = vsel %vm788, %v2302, 0
  %v2356 = vsel %vm788, %v2306, 0
  %v2359 = vsel %vm788, %v2310, 0
  %v2362 = vsel %vm788, %v2314, 0
  %v2365 = vsel %vm788, %v2318, 0
  %v2368 = vsel %vm788, %v2324, 0
  %v2371 = vsel %vm788, %v2323, 0
  %2373 = vmatprep.subr.bf16.mxu0 0
  %2374 = vmatpush1.bf16.msra.mxu0 %v2333
  %2375 = vmatprep.subr.bf16.mxu0 0
  %2376 = vmatpush1.bf16.msra.mxu0 %v2334
  %2377 = vmatprep.subr.bf16.mxu0 0
  %2378 = vmatpush1.bf16.msra.mxu0 0
  %2379 = vmatprep.subr.bf16.mxu0 0
  %2380 = vmatpush1.bf16.msra.mxu0 0
  %2381 = vmatprep.subr.bf16.mxu0 0
  %2382 = vmatpush1.bf16.msra.mxu0 0
  %2383 = vmatprep.subr.bf16.mxu0 0
  %2384 = vmatpush1.bf16.msra.mxu0 0
  %2385 = vmatprep.subr.bf16.mxu0 0
  %2386 = vmatpush1.bf16.msra.mxu0 0
  %2387 = vmatprep.subr.bf16.mxu0 0
  %2388 = vmatpush1.bf16.msra.mxu0 0
  %2389 = vmatprep.subr.bf16.mxu0 0
  %2390 = vmatpush1.bf16.msra.mxu0 0
  %2391 = vmatprep.subr.bf16.mxu0 0
  %2392 = vmatpush1.bf16.msra.mxu0 0
  %2393 = vmatprep.subr.bf16.mxu0 0
  %2394 = vmatpush1.bf16.msra.mxu0 0
  %2395 = vmatprep.subr.bf16.mxu0 0
  %2396 = vmatpush1.bf16.msra.mxu0 0
  %2397 = vmatprep.subr.bf16.mxu0 0
  %2398 = vmatpush1.bf16.msra.mxu0 0
  %2399 = vmatprep.subr.bf16.mxu0 0
  %2400 = vmatpush1.bf16.msra.mxu0 0
  %2401 = vmatprep.subr.bf16.mxu0 0
  %2402 = vmatpush1.bf16.msra.mxu0 0
  %2403 = vmatprep.subr.bf16.mxu0 0
  %2404 = vmatpush1.bf16.msra.mxu0 0
  %2405 = vmatprep.mubr.bf16.mxu0 0
  %2406 = vmatmul.mubr.bf16.gmra.mrb[0].mxu0 %v2338
  %v2407 = vpop.f32.mrb[0].mxu0
  %v2408 = vadd.f32 0.0, %v2407
  %v2409 = vpop.f32.mrb[0].mxu0
  %v2410 = vpop.f32.mrb[0].mxu0
  %v2411 = vadd.f32 0.0, %v2410
  %v2412 = vpop.f32.mrb[0].mxu0
  %2413 = vmatprep.mubr.bf16.mxu0 0
  %2414 = vmatmul.mubr.bf16.gmra.mrb[0].mxu0 %v2341
  %v2415 = vpop.f32.mrb[0].mxu0
  %v2416 = vadd.f32 0.0, %v2415
  %v2417 = vpop.f32.mrb[0].mxu0
  %v2418 = vpop.f32.mrb[0].mxu0
  %v2419 = vadd.f32 0.0, %v2418
  %v2420 = vpop.f32.mrb[0].mxu0
  %2421 = vmatprep.mubr.bf16.mxu0 0
  %2422 = vmatmul.mubr.bf16.gmra.mrb[0].mxu0 %v2344
  %v2423 = vpop.f32.mrb[0].mxu0
  %v2424 = vadd.f32 0.0, %v2423
  %v2425 = vpop.f32.mrb[0].mxu0
  %v2426 = vpop.f32.mrb[0].mxu0
  %v2427 = vadd.f32 0.0, %v2426
  %v2428 = vpop.f32.mrb[0].mxu0
  %2429 = vmatprep.mubr.bf16.mxu0 0
  %2430 = vmatmul.mubr.bf16.gmra.mrb[0].mxu0 %v2347
  %v2431 = vpop.f32.mrb[0].mxu0
  %v2432 = vadd.f32 0.0, %v2431
  %v2433 = vpop.f32.mrb[0].mxu0
  %v2434 = vpop.f32.mrb[0].mxu0
  %v2435 = vadd.f32 0.0, %v2434
  %v2436 = vpop.f32.mrb[0].mxu0
  %2437 = vmatprep.mubr.bf16.mxu0 0
  %2438 = vmatmul.mubr.bf16.gmra.mrb[0].mxu0 %v2350
  %v2439 = vpop.f32.mrb[0].mxu0
  %v2440 = vadd.f32 0.0, %v2439
  %v2441 = vpop.f32.mrb[0].mxu0
  %v2442 = vpop.f32.mrb[0].mxu0
  %v2443 = vadd.f32 0.0, %v2442
  %v2444 = vpop.f32.mrb[0].mxu0
  %2445 = vmatprep.mubr.bf16.mxu0 0
  %2446 = vmatmul.mubr.bf16.gmra.mrb[0].mxu0 %v2353
  %v2447 = vpop.f32.mrb[0].mxu0
  %v2448 = vadd.f32 0.0, %v2447
  %v2449 = vpop.f32.mrb[0].mxu0
  %v2450 = vpop.f32.mrb[0].mxu0
  %v2451 = vadd.f32 0.0, %v2450
  %v2452 = vpop.f32.mrb[0].mxu0
  %2453 = vmatprep.mubr.bf16.mxu0 0
  %2454 = vmatmul.mubr.bf16.gmra.mrb[0].mxu0 %v2356
  %v2455 = vpop.f32.mrb[0].mxu0
  %v2456 = vadd.f32 0.0, %v2455
  %v2457 = vpop.f32.mrb[0].mxu0
  %v2458 = vpop.f32.mrb[0].mxu0
  %v2459 = vadd.f32 0.0, %v2458
  %v2460 = vpop.f32.mrb[0].mxu0
  %2461 = vmatprep.mubr.bf16.mxu0 0
  %2462 = vmatmul.mubr.bf16.gmra.mrb[0].mxu0 %v2359
  %v2463 = vpop.f32.mrb[0].mxu0
  %v2464 = vadd.f32 0.0, %v2463
  %v2465 = vpop.f32.mrb[0].mxu0
  %v2466 = vpop.f32.mrb[0].mxu0
  %v2467 = vadd.f32 0.0, %v2466
  %v2468 = vpop.f32.mrb[0].mxu0
  %2469 = vmatprep.mubr.bf16.mxu0 0
  %2470 = vmatmul.mubr.bf16.gmra.mrb[0].mxu0 %v2362
  %v2471 = vpop.f32.mrb[0].mxu0
  %v2472 = vadd.f32 0.0, %v2471
  %v2473 = vpop.f32.mrb[0].mxu0
  %v2474 = vpop.f32.mrb[0].mxu0
  %v2475 = vadd.f32 0.0, %v2474
  %v2476 = vpop.f32.mrb[0].mxu0
  %2477 = vmatprep.mubr.bf16.mxu0 0
  %2478 = vmatmul.mubr.bf16.gmra.mrb[0].mxu0 %v2365
  %v2479 = vpop.f32.mrb[0].mxu0
  %v2480 = vadd.f32 0.0, %v2479
  %v2481 = vpop.f32.mrb[0].mxu0
  %v2482 = vpop.f32.mrb[0].mxu0
  %v2483 = vadd.f32 0.0, %v2482
  %v2484 = vpop.f32.mrb[0].mxu0
  %2485 = vmatprep.mubr.bf16.mxu0 0
  %2486 = vmatmul.mubr.bf16.gmra.mrb[0].mxu0 %v2368
  %v2487 = vpop.f32.mrb[0].mxu0
  %v2488 = vadd.f32 0.0, %v2487
  %v2489 = vpop.f32.mrb[0].mxu0
  %v2490 = vpop.f32.mrb[0].mxu0
  %v2491 = vadd.f32 0.0, %v2490
  %v2492 = vpop.f32.mrb[0].mxu0
  %2493 = vmatprep.mubr.bf16.mxu0 0
  %2494 = vmatmul.mubr.bf16.gmra.mrb[0].mxu0 %v2371
  %v2495 = vpop.f32.mrb[0].mxu0
  %v2496 = vadd.f32 0.0, %v2495
  %v2497 = vpop.f32.mrb[0].mxu0
  %v2498 = vpop.f32.mrb[0].mxu0
  %v2499 = vpop.f32.mrb[0].mxu0
  %2500 = vdwg.mxu0
  %v2501 = vadd.f32 %v2247, %v2408
  %v2502 = vadd.f32 %v2248, %v2411
  %v2503 = vadd.f32 %v2249, %v2416
  %v2504 = vadd.f32 %v2250, %v2419
  %v2505 = vadd.f32 %v2251, %v2424
  %v2506 = vadd.f32 %v2252, %v2427
  %v2507 = vadd.f32 %v2253, %v2432
  %v2508 = vadd.f32 %v2254, %v2435
  %v2509 = vadd.f32 %v2255, %v2440
  %v2510 = vadd.f32 %v2256, %v2443
  %v2511 = vadd.f32 %v2257, %v2448
  %v2512 = vadd.f32 %v2258, %v2451
  %v2513 = vadd.f32 %v2259, %v2456
  %v2514 = vadd.f32 %v2260, %v2459
  %v2515 = vadd.f32 %v2261, %v2464
  %v2516 = vadd.f32 %v2262, %v2467
  %v2517 = vadd.f32 %v2263, %v2472
  %v2518 = vadd.f32 %v2264, %v2475
  %v2519 = vadd.f32 %v2265, %v2480
  %v2520 = vadd.f32 %v2266, %v2483
  %v2521 = vadd.f32 %v2267, %v2488
  %v2522 = vadd.f32 %v2268, %v2491
  %v2523 = vadd.f32 %v2269, %v2496
  %s2524 = scalar_lea.vmem %s6, 128
  %v2525 = vld [vmem:[%s2524] sm:$0xf]
  %v2526 = vld [vmem:[%s2524 + $0x4] sm:$0xf]
  %v2527 = vld [vmem:[%s2524 + $0x8] sm:$0xf]
  %v2528 = vld [vmem:[%s2524 + $0xc] sm:$0xf]
  %vm2529 = vcmask 1045504
  %v2530 = vrot.slane %v648, 2
  %v2531 = vrot.slane %v651, 2
  %v2532 = vsel %vm2529, %v2530, %v2531
  %v2533 = vrot.slane %v654, 2
  %v2534 = vsel %vm2529, %v2531, %v2533
  %v2535 = vrot.slane %v657, 2
  %v2536 = vsel %vm2529, %v2533, %v2535
  %v2537 = vrot.slane %v660, 2
  %v2538 = vsel %vm2529, %v2535, %v2537
  %v2539 = vrot.slane %v663, 2
  %v2540 = vsel %vm2529, %v2537, %v2539
  %v2541 = vrot.slane %v666, 2
  %v2542 = vsel %vm2529, %v2539, %v2541
  %v2543 = vrot.slane %v669, 2
  %v2544 = vsel %vm2529, %v2541, %v2543
  %v2545 = vrot.slane %v672, 2
  %v2546 = vsel %vm2529, %v2543, %v2545
  %v2547 = vrot.slane %v675, 2
  %v2548 = vsel %vm2529, %v2545, %v2547
  %v2549 = vrot.slane %v678, 2
  %v2550 = vsel %vm2529, %v2547, %v2549
  %v2551 = vrot.slane %v681, 2
  %v2552 = vsel %vm2529, %v2549, %v2551
  %v2557 = vunpack.c.l.b16 %v2525
  %v2558 = vunpack.c.l.b16 %v2526
  %v2559 = vunpack.c.l.b16 %v2527
  %v2560 = vunpack.c.l.b16 %v2528
  %v2561 = vpack.c.b16 %v2558, %v2557
  %v2562 = vpack.c.b16 %v2560, %v2559
  %v2566 = vsel %vm788, %v2532, 0
  %v2569 = vsel %vm788, %v2534, 0
  %v2572 = vsel %vm788, %v2536, 0
  %v2575 = vsel %vm788, %v2538, 0
  %v2578 = vsel %vm788, %v2540, 0
  %v2581 = vsel %vm788, %v2542, 0
  %v2584 = vsel %vm788, %v2544, 0
  %v2587 = vsel %vm788, %v2546, 0
  %v2590 = vsel %vm788, %v2548, 0
  %v2593 = vsel %vm788, %v2550, 0
  %v2596 = vsel %vm788, %v2552, 0
  %v2599 = vsel %vm788, %v2551, 0
  %2601 = vmatprep.subr.bf16.mxu0 0
  %2602 = vmatpush1.bf16.msra.mxu0 %v2561
  %2603 = vmatprep.subr.bf16.mxu0 0
  %2604 = vmatpush1.bf16.msra.mxu0 %v2562
  %2605 = vmatprep.subr.bf16.mxu0 0
  %2606 = vmatpush1.bf16.msra.mxu0 0
  %2607 = vmatprep.subr.bf16.mxu0 0
  %2608 = vmatpush1.bf16.msra.mxu0 0
  %2609 = vmatprep.subr.bf16.mxu0 0
  %2610 = vmatpush1.bf16.msra.mxu0 0
  %2611 = vmatprep.subr.bf16.mxu0 0
  %2612 = vmatpush1.bf16.msra.mxu0 0
  %2613 = vmatprep.subr.bf16.mxu0 0
  %2614 = vmatpush1.bf16.msra.mxu0 0
  %2615 = vmatprep.subr.bf16.mxu0 0
  %2616 = vmatpush1.bf16.msra.mxu0 0
  %2617 = vmatprep.subr.bf16.mxu0 0
  %2618 = vmatpush1.bf16.msra.mxu0 0
  %2619 = vmatprep.subr.bf16.mxu0 0
  %2620 = vmatpush1.bf16.msra.mxu0 0
  %2621 = vmatprep.subr.bf16.mxu0 0
  %2622 = vmatpush1.bf16.msra.mxu0 0
  %2623 = vmatprep.subr.bf16.mxu0 0
  %2624 = vmatpush1.bf16.msra.mxu0 0
  %2625 = vmatprep.subr.bf16.mxu0 0
  %2626 = vmatpush1.bf16.msra.mxu0 0
  %2627 = vmatprep.subr.bf16.mxu0 0
  %2628 = vmatpush1.bf16.msra.mxu0 0
  %2629 = vmatprep.subr.bf16.mxu0 0
  %2630 = vmatpush1.bf16.msra.mxu0 0
  %2631 = vmatprep.subr.bf16.mxu0 0
  %2632 = vmatpush1.bf16.msra.mxu0 0
  %2633 = vmatprep.mubr.bf16.mxu0 0
  %2634 = vmatmul.mubr.bf16.gmra.mrb[0].mxu0 %v2566
  %v2635 = vpop.f32.mrb[0].mxu0
  %v2636 = vadd.f32 0.0, %v2635
  %v2637 = vpop.f32.mrb[0].mxu0
  %v2638 = vpop.f32.mrb[0].mxu0
  %v2639 = vadd.f32 0.0, %v2638
  %v2640 = vpop.f32.mrb[0].mxu0
  %2641 = vmatprep.mubr.bf16.mxu0 0
  %2642 = vmatmul.mubr.bf16.gmra.mrb[0].mxu0 %v2569
  %v2643 = vpop.f32.mrb[0].mxu0
  %v2644 = vadd.f32 0.0, %v2643
  %v2645 = vpop.f32.mrb[0].mxu0
  %v2646 = vpop.f32.mrb[0].mxu0
  %v2647 = vadd.f32 0.0, %v2646
  %v2648 = vpop.f32.mrb[0].mxu0
  %2649 = vmatprep.mubr.bf16.mxu0 0
  %2650 = vmatmul.mubr.bf16.gmra.mrb[0].mxu0 %v2572
  %v2651 = vpop.f32.mrb[0].mxu0
  %v2652 = vadd.f32 0.0, %v2651
  %v2653 = vpop.f32.mrb[0].mxu0
  %v2654 = vpop.f32.mrb[0].mxu0
  %v2655 = vadd.f32 0.0, %v2654
  %v2656 = vpop.f32.mrb[0].mxu0
  %2657 = vmatprep.mubr.bf16.mxu0 0
  %2658 = vmatmul.mubr.bf16.gmra.mrb[0].mxu0 %v2575
  %v2659 = vpop.f32.mrb[0].mxu0
  %v2660 = vadd.f32 0.0, %v2659
  %v2661 = vpop.f32.mrb[0].mxu0
  %v2662 = vpop.f32.mrb[0].mxu0
  %v2663 = vadd.f32 0.0, %v2662
  %v2664 = vpop.f32.mrb[0].mxu0
  %2665 = vmatprep.mubr.bf16.mxu0 0
  %2666 = vmatmul.mubr.bf16.gmra.mrb[0].mxu0 %v2578
  %v2667 = vpop.f32.mrb[0].mxu0
  %v2668 = vadd.f32 0.0, %v2667
  %v2669 = vpop.f32.mrb[0].mxu0
  %v2670 = vpop.f32.mrb[0].mxu0
  %v2671 = vadd.f32 0.0, %v2670
  %v2672 = vpop.f32.mrb[0].mxu0
  %2673 = vmatprep.mubr.bf16.mxu0 0
  %2674 = vmatmul.mubr.bf16.gmra.mrb[0].mxu0 %v2581
  %v2675 = vpop.f32.mrb[0].mxu0
  %v2676 = vadd.f32 0.0, %v2675
  %v2677 = vpop.f32.mrb[0].mxu0
  %v2678 = vpop.f32.mrb[0].mxu0
  %v2679 = vadd.f32 0.0, %v2678
  %v2680 = vpop.f32.mrb[0].mxu0
  %2681 = vmatprep.mubr.bf16.mxu0 0
  %2682 = vmatmul.mubr.bf16.gmra.mrb[0].mxu0 %v2584
  %v2683 = vpop.f32.mrb[0].mxu0
  %v2684 = vadd.f32 0.0, %v2683
  %v2685 = vpop.f32.mrb[0].mxu0
  %v2686 = vpop.f32.mrb[0].mxu0
  %v2687 = vadd.f32 0.0, %v2686
  %v2688 = vpop.f32.mrb[0].mxu0
  %2689 = vmatprep.mubr.bf16.mxu0 0
  %2690 = vmatmul.mubr.bf16.gmra.mrb[0].mxu0 %v2587
  %v2691 = vpop.f32.mrb[0].mxu0
  %v2692 = vadd.f32 0.0, %v2691
  %v2693 = vpop.f32.mrb[0].mxu0
  %v2694 = vpop.f32.mrb[0].mxu0
  %v2695 = vadd.f32 0.0, %v2694
  %v2696 = vpop.f32.mrb[0].mxu0
  %2697 = vmatprep.mubr.bf16.mxu0 0
  %2698 = vmatmul.mubr.bf16.gmra.mrb[0].mxu0 %v2590
  %v2699 = vpop.f32.mrb[0].mxu0
  %v2700 = vadd.f32 0.0, %v2699
  %v2701 = vpop.f32.mrb[0].mxu0
  %v2702 = vpop.f32.mrb[0].mxu0
  %v2703 = vadd.f32 0.0, %v2702
  %v2704 = vpop.f32.mrb[0].mxu0
  %2705 = vmatprep.mubr.bf16.mxu0 0
  %2706 = vmatmul.mubr.bf16.gmra.mrb[0].mxu0 %v2593
  %v2707 = vpop.f32.mrb[0].mxu0
  %v2708 = vadd.f32 0.0, %v2707
  %v2709 = vpop.f32.mrb[0].mxu0
  %v2710 = vpop.f32.mrb[0].mxu0
  %v2711 = vadd.f32 0.0, %v2710
  %v2712 = vpop.f32.mrb[0].mxu0
  %2713 = vmatprep.mubr.bf16.mxu0 0
  %2714 = vmatmul.mubr.bf16.gmra.mrb[0].mxu0 %v2596
  %v2715 = vpop.f32.mrb[0].mxu0
  %v2716 = vadd.f32 0.0, %v2715
  %v2717 = vpop.f32.mrb[0].mxu0
  %v2718 = vpop.f32.mrb[0].mxu0
  %v2719 = vadd.f32 0.0, %v2718
  %v2720 = vpop.f32.mrb[0].mxu0
  %2721 = vmatprep.mubr.bf16.mxu0 0
  %2722 = vmatmul.mubr.bf16.gmra.mrb[0].mxu0 %v2599
  %v2723 = vpop.f32.mrb[0].mxu0
  %v2724 = vadd.f32 0.0, %v2723
  %v2725 = vpop.f32.mrb[0].mxu0
  %v2726 = vpop.f32.mrb[0].mxu0
  %v2727 = vpop.f32.mrb[0].mxu0
  %2728 = vdwg.mxu0
  %v2729 = vadd.f32 %v2501, %v2636
  %v2730 = vadd.f32 %v2502, %v2639
  %v2731 = vadd.f32 %v2503, %v2644
  %v2732 = vadd.f32 %v2504, %v2647
  %v2733 = vadd.f32 %v2505, %v2652
  %v2734 = vadd.f32 %v2506, %v2655
  %v2735 = vadd.f32 %v2507, %v2660
  %v2736 = vadd.f32 %v2508, %v2663
  %v2737 = vadd.f32 %v2509, %v2668
  %v2738 = vadd.f32 %v2510, %v2671
  %v2739 = vadd.f32 %v2511, %v2676
  %v2740 = vadd.f32 %v2512, %v2679
  %v2741 = vadd.f32 %v2513, %v2684
  %v2742 = vadd.f32 %v2514, %v2687
  %v2743 = vadd.f32 %v2515, %v2692
  %v2744 = vadd.f32 %v2516, %v2695
  %v2745 = vadd.f32 %v2517, %v2700
  %v2746 = vadd.f32 %v2518, %v2703
  %v2747 = vadd.f32 %v2519, %v2708
  %v2748 = vadd.f32 %v2520, %v2711
  %v2749 = vadd.f32 %v2521, %v2716
  %v2750 = vadd.f32 %v2522, %v2719
  %v2751 = vadd.f32 %v2523, %v2724
  %v2753 = vlaneseq
  %v2754 = vshrl.u32 %v2753, 7
  %v2755 = vsub.s32 0, %v2754
  %v2756 = vrot.slane %v682, %v2755
  %v2758 = vadd.f32 %v2729, %v2756
  %v2759 = vadd.f32 %v2730, %v2756
  %v2760 = vadd.f32 %v2731, %v2756
  %v2761 = vadd.f32 %v2732, %v2756
  %v2762 = vadd.f32 %v2733, %v2756
  %v2763 = vadd.f32 %v2734, %v2756
  %v2764 = vadd.f32 %v2735, %v2756
  %v2765 = vadd.f32 %v2736, %v2756
  %v2766 = vadd.f32 %v2737, %v2756
  %v2767 = vadd.f32 %v2738, %v2756
  %v2768 = vadd.f32 %v2739, %v2756
  %v2769 = vadd.f32 %v2740, %v2756
  %v2770 = vadd.f32 %v2741, %v2756
  %v2771 = vadd.f32 %v2742, %v2756
  %v2772 = vadd.f32 %v2743, %v2756
  %v2773 = vadd.f32 %v2744, %v2756
  %v2774 = vadd.f32 %v2745, %v2756
  %v2775 = vadd.f32 %v2746, %v2756
  %v2776 = vadd.f32 %v2747, %v2756
  %v2777 = vadd.f32 %v2748, %v2756
  %v2778 = vadd.f32 %v2749, %v2756
  %v2779 = vadd.f32 %v2750, %v2756
  %v2780 = vadd.f32 %v2751, %v2756
  %v2781 = vld [vmem:[%s8] sm:$0x1]
  %v2782 = vld [vmem:[%s9] sm:$0x1]
  %vm2783 = vcmask 1045504
  %v2784 = vrot.slane %v364, 2
  %v2785 = vrot.slane %v369, 2
  %v2786 = vsel %vm2783, %v2784, %v2785
  %v2787 = vrot.slane %v374, 2
  %v2788 = vsel %vm2783, %v2785, %v2787
  %v2789 = vrot.slane %v379, 2
  %v2790 = vsel %vm2783, %v2787, %v2789
  %v2791 = vrot.slane %v384, 2
  %v2792 = vsel %vm2783, %v2789, %v2791
  %v2793 = vrot.slane %v389, 2
  %v2794 = vsel %vm2783, %v2791, %v2793
  %v2795 = vrot.slane %v394, 2
  %v2796 = vsel %vm2783, %v2793, %v2795
  %v2797 = vrot.slane %v399, 2
  %v2798 = vsel %vm2783, %v2795, %v2797
  %v2799 = vrot.slane %v404, 2
  %v2800 = vsel %vm2783, %v2797, %v2799
  %v2801 = vrot.slane %v409, 2
  %v2802 = vsel %vm2783, %v2799, %v2801
  %v2803 = vrot.slane %v414, 2
  %v2804 = vsel %vm2783, %v2801, %v2803
  %v2805 = vrot.slane %v419, 2
  %v2806 = vsel %vm2783, %v2803, %v2805
  %v2807 = vrot.slane %v424, 2
  %v2808 = vsel %vm2783, %v2805, %v2807
  %v2809 = vrot.slane %v429, 2
  %v2810 = vsel %vm2783, %v2807, %v2809
  %v2811 = vrot.slane %v434, 2
  %v2812 = vsel %vm2783, %v2809, %v2811
  %v2813 = vrot.slane %v439, 2
  %v2814 = vsel %vm2783, %v2811, %v2813
  %v2815 = vrot.slane %v444, 2
  %v2816 = vsel %vm2783, %v2813, %v2815
  %v2817 = vrot.slane %v449, 2
  %v2818 = vsel %vm2783, %v2815, %v2817
  %v2819 = vrot.slane %v454, 2
  %v2820 = vsel %vm2783, %v2817, %v2819
  %v2821 = vrot.slane %v459, 2
  %v2822 = vsel %vm2783, %v2819, %v2821
  %v2823 = vrot.slane %v464, 2
  %v2824 = vsel %vm2783, %v2821, %v2823
  %v2825 = vrot.slane %v469, 2
  %v2826 = vsel %vm2783, %v2823, %v2825
  %v2827 = vrot.slane %v474, 2
  %v2828 = vsel %vm2783, %v2825, %v2827
  %v2852 = vmul.f32 %v2758, %v2786
  %v2853 = vmul.f32 %v2759, %v2788
  %v2854 = vmul.f32 %v2760, %v2790
  %v2855 = vmul.f32 %v2761, %v2792
  %v2856 = vmul.f32 %v2762, %v2794
  %v2857 = vmul.f32 %v2763, %v2796
  %v2858 = vmul.f32 %v2764, %v2798
  %v2859 = vmul.f32 %v2765, %v2800
  %v2860 = vmul.f32 %v2766, %v2802
  %v2861 = vmul.f32 %v2767, %v2804
  %v2862 = vmul.f32 %v2768, %v2806
  %v2863 = vmul.f32 %v2769, %v2808
  %v2864 = vmul.f32 %v2770, %v2810
  %v2865 = vmul.f32 %v2771, %v2812
  %v2866 = vmul.f32 %v2772, %v2814
  %v2867 = vmul.f32 %v2773, %v2816
  %v2868 = vmul.f32 %v2774, %v2818
  %v2869 = vmul.f32 %v2775, %v2820
  %v2870 = vmul.f32 %v2776, %v2822
  %v2871 = vmul.f32 %v2777, %v2824
  %v2872 = vmul.f32 %v2778, %v2826
  %v2873 = vmul.f32 %v2779, %v2828
  %v2874 = vmul.f32 %v2780, %v2827
  %v2875 = vsel %vm642, %v2852, 0.0
  %v2876 = vsel %vm642, %v2853, 0.0
  %v2877 = vadd.f32 %v2875, %v2876
  %v2878 = vsel %vm642, %v2854, 0.0
  %v2879 = vadd.f32 %v2877, %v2878
  %v2880 = vsel %vm642, %v2855, 0.0
  %v2881 = vadd.f32 %v2879, %v2880
  %v2882 = vsel %vm642, %v2856, 0.0
  %v2883 = vadd.f32 %v2881, %v2882
  %v2884 = vsel %vm642, %v2857, 0.0
  %v2885 = vadd.f32 %v2883, %v2884
  %v2886 = vsel %vm642, %v2858, 0.0
  %v2887 = vadd.f32 %v2885, %v2886
  %v2888 = vsel %vm642, %v2859, 0.0
  %v2889 = vadd.f32 %v2887, %v2888
  %v2890 = vsel %vm642, %v2860, 0.0
  %v2891 = vadd.f32 %v2889, %v2890
  %v2892 = vsel %vm642, %v2861, 0.0
  %v2893 = vadd.f32 %v2891, %v2892
  %v2894 = vsel %vm642, %v2862, 0.0
  %v2895 = vadd.f32 %v2893, %v2894
  %v2896 = vsel %vm642, %v2863, 0.0
  %v2897 = vadd.f32 %v2895, %v2896
  %v2898 = vsel %vm642, %v2864, 0.0
  %v2899 = vadd.f32 %v2897, %v2898
  %v2900 = vsel %vm642, %v2865, 0.0
  %v2901 = vadd.f32 %v2899, %v2900
  %v2902 = vsel %vm642, %v2866, 0.0
  %v2903 = vadd.f32 %v2901, %v2902
  %v2904 = vsel %vm642, %v2867, 0.0
  %v2905 = vadd.f32 %v2903, %v2904
  %v2906 = vsel %vm642, %v2868, 0.0
  %v2907 = vadd.f32 %v2905, %v2906
  %v2908 = vsel %vm642, %v2869, 0.0
  %v2909 = vadd.f32 %v2907, %v2908
  %v2910 = vsel %vm642, %v2870, 0.0
  %v2911 = vadd.f32 %v2909, %v2910
  %v2912 = vsel %vm642, %v2871, 0.0
  %v2913 = vadd.f32 %v2911, %v2912
  %v2914 = vsel %vm642, %v2872, 0.0
  %v2915 = vadd.f32 %v2913, %v2914
  %v2916 = vsel %vm642, %v2873, 0.0
  %v2917 = vadd.f32 %v2915, %v2916
  %vm2918 = vcmask 128000
  %v2919 = vsel %vm2918, %v2874, 0.0
  %v2920 = vadd.f32 %v2917, %v2919
  %v2921 = vrot.slane %v2920, 4
  %v2922 = vadd.f32 %v2920, %v2921
  %v2923 = vrot.slane %v2922, 2
  %v2924 = vadd.f32 %v2922, %v2923
  %v2925 = vrot.slane %v2924, 1
  %v2926 = vadd.f32 %v2924, %v2925
  %v2928 = vsel %vm642, %v2926, 0
  %2930 = vmatprep.subr.mxu0 0.0
  %2931 = vmatpush1.msra.mxu0 %v74
  %2932 = vmatprep.subr.mxu0 0.0
  %2933 = vmatpush1.msra.mxu0 %v75
  %2934 = vmatprep.subr.mxu0 0.0
  %2935 = vmatpush1.msra.mxu0 0.0
  %2936 = vmatprep.subr.mxu0 0.0
  %2937 = vmatpush1.msra.mxu0 0.0
  %2938 = vmatprep.subr.mxu0 0.0
  %2939 = vmatpush1.msra.mxu0 0.0
  %2940 = vmatprep.subr.mxu0 0.0
  %2941 = vmatpush1.msra.mxu0 0.0
  %2942 = vmatprep.subr.mxu0 0.0
  %2943 = vmatpush1.msra.mxu0 0.0
  %2944 = vmatprep.subr.mxu0 0.0
  %2945 = vmatpush1.msra.mxu0 0.0
  %2946 = vmatprep.subr.mxu0 0.0
  %2947 = vmatpush1.msra.mxu0 0.0
  %2948 = vmatprep.subr.mxu0 0.0
  %2949 = vmatpush1.msra.mxu0 0.0
  %2950 = vmatprep.subr.mxu0 0.0
  %2951 = vmatpush1.msra.mxu0 0.0
  %2952 = vmatprep.subr.mxu0 0.0
  %2953 = vmatpush1.msra.mxu0 0.0
  %2954 = vmatprep.subr.mxu0 0.0
  %2955 = vmatpush1.msra.mxu0 0.0
  %2956 = vmatprep.subr.mxu0 0.0
  %2957 = vmatpush1.msra.mxu0 0.0
  %2958 = vmatprep.subr.mxu0 0.0
  %2959 = vmatpush1.msra.mxu0 0.0
  %2960 = vmatprep.subr.mxu0 0.0
  %2961 = vmatpush1.msra.mxu0 0.0
  %2962 = vmatprep.subr.mxu0 0.0
  %2963 = vmatpush1.msra.mxu0 0.0
  %2964 = vmatprep.subr.mxu0 0.0
  %2965 = vmatpush1.msra.mxu0 0.0
  %2966 = vmatprep.subr.mxu0 0.0
  %2967 = vmatpush1.msra.mxu0 0.0
  %2968 = vmatprep.subr.mxu0 0.0
  %2969 = vmatpush1.msra.mxu0 0.0
  %2970 = vmatprep.subr.mxu0 0.0
  %2971 = vmatpush1.msra.mxu0 0.0
  %2972 = vmatprep.subr.mxu0 0.0
  %2973 = vmatpush1.msra.mxu0 0.0
  %2974 = vmatprep.subr.mxu0 0.0
  %2975 = vmatpush1.msra.mxu0 0.0
  %2976 = vmatprep.subr.mxu0 0.0
  %2977 = vmatpush1.msra.mxu0 0.0
  %2978 = vmatprep.subr.mxu0 0.0
  %2979 = vmatpush1.msra.mxu0 0.0
  %2980 = vmatprep.subr.mxu0 0.0
  %2981 = vmatpush1.msra.mxu0 0.0
  %2982 = vmatprep.subr.mxu0 0.0
  %2983 = vmatpush1.msra.mxu0 0.0
  %2984 = vmatprep.subr.mxu0 0.0
  %2985 = vmatpush1.msra.mxu0 0.0
  %2986 = vmatprep.subr.mxu0 0.0
  %2987 = vmatpush1.msra.mxu0 0.0
  %2988 = vmatprep.subr.mxu0 0.0
  %2989 = vmatpush1.msra.mxu0 0.0
  %2990 = vmatprep.subr.mxu0 0.0
  %2991 = vmatpush1.msra.mxu0 0.0
  %2992 = vmatprep.subr.mxu0 0.0
  %2993 = vmatpush1.msra.mxu0 0.0
  %2994 = vmatprep.mubr.f32.mxu0 0.0
  %2995 = vmatmul.mubr.f32.gmra.mrb[0].mxu0 %v2928
  %v2996 = vpop.f32.mrb[0].mxu0
  %v2997 = vadd.f32 0.0, %v2996
  %v2998 = vpop.f32.mrb[0].mxu0
  %2999 = vdwg.mxu0
  %v3000 = vmul.f32 %v2997, 0.001953125
  %v3001 = vlaneseq
  %v3002 = vshrl.u32 %v3001, 7
  %v3003 = vsub.s32 0, %v3002
  %v3004 = vrot.slane %v3000, %v3003
  %v3005 = vsub.f32 %v2852, %v3004
  %v3006 = vsub.f32 %v2853, %v3004
  %v3007 = vsub.f32 %v2854, %v3004
  %v3008 = vsub.f32 %v2855, %v3004
  %v3009 = vsub.f32 %v2856, %v3004
  %v3010 = vsub.f32 %v2857, %v3004
  %v3011 = vsub.f32 %v2858, %v3004
  %v3012 = vsub.f32 %v2859, %v3004
  %v3013 = vsub.f32 %v2860, %v3004
  %v3014 = vsub.f32 %v2861, %v3004
  %v3015 = vsub.f32 %v2862, %v3004
  %v3016 = vsub.f32 %v2863, %v3004
  %v3017 = vsub.f32 %v2864, %v3004
  %v3018 = vsub.f32 %v2865, %v3004
  %v3019 = vsub.f32 %v2866, %v3004
  %v3020 = vsub.f32 %v2867, %v3004
  %v3021 = vsub.f32 %v2868, %v3004
  %v3022 = vsub.f32 %v2869, %v3004
  %v3023 = vsub.f32 %v2870, %v3004
  %v3024 = vsub.f32 %v2871, %v3004
  %v3025 = vsub.f32 %v2872, %v3004
  %v3026 = vsub.f32 %v2873, %v3004
  %v3027 = vsub.f32 %v2874, %v3004
  %v3028 = vmul.f32 %v3005, %v2786
  %v3029 = vmul.f32 %v3006, %v2788
  %v3030 = vmul.f32 %v3007, %v2790
  %v3031 = vmul.f32 %v3008, %v2792
  %v3032 = vmul.f32 %v3009, %v2794
  %v3033 = vmul.f32 %v3010, %v2796
  %v3034 = vmul.f32 %v3011, %v2798
  %v3035 = vmul.f32 %v3012, %v2800
  %v3036 = vmul.f32 %v3013, %v2802
  %v3037 = vmul.f32 %v3014, %v2804
  %v3038 = vmul.f32 %v3015, %v2806
  %v3039 = vmul.f32 %v3016, %v2808
  %v3040 = vmul.f32 %v3017, %v2810
  %v3041 = vmul.f32 %v3018, %v2812
  %v3042 = vmul.f32 %v3019, %v2814
  %v3043 = vmul.f32 %v3020, %v2816
  %v3044 = vmul.f32 %v3021, %v2818
  %v3045 = vmul.f32 %v3022, %v2820
  %v3046 = vmul.f32 %v3023, %v2822
  %v3047 = vmul.f32 %v3024, %v2824
  %v3048 = vmul.f32 %v3025, %v2826
  %v3049 = vmul.f32 %v3026, %v2828
  %v3050 = vmul.f32 %v3027, %v2827
  %v3051 = vmul.f32 %v3028, %v3028
  %v3052 = vmul.f32 %v3029, %v3029
  %v3053 = vmul.f32 %v3030, %v3030
  %v3054 = vmul.f32 %v3031, %v3031
  %v3055 = vmul.f32 %v3032, %v3032
  %v3056 = vmul.f32 %v3033, %v3033
  %v3057 = vmul.f32 %v3034, %v3034
  %v3058 = vmul.f32 %v3035, %v3035
  %v3059 = vmul.f32 %v3036, %v3036
  %v3060 = vmul.f32 %v3037, %v3037
  %v3061 = vmul.f32 %v3038, %v3038
  %v3062 = vmul.f32 %v3039, %v3039
  %v3063 = vmul.f32 %v3040, %v3040
  %v3064 = vmul.f32 %v3041, %v3041
  %v3065 = vmul.f32 %v3042, %v3042
  %v3066 = vmul.f32 %v3043, %v3043
  %v3067 = vmul.f32 %v3044, %v3044
  %v3068 = vmul.f32 %v3045, %v3045
  %v3069 = vmul.f32 %v3046, %v3046
  %v3070 = vmul.f32 %v3047, %v3047
  %v3071 = vmul.f32 %v3048, %v3048
  %v3072 = vmul.f32 %v3049, %v3049
  %v3073 = vmul.f32 %v3050, %v3050
  %v3074 = vsel %vm642, %v3051, 0.0
  %v3075 = vsel %vm642, %v3052, 0.0
  %v3076 = vadd.f32 %v3074, %v3075
  %v3077 = vsel %vm642, %v3053, 0.0
  %v3078 = vadd.f32 %v3076, %v3077
  %v3079 = vsel %vm642, %v3054, 0.0
  %v3080 = vadd.f32 %v3078, %v3079
  %v3081 = vsel %vm642, %v3055, 0.0
  %v3082 = vadd.f32 %v3080, %v3081
  %v3083 = vsel %vm642, %v3056, 0.0
  %v3084 = vadd.f32 %v3082, %v3083
  %v3085 = vsel %vm642, %v3057, 0.0
  %v3086 = vadd.f32 %v3084, %v3085
  %v3087 = vsel %vm642, %v3058, 0.0
  %v3088 = vadd.f32 %v3086, %v3087
  %v3089 = vsel %vm642, %v3059, 0.0
  %v3090 = vadd.f32 %v3088, %v3089
  %v3091 = vsel %vm642, %v3060, 0.0
  %v3092 = vadd.f32 %v3090, %v3091
  %v3093 = vsel %vm642, %v3061, 0.0
  %v3094 = vadd.f32 %v3092, %v3093
  %v3095 = vsel %vm642, %v3062, 0.0
  %v3096 = vadd.f32 %v3094, %v3095
  %v3097 = vsel %vm642, %v3063, 0.0
  %v3098 = vadd.f32 %v3096, %v3097
  %v3099 = vsel %vm642, %v3064, 0.0
  %v3100 = vadd.f32 %v3098, %v3099
  %v3101 = vsel %vm642, %v3065, 0.0
  %v3102 = vadd.f32 %v3100, %v3101
  %v3103 = vsel %vm642, %v3066, 0.0
  %v3104 = vadd.f32 %v3102, %v3103
  %v3105 = vsel %vm642, %v3067, 0.0
  %v3106 = vadd.f32 %v3104, %v3105
  %v3107 = vsel %vm642, %v3068, 0.0
  %v3108 = vadd.f32 %v3106, %v3107
  %v3109 = vsel %vm642, %v3069, 0.0
  %v3110 = vadd.f32 %v3108, %v3109
  %v3111 = vsel %vm642, %v3070, 0.0
  %v3112 = vadd.f32 %v3110, %v3111
  %v3113 = vsel %vm642, %v3071, 0.0
  %v3114 = vadd.f32 %v3112, %v3113
  %v3115 = vsel %vm642, %v3072, 0.0
  %v3116 = vadd.f32 %v3114, %v3115
  %v3117 = vsel %vm2918, %v3073, 0.0
  %v3118 = vadd.f32 %v3116, %v3117
  %v3119 = vrot.slane %v3118, 4
  %v3120 = vadd.f32 %v3118, %v3119
  %v3121 = vrot.slane %v3120, 2
  %v3122 = vadd.f32 %v3120, %v3121
  %v3123 = vrot.slane %v3122, 1
  %v3124 = vadd.f32 %v3122, %v3123
  %v3126 = vsel %vm642, %v3124, 0
  %3128 = vmatprep.subr.mxu0 0.0
  %3129 = vmatpush1.msra.mxu0 %v74
  %3130 = vmatprep.subr.mxu0 0.0
  %3131 = vmatpush1.msra.mxu0 %v75
  %3132 = vmatprep.subr.mxu0 0.0
  %3133 = vmatpush1.msra.mxu0 0.0
  %3134 = vmatprep.subr.mxu0 0.0
  %3135 = vmatpush1.msra.mxu0 0.0
  %3136 = vmatprep.subr.mxu0 0.0
  %3137 = vmatpush1.msra.mxu0 0.0
  %3138 = vmatprep.subr.mxu0 0.0
  %3139 = vmatpush1.msra.mxu0 0.0
  %3140 = vmatprep.subr.mxu0 0.0
  %3141 = vmatpush1.msra.mxu0 0.0
  %3142 = vmatprep.subr.mxu0 0.0
  %3143 = vmatpush1.msra.mxu0 0.0
  %3144 = vmatprep.subr.mxu0 0.0
  %3145 = vmatpush1.msra.mxu0 0.0
  %3146 = vmatprep.subr.mxu0 0.0
  %3147 = vmatpush1.msra.mxu0 0.0
  %3148 = vmatprep.subr.mxu0 0.0
  %3149 = vmatpush1.msra.mxu0 0.0
  %3150 = vmatprep.subr.mxu0 0.0
  %3151 = vmatpush1.msra.mxu0 0.0
  %3152 = vmatprep.subr.mxu0 0.0
  %3153 = vmatpush1.msra.mxu0 0.0
  %3154 = vmatprep.subr.mxu0 0.0
  %3155 = vmatpush1.msra.mxu0 0.0
  %3156 = vmatprep.subr.mxu0 0.0
  %3157 = vmatpush1.msra.mxu0 0.0
  %3158 = vmatprep.subr.mxu0 0.0
  %3159 = vmatpush1.msra.mxu0 0.0
  %3160 = vmatprep.subr.mxu0 0.0
  %3161 = vmatpush1.msra.mxu0 0.0
  %3162 = vmatprep.subr.mxu0 0.0
  %3163 = vmatpush1.msra.mxu0 0.0
  %3164 = vmatprep.subr.mxu0 0.0
  %3165 = vmatpush1.msra.mxu0 0.0
  %3166 = vmatprep.subr.mxu0 0.0
  %3167 = vmatpush1.msra.mxu0 0.0
  %3168 = vmatprep.subr.mxu0 0.0
  %3169 = vmatpush1.msra.mxu0 0.0
  %3170 = vmatprep.subr.mxu0 0.0
  %3171 = vmatpush1.msra.mxu0 0.0
  %3172 = vmatprep.subr.mxu0 0.0
  %3173 = vmatpush1.msra.mxu0 0.0
  %3174 = vmatprep.subr.mxu0 0.0
  %3175 = vmatpush1.msra.mxu0 0.0
  %3176 = vmatprep.subr.mxu0 0.0
  %3177 = vmatpush1.msra.mxu0 0.0
  %3178 = vmatprep.subr.mxu0 0.0
  %3179 = vmatpush1.msra.mxu0 0.0
  %3180 = vmatprep.subr.mxu0 0.0
  %3181 = vmatpush1.msra.mxu0 0.0
  %3182 = vmatprep.subr.mxu0 0.0
  %3183 = vmatpush1.msra.mxu0 0.0
  %3184 = vmatprep.subr.mxu0 0.0
  %3185 = vmatpush1.msra.mxu0 0.0
  %3186 = vmatprep.subr.mxu0 0.0
  %3187 = vmatpush1.msra.mxu0 0.0
  %3188 = vmatprep.subr.mxu0 0.0
  %3189 = vmatpush1.msra.mxu0 0.0
  %3190 = vmatprep.subr.mxu0 0.0
  %3191 = vmatpush1.msra.mxu0 0.0
  %3192 = vmatprep.mubr.f32.mxu0 0.0
  %3193 = vmatmul.mubr.f32.gmra.mrb[0].mxu0 %v3126
  %v3194 = vpop.f32.mrb[0].mxu0
  %v3195 = vadd.f32 0.0, %v3194
  %v3196 = vpop.f32.mrb[0].mxu0
  %3197 = vdwg.mxu0
  %v3198 = vmul.f32 %v3195, 0.001953125
  %v3199 = vadd.f32 %v3198, 1e-05
  %v3200 = vrsqrt.pop %v3199
  %v3201 = vmul.f32 %v3200, %v2781
  %v3202 = vlaneseq
  %v3203 = vshrl.u32 %v3202, 7
  %v3204 = vsub.s32 0, %v3203
  %v3205 = vrot.slane %v3201, %v3204
  %v3206 = vmul.f32 %v3028, %v3205
  %v3207 = vmul.f32 %v3029, %v3205
  %v3208 = vmul.f32 %v3030, %v3205
  %v3209 = vmul.f32 %v3031, %v3205
  %v3210 = vmul.f32 %v3032, %v3205
  %v3211 = vmul.f32 %v3033, %v3205
  %v3212 = vmul.f32 %v3034, %v3205
  %v3213 = vmul.f32 %v3035, %v3205
  %v3214 = vmul.f32 %v3036, %v3205
  %v3215 = vmul.f32 %v3037, %v3205
  %v3216 = vmul.f32 %v3038, %v3205
  %v3217 = vmul.f32 %v3039, %v3205
  %v3218 = vmul.f32 %v3040, %v3205
  %v3219 = vmul.f32 %v3041, %v3205
  %v3220 = vmul.f32 %v3042, %v3205
  %v3221 = vmul.f32 %v3043, %v3205
  %v3222 = vmul.f32 %v3044, %v3205
  %v3223 = vmul.f32 %v3045, %v3205
  %v3224 = vmul.f32 %v3046, %v3205
  %v3225 = vmul.f32 %v3047, %v3205
  %v3226 = vmul.f32 %v3048, %v3205
  %v3227 = vmul.f32 %v3049, %v3205
  %v3228 = vmul.f32 %v3050, %v3205
  %v3230 = vlaneseq
  %v3231 = vshrl.u32 %v3230, 7
  %v3232 = vsub.s32 0, %v3231
  %v3233 = vrot.slane %v2782, %v3232
  %v3235 = vadd.f32 %v3206, %v3233
  %v3236 = vadd.f32 %v3207, %v3233
  %v3237 = vadd.f32 %v3208, %v3233
  %v3238 = vadd.f32 %v3209, %v3233
  %v3239 = vadd.f32 %v3210, %v3233
  %v3240 = vadd.f32 %v3211, %v3233
  %v3241 = vadd.f32 %v3212, %v3233
  %v3242 = vadd.f32 %v3213, %v3233
  %v3243 = vadd.f32 %v3214, %v3233
  %v3244 = vadd.f32 %v3215, %v3233
  %v3245 = vadd.f32 %v3216, %v3233
  %v3246 = vadd.f32 %v3217, %v3233
  %v3247 = vadd.f32 %v3218, %v3233
  %v3248 = vadd.f32 %v3219, %v3233
  %v3249 = vadd.f32 %v3220, %v3233
  %v3250 = vadd.f32 %v3221, %v3233
  %v3251 = vadd.f32 %v3222, %v3233
  %v3252 = vadd.f32 %v3223, %v3233
  %v3253 = vadd.f32 %v3224, %v3233
  %v3254 = vadd.f32 %v3225, %v3233
  %v3255 = vadd.f32 %v3226, %v3233
  %v3256 = vadd.f32 %v3227, %v3233
  %v3257 = vadd.f32 %v3228, %v3233
  %v3258 = vmax.f32 %v3235, 0.0
  %v3259 = vmax.f32 %v3236, 0.0
  %v3260 = vmax.f32 %v3237, 0.0
  %v3261 = vmax.f32 %v3238, 0.0
  %v3262 = vmax.f32 %v3239, 0.0
  %v3263 = vmax.f32 %v3240, 0.0
  %v3264 = vmax.f32 %v3241, 0.0
  %v3265 = vmax.f32 %v3242, 0.0
  %v3266 = vmax.f32 %v3243, 0.0
  %v3267 = vmax.f32 %v3244, 0.0
  %v3268 = vmax.f32 %v3245, 0.0
  %v3269 = vmax.f32 %v3246, 0.0
  %v3270 = vmax.f32 %v3247, 0.0
  %v3271 = vmax.f32 %v3248, 0.0
  %v3272 = vmax.f32 %v3249, 0.0
  %v3273 = vmax.f32 %v3250, 0.0
  %v3274 = vmax.f32 %v3251, 0.0
  %v3275 = vmax.f32 %v3252, 0.0
  %v3276 = vmax.f32 %v3253, 0.0
  %v3277 = vmax.f32 %v3254, 0.0
  %v3278 = vmax.f32 %v3255, 0.0
  %v3279 = vmax.f32 %v3256, 0.0
  %v3280 = vmax.f32 %v3257, 0.0
  %v3281 = vmul.f32 %v3258, %v2786
  %v3282 = vmul.f32 %v3259, %v2788
  %v3283 = vmul.f32 %v3260, %v2790
  %v3284 = vmul.f32 %v3261, %v2792
  %v3285 = vmul.f32 %v3262, %v2794
  %v3286 = vmul.f32 %v3263, %v2796
  %v3287 = vmul.f32 %v3264, %v2798
  %v3288 = vmul.f32 %v3265, %v2800
  %v3289 = vmul.f32 %v3266, %v2802
  %v3290 = vmul.f32 %v3267, %v2804
  %v3291 = vmul.f32 %v3268, %v2806
  %v3292 = vmul.f32 %v3269, %v2808
  %v3293 = vmul.f32 %v3270, %v2810
  %v3294 = vmul.f32 %v3271, %v2812
  %v3295 = vmul.f32 %v3272, %v2814
  %v3296 = vmul.f32 %v3273, %v2816
  %v3297 = vmul.f32 %v3274, %v2818
  %v3298 = vmul.f32 %v3275, %v2820
  %v3299 = vmul.f32 %v3276, %v2822
  %v3300 = vmul.f32 %v3277, %v2824
  %v3301 = vmul.f32 %v3278, %v2826
  %v3302 = vmul.f32 %v3279, %v2828
  %v3303 = vmul.f32 %v3280, %v2827
  %v3304 = vpack.c.bf16 %v3282, %v3281
  %v3305 = vpack.c.bf16 %v3284, %v3283
  %v3306 = vpack.c.bf16 %v3286, %v3285
  %v3307 = vpack.c.bf16 %v3288, %v3287
  %v3308 = vpack.c.bf16 %v3290, %v3289
  %v3309 = vpack.c.bf16 %v3292, %v3291
  %v3310 = vpack.c.bf16 %v3294, %v3293
  %v3311 = vpack.c.bf16 %v3296, %v3295
  %v3312 = vpack.c.bf16 %v3298, %v3297
  %v3313 = vpack.c.bf16 %v3300, %v3299
  %v3314 = vpack.c.bf16 %v3302, %v3301
  %v3315 = vpack.c.bf16 %v3303, %v3303
  %v3316 = vld [vmem:[%s11] sm:$0x1]
  %v3317 = vld [vmem:[%s10] sm:$0xf]
  %v3318 = vld [vmem:[%s10 + $0x4] sm:$0xf]
  %s3319 = scalar_lea.vmem %s10, 8
  %v3320 = vld [vmem:[%s3319] sm:$0xf]
  %v3321 = vld [vmem:[%s3319 + $0x4] sm:$0xf]
  %v3323 = vshrl.u32 %v3304, 16
  %v3325 = vshll.u32 %v3304, 16
  %v3327 = vrot.slane %v3325, 1
  %v3328 = vor.u32 %v3323, %v3327
  %v3330 = vshll.u32 %v3305, 16
  %v3332 = vrot.slane %v3330, 1
  %v3333 = vsel %vm692, %v3328, %v3332
  %v3334 = vshrl.u32 %v3305, 16
  %v3336 = vor.u32 %v3334, %v3332
  %v3338 = vshll.u32 %v3306, 16
  %v3340 = vrot.slane %v3338, 1
  %v3341 = vsel %vm692, %v3336, %v3340
  %v3342 = vshrl.u32 %v3306, 16
  %v3344 = vor.u32 %v3342, %v3340
  %v3346 = vshll.u32 %v3307, 16
  %v3348 = vrot.slane %v3346, 1
  %v3349 = vsel %vm692, %v3344, %v3348
  %v3350 = vshrl.u32 %v3307, 16
  %v3352 = vor.u32 %v3350, %v3348
  %v3354 = vshll.u32 %v3308, 16
  %v3356 = vrot.slane %v3354, 1
  %v3357 = vsel %vm692, %v3352, %v3356
  %v3358 = vshrl.u32 %v3308, 16
  %v3360 = vor.u32 %v3358, %v3356
  %v3362 = vshll.u32 %v3309, 16
  %v3364 = vrot.slane %v3362, 1
  %v3365 = vsel %vm692, %v3360, %v3364
  %v3366 = vshrl.u32 %v3309, 16
  %v3368 = vor.u32 %v3366, %v3364
  %v3370 = vshll.u32 %v3310, 16
  %v3372 = vrot.slane %v3370, 1
  %v3373 = vsel %vm692, %v3368, %v3372
  %v3374 = vshrl.u32 %v3310, 16
  %v3376 = vor.u32 %v3374, %v3372
  %v3378 = vshll.u32 %v3311, 16
  %v3380 = vrot.slane %v3378, 1
  %v3381 = vsel %vm692, %v3376, %v3380
  %v3382 = vshrl.u32 %v3311, 16
  %v3384 = vor.u32 %v3382, %v3380
  %v3386 = vshll.u32 %v3312, 16
  %v3388 = vrot.slane %v3386, 1
  %v3389 = vsel %vm692, %v3384, %v3388
  %v3390 = vshrl.u32 %v3312, 16
  %v3392 = vor.u32 %v3390, %v3388
  %v3394 = vshll.u32 %v3313, 16
  %v3396 = vrot.slane %v3394, 1
  %v3397 = vsel %vm692, %v3392, %v3396
  %v3398 = vshrl.u32 %v3313, 16
  %v3400 = vor.u32 %v3398, %v3396
  %v3402 = vshll.u32 %v3314, 16
  %v3404 = vrot.slane %v3402, 1
  %v3405 = vsel %vm692, %v3400, %v3404
  %v3406 = vshrl.u32 %v3314, 16
  %v3408 = vor.u32 %v3406, %v3404
  %v3411 = vunpack.c.l.b16 %v3320
  %v3412 = vunpack.c.l.b16 %v3321
  %v3413 = vpack.c.b16 %v3412, %v3411
  %v3416 = vsel %vm642, %v3333, 0
  %v3419 = vsel %vm642, %v3341, 0
  %v3422 = vsel %vm642, %v3349, 0
  %v3425 = vsel %vm642, %v3357, 0
  %v3428 = vsel %vm642, %v3365, 0
  %v3431 = vsel %vm642, %v3373, 0
  %v3434 = vsel %vm642, %v3381, 0
  %v3437 = vsel %vm642, %v3389, 0
  %v3440 = vsel %vm642, %v3397, 0
  %v3443 = vsel %vm642, %v3405, 0
  %v3446 = vsel %vm642, %v3408, 0
  %3448 = vmatprep.subr.bf16.mxu0 0
  %3449 = vmatpush1.bf16.msra.mxu0 %v3413
  %3450 = vmatprep.subr.bf16.mxu0 0
  %3451 = vmatpush1.bf16.msra.mxu0 0
  %3452 = vmatprep.subr.bf16.mxu0 0
  %3453 = vmatpush1.bf16.msra.mxu0 0
  %3454 = vmatprep.subr.bf16.mxu0 0
  %3455 = vmatpush1.bf16.msra.mxu0 0
  %3456 = vmatprep.subr.bf16.mxu0 0
  %3457 = vmatpush1.bf16.msra.mxu0 0
  %3458 = vmatprep.subr.bf16.mxu0 0
  %3459 = vmatpush1.bf16.msra.mxu0 0
  %3460 = vmatprep.subr.bf16.mxu0 0
  %3461 = vmatpush1.bf16.msra.mxu0 0
  %3462 = vmatprep.subr.bf16.mxu0 0
  %3463 = vmatpush1.bf16.msra.mxu0 0
  %3464 = vmatprep.subr.bf16.mxu0 0
  %3465 = vmatpush1.bf16.msra.mxu0 0
  %3466 = vmatprep.subr.bf16.mxu0 0
  %3467 = vmatpush1.bf16.msra.mxu0 0
  %3468 = vmatprep.subr.bf16.mxu0 0
  %3469 = vmatpush1.bf16.msra.mxu0 0
  %3470 = vmatprep.subr.bf16.mxu0 0
  %3471 = vmatpush1.bf16.msra.mxu0 0
  %3472 = vmatprep.subr.bf16.mxu0 0
  %3473 = vmatpush1.bf16.msra.mxu0 0
  %3474 = vmatprep.subr.bf16.mxu0 0
  %3475 = vmatpush1.bf16.msra.mxu0 0
  %3476 = vmatprep.subr.bf16.mxu0 0
  %3477 = vmatpush1.bf16.msra.mxu0 0
  %3478 = vmatprep.subr.bf16.mxu0 0
  %3479 = vmatpush1.bf16.msra.mxu0 0
  %3480 = vmatprep.mubr.bf16.mxu0 0
  %3481 = vmatmul.mubr.bf16.gmra.mrb[0].mxu0 %v3416
  %v3482 = vpop.f32.mrb[0].mxu0
  %v3483 = vadd.f32 0.0, %v3482
  %v3484 = vpop.f32.mrb[0].mxu0
  %v3485 = vpop.f32.mrb[0].mxu0
  %v3486 = vadd.f32 0.0, %v3485
  %v3487 = vpop.f32.mrb[0].mxu0
  %3488 = vmatprep.mubr.bf16.mxu0 0
  %3489 = vmatmul.mubr.bf16.gmra.mrb[0].mxu0 %v3419
  %v3490 = vpop.f32.mrb[0].mxu0
  %v3491 = vadd.f32 0.0, %v3490
  %v3492 = vpop.f32.mrb[0].mxu0
  %v3493 = vpop.f32.mrb[0].mxu0
  %v3494 = vadd.f32 0.0, %v3493
  %v3495 = vpop.f32.mrb[0].mxu0
  %3496 = vmatprep.mubr.bf16.mxu0 0
  %3497 = vmatmul.mubr.bf16.gmra.mrb[0].mxu0 %v3422
  %v3498 = vpop.f32.mrb[0].mxu0
  %v3499 = vadd.f32 0.0, %v3498
  %v3500 = vpop.f32.mrb[0].mxu0
  %v3501 = vpop.f32.mrb[0].mxu0
  %v3502 = vadd.f32 0.0, %v3501
  %v3503 = vpop.f32.mrb[0].mxu0
  %3504 = vmatprep.mubr.bf16.mxu0 0
  %3505 = vmatmul.mubr.bf16.gmra.mrb[0].mxu0 %v3425
  %v3506 = vpop.f32.mrb[0].mxu0
  %v3507 = vadd.f32 0.0, %v3506
  %v3508 = vpop.f32.mrb[0].mxu0
  %v3509 = vpop.f32.mrb[0].mxu0
  %v3510 = vadd.f32 0.0, %v3509
  %v3511 = vpop.f32.mrb[0].mxu0
  %3512 = vmatprep.mubr.bf16.mxu0 0
  %3513 = vmatmul.mubr.bf16.gmra.mrb[0].mxu0 %v3428
  %v3514 = vpop.f32.mrb[0].mxu0
  %v3515 = vadd.f32 0.0, %v3514
  %v3516 = vpop.f32.mrb[0].mxu0
  %v3517 = vpop.f32.mrb[0].mxu0
  %v3518 = vadd.f32 0.0, %v3517
  %v3519 = vpop.f32.mrb[0].mxu0
  %3520 = vmatprep.mubr.bf16.mxu0 0
  %3521 = vmatmul.mubr.bf16.gmra.mrb[0].mxu0 %v3431
  %v3522 = vpop.f32.mrb[0].mxu0
  %v3523 = vadd.f32 0.0, %v3522
  %v3524 = vpop.f32.mrb[0].mxu0
  %v3525 = vpop.f32.mrb[0].mxu0
  %v3526 = vadd.f32 0.0, %v3525
  %v3527 = vpop.f32.mrb[0].mxu0
  %3528 = vmatprep.mubr.bf16.mxu0 0
  %3529 = vmatmul.mubr.bf16.gmra.mrb[0].mxu0 %v3434
  %v3530 = vpop.f32.mrb[0].mxu0
  %v3531 = vadd.f32 0.0, %v3530
  %v3532 = vpop.f32.mrb[0].mxu0
  %v3533 = vpop.f32.mrb[0].mxu0
  %v3534 = vadd.f32 0.0, %v3533
  %v3535 = vpop.f32.mrb[0].mxu0
  %3536 = vmatprep.mubr.bf16.mxu0 0
  %3537 = vmatmul.mubr.bf16.gmra.mrb[0].mxu0 %v3437
  %v3538 = vpop.f32.mrb[0].mxu0
  %v3539 = vadd.f32 0.0, %v3538
  %v3540 = vpop.f32.mrb[0].mxu0
  %v3541 = vpop.f32.mrb[0].mxu0
  %v3542 = vadd.f32 0.0, %v3541
  %v3543 = vpop.f32.mrb[0].mxu0
  %3544 = vmatprep.mubr.bf16.mxu0 0
  %3545 = vmatmul.mubr.bf16.gmra.mrb[0].mxu0 %v3440
  %v3546 = vpop.f32.mrb[0].mxu0
  %v3547 = vadd.f32 0.0, %v3546
  %v3548 = vpop.f32.mrb[0].mxu0
  %v3549 = vpop.f32.mrb[0].mxu0
  %v3550 = vadd.f32 0.0, %v3549
  %v3551 = vpop.f32.mrb[0].mxu0
  %3552 = vmatprep.mubr.bf16.mxu0 0
  %3553 = vmatmul.mubr.bf16.gmra.mrb[0].mxu0 %v3443
  %v3554 = vpop.f32.mrb[0].mxu0
  %v3555 = vadd.f32 0.0, %v3554
  %v3556 = vpop.f32.mrb[0].mxu0
  %v3557 = vpop.f32.mrb[0].mxu0
  %v3558 = vadd.f32 0.0, %v3557
  %v3559 = vpop.f32.mrb[0].mxu0
  %3560 = vmatprep.mubr.bf16.mxu0 0
  %3561 = vmatmul.mubr.bf16.gmra.mrb[0].mxu0 %v3446
  %v3562 = vpop.f32.mrb[0].mxu0
  %v3563 = vadd.f32 0.0, %v3562
  %v3564 = vpop.f32.mrb[0].mxu0
  %v3565 = vpop.f32.mrb[0].mxu0
  %v3566 = vpop.f32.mrb[0].mxu0
  %3567 = vdwg.mxu0
  %v3570 = vunpack.c.l.b16 %v3317
  %v3571 = vunpack.c.l.b16 %v3318
  %v3572 = vpack.c.b16 %v3571, %v3570
  %v3574 = vsel %vm642, %v3304, 0
  %v3576 = vsel %vm642, %v3305, 0
  %v3578 = vsel %vm642, %v3306, 0
  %v3580 = vsel %vm642, %v3307, 0
  %v3582 = vsel %vm642, %v3308, 0
  %v3584 = vsel %vm642, %v3309, 0
  %v3586 = vsel %vm642, %v3310, 0
  %v3588 = vsel %vm642, %v3311, 0
  %v3590 = vsel %vm642, %v3312, 0
  %v3592 = vsel %vm642, %v3313, 0
  %v3594 = vsel %vm642, %v3314, 0
  %3596 = vmatprep.subr.bf16.mxu0 0
  %3597 = vmatpush1.bf16.msra.mxu0 %v3572
  %3598 = vmatprep.subr.bf16.mxu0 0
  %3599 = vmatpush1.bf16.msra.mxu0 0
  %3600 = vmatprep.subr.bf16.mxu0 0
  %3601 = vmatpush1.bf16.msra.mxu0 0
  %3602 = vmatprep.subr.bf16.mxu0 0
  %3603 = vmatpush1.bf16.msra.mxu0 0
  %3604 = vmatprep.subr.bf16.mxu0 0
  %3605 = vmatpush1.bf16.msra.mxu0 0
  %3606 = vmatprep.subr.bf16.mxu0 0
  %3607 = vmatpush1.bf16.msra.mxu0 0
  %3608 = vmatprep.subr.bf16.mxu0 0
  %3609 = vmatpush1.bf16.msra.mxu0 0
  %3610 = vmatprep.subr.bf16.mxu0 0
  %3611 = vmatpush1.bf16.msra.mxu0 0
  %3612 = vmatprep.subr.bf16.mxu0 0
  %3613 = vmatpush1.bf16.msra.mxu0 0
  %3614 = vmatprep.subr.bf16.mxu0 0
  %3615 = vmatpush1.bf16.msra.mxu0 0
  %3616 = vmatprep.subr.bf16.mxu0 0
  %3617 = vmatpush1.bf16.msra.mxu0 0
  %3618 = vmatprep.subr.bf16.mxu0 0
  %3619 = vmatpush1.bf16.msra.mxu0 0
  %3620 = vmatprep.subr.bf16.mxu0 0
  %3621 = vmatpush1.bf16.msra.mxu0 0
  %3622 = vmatprep.subr.bf16.mxu0 0
  %3623 = vmatpush1.bf16.msra.mxu0 0
  %3624 = vmatprep.subr.bf16.mxu0 0
  %3625 = vmatpush1.bf16.msra.mxu0 0
  %3626 = vmatprep.subr.bf16.mxu0 0
  %3627 = vmatpush1.bf16.msra.mxu0 0
  %3628 = vmatprep.mubr.bf16.mxu0 0
  %3629 = vmatmul.mubr.bf16.gmra.mrb[0].mxu0 %v3574
  %v3630 = vpop.f32.mrb[0].mxu0
  %v3631 = vadd.f32 %v3483, %v3630
  %v3632 = vpop.f32.mrb[0].mxu0
  %v3633 = vpop.f32.mrb[0].mxu0
  %v3634 = vadd.f32 %v3486, %v3633
  %v3635 = vpop.f32.mrb[0].mxu0
  %3636 = vmatprep.mubr.bf16.mxu0 0
  %3637 = vmatmul.mubr.bf16.gmra.mrb[0].mxu0 %v3576
  %v3638 = vpop.f32.mrb[0].mxu0
  %v3639 = vadd.f32 %v3491, %v3638
  %v3640 = vpop.f32.mrb[0].mxu0
  %v3641 = vpop.f32.mrb[0].mxu0
  %v3642 = vadd.f32 %v3494, %v3641
  %v3643 = vpop.f32.mrb[0].mxu0
  %3644 = vmatprep.mubr.bf16.mxu0 0
  %3645 = vmatmul.mubr.bf16.gmra.mrb[0].mxu0 %v3578
  %v3646 = vpop.f32.mrb[0].mxu0
  %v3647 = vadd.f32 %v3499, %v3646
  %v3648 = vpop.f32.mrb[0].mxu0
  %v3649 = vpop.f32.mrb[0].mxu0
  %v3650 = vadd.f32 %v3502, %v3649
  %v3651 = vpop.f32.mrb[0].mxu0
  %3652 = vmatprep.mubr.bf16.mxu0 0
  %3653 = vmatmul.mubr.bf16.gmra.mrb[0].mxu0 %v3580
  %v3654 = vpop.f32.mrb[0].mxu0
  %v3655 = vadd.f32 %v3507, %v3654
  %v3656 = vpop.f32.mrb[0].mxu0
  %v3657 = vpop.f32.mrb[0].mxu0
  %v3658 = vadd.f32 %v3510, %v3657
  %v3659 = vpop.f32.mrb[0].mxu0
  %3660 = vmatprep.mubr.bf16.mxu0 0
  %3661 = vmatmul.mubr.bf16.gmra.mrb[0].mxu0 %v3582
  %v3662 = vpop.f32.mrb[0].mxu0
  %v3663 = vadd.f32 %v3515, %v3662
  %v3664 = vpop.f32.mrb[0].mxu0
  %v3665 = vpop.f32.mrb[0].mxu0
  %v3666 = vadd.f32 %v3518, %v3665
  %v3667 = vpop.f32.mrb[0].mxu0
  %3668 = vmatprep.mubr.bf16.mxu0 0
  %3669 = vmatmul.mubr.bf16.gmra.mrb[0].mxu0 %v3584
  %v3670 = vpop.f32.mrb[0].mxu0
  %v3671 = vadd.f32 %v3523, %v3670
  %v3672 = vpop.f32.mrb[0].mxu0
  %v3673 = vpop.f32.mrb[0].mxu0
  %v3674 = vadd.f32 %v3526, %v3673
  %v3675 = vpop.f32.mrb[0].mxu0
  %3676 = vmatprep.mubr.bf16.mxu0 0
  %3677 = vmatmul.mubr.bf16.gmra.mrb[0].mxu0 %v3586
  %v3678 = vpop.f32.mrb[0].mxu0
  %v3679 = vadd.f32 %v3531, %v3678
  %v3680 = vpop.f32.mrb[0].mxu0
  %v3681 = vpop.f32.mrb[0].mxu0
  %v3682 = vadd.f32 %v3534, %v3681
  %v3683 = vpop.f32.mrb[0].mxu0
  %3684 = vmatprep.mubr.bf16.mxu0 0
  %3685 = vmatmul.mubr.bf16.gmra.mrb[0].mxu0 %v3588
  %v3686 = vpop.f32.mrb[0].mxu0
  %v3687 = vadd.f32 %v3539, %v3686
  %v3688 = vpop.f32.mrb[0].mxu0
  %v3689 = vpop.f32.mrb[0].mxu0
  %v3690 = vadd.f32 %v3542, %v3689
  %v3691 = vpop.f32.mrb[0].mxu0
  %3692 = vmatprep.mubr.bf16.mxu0 0
  %3693 = vmatmul.mubr.bf16.gmra.mrb[0].mxu0 %v3590
  %v3694 = vpop.f32.mrb[0].mxu0
  %v3695 = vadd.f32 %v3547, %v3694
  %v3696 = vpop.f32.mrb[0].mxu0
  %v3697 = vpop.f32.mrb[0].mxu0
  %v3698 = vadd.f32 %v3550, %v3697
  %v3699 = vpop.f32.mrb[0].mxu0
  %3700 = vmatprep.mubr.bf16.mxu0 0
  %3701 = vmatmul.mubr.bf16.gmra.mrb[0].mxu0 %v3592
  %v3702 = vpop.f32.mrb[0].mxu0
  %v3703 = vadd.f32 %v3555, %v3702
  %v3704 = vpop.f32.mrb[0].mxu0
  %v3705 = vpop.f32.mrb[0].mxu0
  %v3706 = vadd.f32 %v3558, %v3705
  %v3707 = vpop.f32.mrb[0].mxu0
  %3708 = vmatprep.mubr.bf16.mxu0 0
  %3709 = vmatmul.mubr.bf16.gmra.mrb[0].mxu0 %v3594
  %v3710 = vpop.f32.mrb[0].mxu0
  %v3711 = vadd.f32 %v3563, %v3710
  %v3712 = vpop.f32.mrb[0].mxu0
  %v3713 = vpop.f32.mrb[0].mxu0
  %v3714 = vpop.f32.mrb[0].mxu0
  %3715 = vdwg.mxu0
  %s3716 = scalar_lea.vmem %s10, 16
  %v3717 = vld [vmem:[%s3716] sm:$0xf]
  %v3718 = vld [vmem:[%s3716 + $0x4] sm:$0xf]
  %v3730 = vrot.slane %v3304, 1
  %v3731 = vrot.slane %v3305, 1
  %v3732 = vsel %vm1134, %v3730, %v3731
  %v3733 = vrot.slane %v3306, 1
  %v3734 = vsel %vm1134, %v3731, %v3733
  %v3735 = vrot.slane %v3307, 1
  %v3736 = vsel %vm1134, %v3733, %v3735
  %v3737 = vrot.slane %v3308, 1
  %v3738 = vsel %vm1134, %v3735, %v3737
  %v3739 = vrot.slane %v3309, 1
  %v3740 = vsel %vm1134, %v3737, %v3739
  %v3741 = vrot.slane %v3310, 1
  %v3742 = vsel %vm1134, %v3739, %v3741
  %v3743 = vrot.slane %v3311, 1
  %v3744 = vsel %vm1134, %v3741, %v3743
  %v3745 = vrot.slane %v3312, 1
  %v3746 = vsel %vm1134, %v3743, %v3745
  %v3747 = vrot.slane %v3313, 1
  %v3748 = vsel %vm1134, %v3745, %v3747
  %v3749 = vrot.slane %v3314, 1
  %v3750 = vsel %vm1134, %v3747, %v3749
  %v3753 = vunpack.c.l.b16 %v3717
  %v3754 = vunpack.c.l.b16 %v3718
  %v3755 = vpack.c.b16 %v3754, %v3753
  %v3758 = vsel %vm642, %v3732, 0
  %v3761 = vsel %vm642, %v3734, 0
  %v3764 = vsel %vm642, %v3736, 0
  %v3767 = vsel %vm642, %v3738, 0
  %v3770 = vsel %vm642, %v3740, 0
  %v3773 = vsel %vm642, %v3742, 0
  %v3776 = vsel %vm642, %v3744, 0
  %v3779 = vsel %vm642, %v3746, 0
  %v3782 = vsel %vm642, %v3748, 0
  %v3785 = vsel %vm642, %v3750, 0
  %v3788 = vsel %vm642, %v3749, 0
  %3790 = vmatprep.subr.bf16.mxu0 0
  %3791 = vmatpush1.bf16.msra.mxu0 %v3755
  %3792 = vmatprep.subr.bf16.mxu0 0
  %3793 = vmatpush1.bf16.msra.mxu0 0
  %3794 = vmatprep.subr.bf16.mxu0 0
  %3795 = vmatpush1.bf16.msra.mxu0 0
  %3796 = vmatprep.subr.bf16.mxu0 0
  %3797 = vmatpush1.bf16.msra.mxu0 0
  %3798 = vmatprep.subr.bf16.mxu0 0
  %3799 = vmatpush1.bf16.msra.mxu0 0
  %3800 = vmatprep.subr.bf16.mxu0 0
  %3801 = vmatpush1.bf16.msra.mxu0 0
  %3802 = vmatprep.subr.bf16.mxu0 0
  %3803 = vmatpush1.bf16.msra.mxu0 0
  %3804 = vmatprep.subr.bf16.mxu0 0
  %3805 = vmatpush1.bf16.msra.mxu0 0
  %3806 = vmatprep.subr.bf16.mxu0 0
  %3807 = vmatpush1.bf16.msra.mxu0 0
  %3808 = vmatprep.subr.bf16.mxu0 0
  %3809 = vmatpush1.bf16.msra.mxu0 0
  %3810 = vmatprep.subr.bf16.mxu0 0
  %3811 = vmatpush1.bf16.msra.mxu0 0
  %3812 = vmatprep.subr.bf16.mxu0 0
  %3813 = vmatpush1.bf16.msra.mxu0 0
  %3814 = vmatprep.subr.bf16.mxu0 0
  %3815 = vmatpush1.bf16.msra.mxu0 0
  %3816 = vmatprep.subr.bf16.mxu0 0
  %3817 = vmatpush1.bf16.msra.mxu0 0
  %3818 = vmatprep.subr.bf16.mxu0 0
  %3819 = vmatpush1.bf16.msra.mxu0 0
  %3820 = vmatprep.subr.bf16.mxu0 0
  %3821 = vmatpush1.bf16.msra.mxu0 0
  %3822 = vmatprep.mubr.bf16.mxu0 0
  %3823 = vmatmul.mubr.bf16.gmra.mrb[0].mxu0 %v3758
  %v3824 = vpop.f32.mrb[0].mxu0
  %v3825 = vadd.f32 0.0, %v3824
  %v3826 = vpop.f32.mrb[0].mxu0
  %v3827 = vpop.f32.mrb[0].mxu0
  %v3828 = vadd.f32 0.0, %v3827
  %v3829 = vpop.f32.mrb[0].mxu0
  %3830 = vmatprep.mubr.bf16.mxu0 0
  %3831 = vmatmul.mubr.bf16.gmra.mrb[0].mxu0 %v3761
  %v3832 = vpop.f32.mrb[0].mxu0
  %v3833 = vadd.f32 0.0, %v3832
  %v3834 = vpop.f32.mrb[0].mxu0
  %v3835 = vpop.f32.mrb[0].mxu0
  %v3836 = vadd.f32 0.0, %v3835
  %v3837 = vpop.f32.mrb[0].mxu0
  %3838 = vmatprep.mubr.bf16.mxu0 0
  %3839 = vmatmul.mubr.bf16.gmra.mrb[0].mxu0 %v3764
  %v3840 = vpop.f32.mrb[0].mxu0
  %v3841 = vadd.f32 0.0, %v3840
  %v3842 = vpop.f32.mrb[0].mxu0
  %v3843 = vpop.f32.mrb[0].mxu0
  %v3844 = vadd.f32 0.0, %v3843
  %v3845 = vpop.f32.mrb[0].mxu0
  %3846 = vmatprep.mubr.bf16.mxu0 0
  %3847 = vmatmul.mubr.bf16.gmra.mrb[0].mxu0 %v3767
  %v3848 = vpop.f32.mrb[0].mxu0
  %v3849 = vadd.f32 0.0, %v3848
  %v3850 = vpop.f32.mrb[0].mxu0
  %v3851 = vpop.f32.mrb[0].mxu0
  %v3852 = vadd.f32 0.0, %v3851
  %v3853 = vpop.f32.mrb[0].mxu0
  %3854 = vmatprep.mubr.bf16.mxu0 0
  %3855 = vmatmul.mubr.bf16.gmra.mrb[0].mxu0 %v3770
  %v3856 = vpop.f32.mrb[0].mxu0
  %v3857 = vadd.f32 0.0, %v3856
  %v3858 = vpop.f32.mrb[0].mxu0
  %v3859 = vpop.f32.mrb[0].mxu0
  %v3860 = vadd.f32 0.0, %v3859
  %v3861 = vpop.f32.mrb[0].mxu0
  %3862 = vmatprep.mubr.bf16.mxu0 0
  %3863 = vmatmul.mubr.bf16.gmra.mrb[0].mxu0 %v3773
  %v3864 = vpop.f32.mrb[0].mxu0
  %v3865 = vadd.f32 0.0, %v3864
  %v3866 = vpop.f32.mrb[0].mxu0
  %v3867 = vpop.f32.mrb[0].mxu0
  %v3868 = vadd.f32 0.0, %v3867
  %v3869 = vpop.f32.mrb[0].mxu0
  %3870 = vmatprep.mubr.bf16.mxu0 0
  %3871 = vmatmul.mubr.bf16.gmra.mrb[0].mxu0 %v3776
  %v3872 = vpop.f32.mrb[0].mxu0
  %v3873 = vadd.f32 0.0, %v3872
  %v3874 = vpop.f32.mrb[0].mxu0
  %v3875 = vpop.f32.mrb[0].mxu0
  %v3876 = vadd.f32 0.0, %v3875
  %v3877 = vpop.f32.mrb[0].mxu0
  %3878 = vmatprep.mubr.bf16.mxu0 0
  %3879 = vmatmul.mubr.bf16.gmra.mrb[0].mxu0 %v3779
  %v3880 = vpop.f32.mrb[0].mxu0
  %v3881 = vadd.f32 0.0, %v3880
  %v3882 = vpop.f32.mrb[0].mxu0
  %v3883 = vpop.f32.mrb[0].mxu0
  %v3884 = vadd.f32 0.0, %v3883
  %v3885 = vpop.f32.mrb[0].mxu0
  %3886 = vmatprep.mubr.bf16.mxu0 0
  %3887 = vmatmul.mubr.bf16.gmra.mrb[0].mxu0 %v3782
  %v3888 = vpop.f32.mrb[0].mxu0
  %v3889 = vadd.f32 0.0, %v3888
  %v3890 = vpop.f32.mrb[0].mxu0
  %v3891 = vpop.f32.mrb[0].mxu0
  %v3892 = vadd.f32 0.0, %v3891
  %v3893 = vpop.f32.mrb[0].mxu0
  %3894 = vmatprep.mubr.bf16.mxu0 0
  %3895 = vmatmul.mubr.bf16.gmra.mrb[0].mxu0 %v3785
  %v3896 = vpop.f32.mrb[0].mxu0
  %v3897 = vadd.f32 0.0, %v3896
  %v3898 = vpop.f32.mrb[0].mxu0
  %v3899 = vpop.f32.mrb[0].mxu0
  %v3900 = vadd.f32 0.0, %v3899
  %v3901 = vpop.f32.mrb[0].mxu0
  %3902 = vmatprep.mubr.bf16.mxu0 0
  %3903 = vmatmul.mubr.bf16.gmra.mrb[0].mxu0 %v3788
  %v3904 = vpop.f32.mrb[0].mxu0
  %v3905 = vadd.f32 0.0, %v3904
  %v3906 = vpop.f32.mrb[0].mxu0
  %v3907 = vpop.f32.mrb[0].mxu0
  %v3908 = vpop.f32.mrb[0].mxu0
  %3909 = vdwg.mxu0
  %v3910 = vadd.f32 %v3631, %v3825
  %v3911 = vadd.f32 %v3634, %v3828
  %v3912 = vadd.f32 %v3639, %v3833
  %v3913 = vadd.f32 %v3642, %v3836
  %v3914 = vadd.f32 %v3647, %v3841
  %v3915 = vadd.f32 %v3650, %v3844
  %v3916 = vadd.f32 %v3655, %v3849
  %v3917 = vadd.f32 %v3658, %v3852
  %v3918 = vadd.f32 %v3663, %v3857
  %v3919 = vadd.f32 %v3666, %v3860
  %v3920 = vadd.f32 %v3671, %v3865
  %v3921 = vadd.f32 %v3674, %v3868
  %v3922 = vadd.f32 %v3679, %v3873
  %v3923 = vadd.f32 %v3682, %v3876
  %v3924 = vadd.f32 %v3687, %v3881
  %v3925 = vadd.f32 %v3690, %v3884
  %v3926 = vadd.f32 %v3695, %v3889
  %v3927 = vadd.f32 %v3698, %v3892
  %v3928 = vadd.f32 %v3703, %v3897
  %v3929 = vadd.f32 %v3706, %v3900
  %v3930 = vadd.f32 %v3711, %v3905
  %s3931 = scalar_lea.vmem %s10, 24
  %v3932 = vld [vmem:[%s3931] sm:$0xf]
  %v3933 = vld [vmem:[%s3931 + $0x4] sm:$0xf]
  %v3934 = vrot.slane %v3323, 4
  %v3935 = vrot.slane %v3325, 5
  %v3936 = vor.u32 %v3934, %v3935
  %v3937 = vrot.slane %v3334, 4
  %v3938 = vrot.slane %v3330, 5
  %v3939 = vor.u32 %v3937, %v3938
  %v3940 = vsel %vm1362, %v3936, %v3939
  %v3941 = vrot.slane %v3342, 4
  %v3942 = vrot.slane %v3338, 5
  %v3943 = vor.u32 %v3941, %v3942
  %v3944 = vsel %vm1362, %v3939, %v3943
  %v3945 = vrot.slane %v3350, 4
  %v3946 = vrot.slane %v3346, 5
  %v3947 = vor.u32 %v3945, %v3946
  %v3948 = vsel %vm1362, %v3943, %v3947
  %v3949 = vrot.slane %v3358, 4
  %v3950 = vrot.slane %v3354, 5
  %v3951 = vor.u32 %v3949, %v3950
  %v3952 = vsel %vm1362, %v3947, %v3951
  %v3953 = vrot.slane %v3366, 4
  %v3954 = vrot.slane %v3362, 5
  %v3955 = vor.u32 %v3953, %v3954
  %v3956 = vsel %vm1362, %v3951, %v3955
  %v3957 = vrot.slane %v3374, 4
  %v3958 = vrot.slane %v3370, 5
  %v3959 = vor.u32 %v3957, %v3958
  %v3960 = vsel %vm1362, %v3955, %v3959
  %v3961 = vrot.slane %v3382, 4
  %v3962 = vrot.slane %v3378, 5
  %v3963 = vor.u32 %v3961, %v3962
  %v3964 = vsel %vm1362, %v3959, %v3963
  %v3965 = vrot.slane %v3390, 4
  %v3966 = vrot.slane %v3386, 5
  %v3967 = vor.u32 %v3965, %v3966
  %v3968 = vsel %vm1362, %v3963, %v3967
  %v3969 = vrot.slane %v3398, 4
  %v3970 = vrot.slane %v3394, 5
  %v3971 = vor.u32 %v3969, %v3970
  %v3972 = vsel %vm1362, %v3967, %v3971
  %v3973 = vrot.slane %v3406, 4
  %v3974 = vrot.slane %v3402, 5
  %v3975 = vor.u32 %v3973, %v3974
  %v3976 = vsel %vm1362, %v3971, %v3975
  %v3979 = vunpack.c.l.b16 %v3932
  %v3980 = vunpack.c.l.b16 %v3933
  %v3981 = vpack.c.b16 %v3980, %v3979
  %v3984 = vsel %vm642, %v3940, 0
  %v3987 = vsel %vm642, %v3944, 0
  %v3990 = vsel %vm642, %v3948, 0
  %v3993 = vsel %vm642, %v3952, 0
  %v3996 = vsel %vm642, %v3956, 0
  %v3999 = vsel %vm642, %v3960, 0
  %v4002 = vsel %vm642, %v3964, 0
  %v4005 = vsel %vm642, %v3968, 0
  %v4008 = vsel %vm642, %v3972, 0
  %v4011 = vsel %vm642, %v3976, 0
  %v4014 = vsel %vm642, %v3975, 0
  %4016 = vmatprep.subr.bf16.mxu0 0
  %4017 = vmatpush1.bf16.msra.mxu0 %v3981
  %4018 = vmatprep.subr.bf16.mxu0 0
  %4019 = vmatpush1.bf16.msra.mxu0 0
  %4020 = vmatprep.subr.bf16.mxu0 0
  %4021 = vmatpush1.bf16.msra.mxu0 0
  %4022 = vmatprep.subr.bf16.mxu0 0
  %4023 = vmatpush1.bf16.msra.mxu0 0
  %4024 = vmatprep.subr.bf16.mxu0 0
  %4025 = vmatpush1.bf16.msra.mxu0 0
  %4026 = vmatprep.subr.bf16.mxu0 0
  %4027 = vmatpush1.bf16.msra.mxu0 0
  %4028 = vmatprep.subr.bf16.mxu0 0
  %4029 = vmatpush1.bf16.msra.mxu0 0
  %4030 = vmatprep.subr.bf16.mxu0 0
  %4031 = vmatpush1.bf16.msra.mxu0 0
  %4032 = vmatprep.subr.bf16.mxu0 0
  %4033 = vmatpush1.bf16.msra.mxu0 0
  %4034 = vmatprep.subr.bf16.mxu0 0
  %4035 = vmatpush1.bf16.msra.mxu0 0
  %4036 = vmatprep.subr.bf16.mxu0 0
  %4037 = vmatpush1.bf16.msra.mxu0 0
  %4038 = vmatprep.subr.bf16.mxu0 0
  %4039 = vmatpush1.bf16.msra.mxu0 0
  %4040 = vmatprep.subr.bf16.mxu0 0
  %4041 = vmatpush1.bf16.msra.mxu0 0
  %4042 = vmatprep.subr.bf16.mxu0 0
  %4043 = vmatpush1.bf16.msra.mxu0 0
  %4044 = vmatprep.subr.bf16.mxu0 0
  %4045 = vmatpush1.bf16.msra.mxu0 0
  %4046 = vmatprep.subr.bf16.mxu0 0
  %4047 = vmatpush1.bf16.msra.mxu0 0
  %4048 = vmatprep.mubr.bf16.mxu0 0
  %4049 = vmatmul.mubr.bf16.gmra.mrb[0].mxu0 %v3984
  %v4050 = vpop.f32.mrb[0].mxu0
  %v4051 = vadd.f32 0.0, %v4050
  %v4052 = vpop.f32.mrb[0].mxu0
  %v4053 = vpop.f32.mrb[0].mxu0
  %v4054 = vadd.f32 0.0, %v4053
  %v4055 = vpop.f32.mrb[0].mxu0
  %4056 = vmatprep.mubr.bf16.mxu0 0
  %4057 = vmatmul.mubr.bf16.gmra.mrb[0].mxu0 %v3987
  %v4058 = vpop.f32.mrb[0].mxu0
  %v4059 = vadd.f32 0.0, %v4058
  %v4060 = vpop.f32.mrb[0].mxu0
  %v4061 = vpop.f32.mrb[0].mxu0
  %v4062 = vadd.f32 0.0, %v4061
  %v4063 = vpop.f32.mrb[0].mxu0
  %4064 = vmatprep.mubr.bf16.mxu0 0
  %4065 = vmatmul.mubr.bf16.gmra.mrb[0].mxu0 %v3990
  %v4066 = vpop.f32.mrb[0].mxu0
  %v4067 = vadd.f32 0.0, %v4066
  %v4068 = vpop.f32.mrb[0].mxu0
  %v4069 = vpop.f32.mrb[0].mxu0
  %v4070 = vadd.f32 0.0, %v4069
  %v4071 = vpop.f32.mrb[0].mxu0
  %4072 = vmatprep.mubr.bf16.mxu0 0
  %4073 = vmatmul.mubr.bf16.gmra.mrb[0].mxu0 %v3993
  %v4074 = vpop.f32.mrb[0].mxu0
  %v4075 = vadd.f32 0.0, %v4074
  %v4076 = vpop.f32.mrb[0].mxu0
  %v4077 = vpop.f32.mrb[0].mxu0
  %v4078 = vadd.f32 0.0, %v4077
  %v4079 = vpop.f32.mrb[0].mxu0
  %4080 = vmatprep.mubr.bf16.mxu0 0
  %4081 = vmatmul.mubr.bf16.gmra.mrb[0].mxu0 %v3996
  %v4082 = vpop.f32.mrb[0].mxu0
  %v4083 = vadd.f32 0.0, %v4082
  %v4084 = vpop.f32.mrb[0].mxu0
  %v4085 = vpop.f32.mrb[0].mxu0
  %v4086 = vadd.f32 0.0, %v4085
  %v4087 = vpop.f32.mrb[0].mxu0
  %4088 = vmatprep.mubr.bf16.mxu0 0
  %4089 = vmatmul.mubr.bf16.gmra.mrb[0].mxu0 %v3999
  %v4090 = vpop.f32.mrb[0].mxu0
  %v4091 = vadd.f32 0.0, %v4090
  %v4092 = vpop.f32.mrb[0].mxu0
  %v4093 = vpop.f32.mrb[0].mxu0
  %v4094 = vadd.f32 0.0, %v4093
  %v4095 = vpop.f32.mrb[0].mxu0
  %4096 = vmatprep.mubr.bf16.mxu0 0
  %4097 = vmatmul.mubr.bf16.gmra.mrb[0].mxu0 %v4002
  %v4098 = vpop.f32.mrb[0].mxu0
  %v4099 = vadd.f32 0.0, %v4098
  %v4100 = vpop.f32.mrb[0].mxu0
  %v4101 = vpop.f32.mrb[0].mxu0
  %v4102 = vadd.f32 0.0, %v4101
  %v4103 = vpop.f32.mrb[0].mxu0
  %4104 = vmatprep.mubr.bf16.mxu0 0
  %4105 = vmatmul.mubr.bf16.gmra.mrb[0].mxu0 %v4005
  %v4106 = vpop.f32.mrb[0].mxu0
  %v4107 = vadd.f32 0.0, %v4106
  %v4108 = vpop.f32.mrb[0].mxu0
  %v4109 = vpop.f32.mrb[0].mxu0
  %v4110 = vadd.f32 0.0, %v4109
  %v4111 = vpop.f32.mrb[0].mxu0
  %4112 = vmatprep.mubr.bf16.mxu0 0
  %4113 = vmatmul.mubr.bf16.gmra.mrb[0].mxu0 %v4008
  %v4114 = vpop.f32.mrb[0].mxu0
  %v4115 = vadd.f32 0.0, %v4114
  %v4116 = vpop.f32.mrb[0].mxu0
  %v4117 = vpop.f32.mrb[0].mxu0
  %v4118 = vadd.f32 0.0, %v4117
  %v4119 = vpop.f32.mrb[0].mxu0
  %4120 = vmatprep.mubr.bf16.mxu0 0
  %4121 = vmatmul.mubr.bf16.gmra.mrb[0].mxu0 %v4011
  %v4122 = vpop.f32.mrb[0].mxu0
  %v4123 = vadd.f32 0.0, %v4122
  %v4124 = vpop.f32.mrb[0].mxu0
  %v4125 = vpop.f32.mrb[0].mxu0
  %v4126 = vadd.f32 0.0, %v4125
  %v4127 = vpop.f32.mrb[0].mxu0
  %4128 = vmatprep.mubr.bf16.mxu0 0
  %4129 = vmatmul.mubr.bf16.gmra.mrb[0].mxu0 %v4014
  %v4130 = vpop.f32.mrb[0].mxu0
  %v4131 = vadd.f32 0.0, %v4130
  %v4132 = vpop.f32.mrb[0].mxu0
  %v4133 = vpop.f32.mrb[0].mxu0
  %v4134 = vpop.f32.mrb[0].mxu0
  %4135 = vdwg.mxu0
  %v4136 = vadd.f32 %v3910, %v4051
  %v4137 = vadd.f32 %v3911, %v4054
  %v4138 = vadd.f32 %v3912, %v4059
  %v4139 = vadd.f32 %v3913, %v4062
  %v4140 = vadd.f32 %v3914, %v4067
  %v4141 = vadd.f32 %v3915, %v4070
  %v4142 = vadd.f32 %v3916, %v4075
  %v4143 = vadd.f32 %v3917, %v4078
  %v4144 = vadd.f32 %v3918, %v4083
  %v4145 = vadd.f32 %v3919, %v4086
  %v4146 = vadd.f32 %v3920, %v4091
  %v4147 = vadd.f32 %v3921, %v4094
  %v4148 = vadd.f32 %v3922, %v4099
  %v4149 = vadd.f32 %v3923, %v4102
  %v4150 = vadd.f32 %v3924, %v4107
  %v4151 = vadd.f32 %v3925, %v4110
  %v4152 = vadd.f32 %v3926, %v4115
  %v4153 = vadd.f32 %v3927, %v4118
  %v4154 = vadd.f32 %v3928, %v4123
  %v4155 = vadd.f32 %v3929, %v4126
  %v4156 = vadd.f32 %v3930, %v4131
  %s4157 = scalar_lea.vmem %s10, 32
  %v4158 = vld [vmem:[%s4157] sm:$0xf]
  %v4159 = vld [vmem:[%s4157 + $0x4] sm:$0xf]
  %v4160 = vrot.slane %v3304, 5
  %v4161 = vrot.slane %v3305, 5
  %v4162 = vsel %vm1614, %v4160, %v4161
  %v4163 = vrot.slane %v3306, 5
  %v4164 = vsel %vm1614, %v4161, %v4163
  %v4165 = vrot.slane %v3307, 5
  %v4166 = vsel %vm1614, %v4163, %v4165
  %v4167 = vrot.slane %v3308, 5
  %v4168 = vsel %vm1614, %v4165, %v4167
  %v4169 = vrot.slane %v3309, 5
  %v4170 = vsel %vm1614, %v4167, %v4169
  %v4171 = vrot.slane %v3310, 5
  %v4172 = vsel %vm1614, %v4169, %v4171
  %v4173 = vrot.slane %v3311, 5
  %v4174 = vsel %vm1614, %v4171, %v4173
  %v4175 = vrot.slane %v3312, 5
  %v4176 = vsel %vm1614, %v4173, %v4175
  %v4177 = vrot.slane %v3313, 5
  %v4178 = vsel %vm1614, %v4175, %v4177
  %v4179 = vrot.slane %v3314, 5
  %v4180 = vsel %vm1614, %v4177, %v4179
  %v4183 = vunpack.c.l.b16 %v4158
  %v4184 = vunpack.c.l.b16 %v4159
  %v4185 = vpack.c.b16 %v4184, %v4183
  %v4188 = vsel %vm642, %v4162, 0
  %v4191 = vsel %vm642, %v4164, 0
  %v4194 = vsel %vm642, %v4166, 0
  %v4197 = vsel %vm642, %v4168, 0
  %v4200 = vsel %vm642, %v4170, 0
  %v4203 = vsel %vm642, %v4172, 0
  %v4206 = vsel %vm642, %v4174, 0
  %v4209 = vsel %vm642, %v4176, 0
  %v4212 = vsel %vm642, %v4178, 0
  %v4215 = vsel %vm642, %v4180, 0
  %v4218 = vsel %vm642, %v4179, 0
  %4220 = vmatprep.subr.bf16.mxu0 0
  %4221 = vmatpush1.bf16.msra.mxu0 %v4185
  %4222 = vmatprep.subr.bf16.mxu0 0
  %4223 = vmatpush1.bf16.msra.mxu0 0
  %4224 = vmatprep.subr.bf16.mxu0 0
  %4225 = vmatpush1.bf16.msra.mxu0 0
  %4226 = vmatprep.subr.bf16.mxu0 0
  %4227 = vmatpush1.bf16.msra.mxu0 0
  %4228 = vmatprep.subr.bf16.mxu0 0
  %4229 = vmatpush1.bf16.msra.mxu0 0
  %4230 = vmatprep.subr.bf16.mxu0 0
  %4231 = vmatpush1.bf16.msra.mxu0 0
  %4232 = vmatprep.subr.bf16.mxu0 0
  %4233 = vmatpush1.bf16.msra.mxu0 0
  %4234 = vmatprep.subr.bf16.mxu0 0
  %4235 = vmatpush1.bf16.msra.mxu0 0
  %4236 = vmatprep.subr.bf16.mxu0 0
  %4237 = vmatpush1.bf16.msra.mxu0 0
  %4238 = vmatprep.subr.bf16.mxu0 0
  %4239 = vmatpush1.bf16.msra.mxu0 0
  %4240 = vmatprep.subr.bf16.mxu0 0
  %4241 = vmatpush1.bf16.msra.mxu0 0
  %4242 = vmatprep.subr.bf16.mxu0 0
  %4243 = vmatpush1.bf16.msra.mxu0 0
  %4244 = vmatprep.subr.bf16.mxu0 0
  %4245 = vmatpush1.bf16.msra.mxu0 0
  %4246 = vmatprep.subr.bf16.mxu0 0
  %4247 = vmatpush1.bf16.msra.mxu0 0
  %4248 = vmatprep.subr.bf16.mxu0 0
  %4249 = vmatpush1.bf16.msra.mxu0 0
  %4250 = vmatprep.subr.bf16.mxu0 0
  %4251 = vmatpush1.bf16.msra.mxu0 0
  %4252 = vmatprep.mubr.bf16.mxu0 0
  %4253 = vmatmul.mubr.bf16.gmra.mrb[0].mxu0 %v4188
  %v4254 = vpop.f32.mrb[0].mxu0
  %v4255 = vadd.f32 0.0, %v4254
  %v4256 = vpop.f32.mrb[0].mxu0
  %v4257 = vpop.f32.mrb[0].mxu0
  %v4258 = vadd.f32 0.0, %v4257
  %v4259 = vpop.f32.mrb[0].mxu0
  %4260 = vmatprep.mubr.bf16.mxu0 0
  %4261 = vmatmul.mubr.bf16.gmra.mrb[0].mxu0 %v4191
  %v4262 = vpop.f32.mrb[0].mxu0
  %v4263 = vadd.f32 0.0, %v4262
  %v4264 = vpop.f32.mrb[0].mxu0
  %v4265 = vpop.f32.mrb[0].mxu0
  %v4266 = vadd.f32 0.0, %v4265
  %v4267 = vpop.f32.mrb[0].mxu0
  %4268 = vmatprep.mubr.bf16.mxu0 0
  %4269 = vmatmul.mubr.bf16.gmra.mrb[0].mxu0 %v4194
  %v4270 = vpop.f32.mrb[0].mxu0
  %v4271 = vadd.f32 0.0, %v4270
  %v4272 = vpop.f32.mrb[0].mxu0
  %v4273 = vpop.f32.mrb[0].mxu0
  %v4274 = vadd.f32 0.0, %v4273
  %v4275 = vpop.f32.mrb[0].mxu0
  %4276 = vmatprep.mubr.bf16.mxu0 0
  %4277 = vmatmul.mubr.bf16.gmra.mrb[0].mxu0 %v4197
  %v4278 = vpop.f32.mrb[0].mxu0
  %v4279 = vadd.f32 0.0, %v4278
  %v4280 = vpop.f32.mrb[0].mxu0
  %v4281 = vpop.f32.mrb[0].mxu0
  %v4282 = vadd.f32 0.0, %v4281
  %v4283 = vpop.f32.mrb[0].mxu0
  %4284 = vmatprep.mubr.bf16.mxu0 0
  %4285 = vmatmul.mubr.bf16.gmra.mrb[0].mxu0 %v4200
  %v4286 = vpop.f32.mrb[0].mxu0
  %v4287 = vadd.f32 0.0, %v4286
  %v4288 = vpop.f32.mrb[0].mxu0
  %v4289 = vpop.f32.mrb[0].mxu0
  %v4290 = vadd.f32 0.0, %v4289
  %v4291 = vpop.f32.mrb[0].mxu0
  %4292 = vmatprep.mubr.bf16.mxu0 0
  %4293 = vmatmul.mubr.bf16.gmra.mrb[0].mxu0 %v4203
  %v4294 = vpop.f32.mrb[0].mxu0
  %v4295 = vadd.f32 0.0, %v4294
  %v4296 = vpop.f32.mrb[0].mxu0
  %v4297 = vpop.f32.mrb[0].mxu0
  %v4298 = vadd.f32 0.0, %v4297
  %v4299 = vpop.f32.mrb[0].mxu0
  %4300 = vmatprep.mubr.bf16.mxu0 0
  %4301 = vmatmul.mubr.bf16.gmra.mrb[0].mxu0 %v4206
  %v4302 = vpop.f32.mrb[0].mxu0
  %v4303 = vadd.f32 0.0, %v4302
  %v4304 = vpop.f32.mrb[0].mxu0
  %v4305 = vpop.f32.mrb[0].mxu0
  %v4306 = vadd.f32 0.0, %v4305
  %v4307 = vpop.f32.mrb[0].mxu0
  %4308 = vmatprep.mubr.bf16.mxu0 0
  %4309 = vmatmul.mubr.bf16.gmra.mrb[0].mxu0 %v4209
  %v4310 = vpop.f32.mrb[0].mxu0
  %v4311 = vadd.f32 0.0, %v4310
  %v4312 = vpop.f32.mrb[0].mxu0
  %v4313 = vpop.f32.mrb[0].mxu0
  %v4314 = vadd.f32 0.0, %v4313
  %v4315 = vpop.f32.mrb[0].mxu0
  %4316 = vmatprep.mubr.bf16.mxu0 0
  %4317 = vmatmul.mubr.bf16.gmra.mrb[0].mxu0 %v4212
  %v4318 = vpop.f32.mrb[0].mxu0
  %v4319 = vadd.f32 0.0, %v4318
  %v4320 = vpop.f32.mrb[0].mxu0
  %v4321 = vpop.f32.mrb[0].mxu0
  %v4322 = vadd.f32 0.0, %v4321
  %v4323 = vpop.f32.mrb[0].mxu0
  %4324 = vmatprep.mubr.bf16.mxu0 0
  %4325 = vmatmul.mubr.bf16.gmra.mrb[0].mxu0 %v4215
  %v4326 = vpop.f32.mrb[0].mxu0
  %v4327 = vadd.f32 0.0, %v4326
  %v4328 = vpop.f32.mrb[0].mxu0
  %v4329 = vpop.f32.mrb[0].mxu0
  %v4330 = vadd.f32 0.0, %v4329
  %v4331 = vpop.f32.mrb[0].mxu0
  %4332 = vmatprep.mubr.bf16.mxu0 0
  %4333 = vmatmul.mubr.bf16.gmra.mrb[0].mxu0 %v4218
  %v4334 = vpop.f32.mrb[0].mxu0
  %v4335 = vadd.f32 0.0, %v4334
  %v4336 = vpop.f32.mrb[0].mxu0
  %v4337 = vpop.f32.mrb[0].mxu0
  %v4338 = vpop.f32.mrb[0].mxu0
  %4339 = vdwg.mxu0
  %v4340 = vadd.f32 %v4136, %v4255
  %v4341 = vadd.f32 %v4137, %v4258
  %v4342 = vadd.f32 %v4138, %v4263
  %v4343 = vadd.f32 %v4139, %v4266
  %v4344 = vadd.f32 %v4140, %v4271
  %v4345 = vadd.f32 %v4141, %v4274
  %v4346 = vadd.f32 %v4142, %v4279
  %v4347 = vadd.f32 %v4143, %v4282
  %v4348 = vadd.f32 %v4144, %v4287
  %v4349 = vadd.f32 %v4145, %v4290
  %v4350 = vadd.f32 %v4146, %v4295
  %v4351 = vadd.f32 %v4147, %v4298
  %v4352 = vadd.f32 %v4148, %v4303
  %v4353 = vadd.f32 %v4149, %v4306
  %v4354 = vadd.f32 %v4150, %v4311
  %v4355 = vadd.f32 %v4151, %v4314
  %v4356 = vadd.f32 %v4152, %v4319
  %v4357 = vadd.f32 %v4153, %v4322
  %v4358 = vadd.f32 %v4154, %v4327
  %v4359 = vadd.f32 %v4155, %v4330
  %v4360 = vadd.f32 %v4156, %v4335
  %s4361 = scalar_lea.vmem %s10, 40
  %v4362 = vld [vmem:[%s4361] sm:$0xf]
  %v4363 = vld [vmem:[%s4361 + $0x4] sm:$0xf]
  %v4364 = vrot.slane %v3323, 5
  %v4365 = vrot.slane %v3325, 6
  %v4366 = vor.u32 %v4364, %v4365
  %v4367 = vrot.slane %v3334, 5
  %v4368 = vrot.slane %v3330, 6
  %v4369 = vor.u32 %v4367, %v4368
  %v4370 = vsel %vm1842, %v4366, %v4369
  %v4371 = vrot.slane %v3342, 5
  %v4372 = vrot.slane %v3338, 6
  %v4373 = vor.u32 %v4371, %v4372
  %v4374 = vsel %vm1842, %v4369, %v4373
  %v4375 = vrot.slane %v3350, 5
  %v4376 = vrot.slane %v3346, 6
  %v4377 = vor.u32 %v4375, %v4376
  %v4378 = vsel %vm1842, %v4373, %v4377
  %v4379 = vrot.slane %v3358, 5
  %v4380 = vrot.slane %v3354, 6
  %v4381 = vor.u32 %v4379, %v4380
  %v4382 = vsel %vm1842, %v4377, %v4381
  %v4383 = vrot.slane %v3366, 5
  %v4384 = vrot.slane %v3362, 6
  %v4385 = vor.u32 %v4383, %v4384
  %v4386 = vsel %vm1842, %v4381, %v4385
  %v4387 = vrot.slane %v3374, 5
  %v4388 = vrot.slane %v3370, 6
  %v4389 = vor.u32 %v4387, %v4388
  %v4390 = vsel %vm1842, %v4385, %v4389
  %v4391 = vrot.slane %v3382, 5
  %v4392 = vrot.slane %v3378, 6
  %v4393 = vor.u32 %v4391, %v4392
  %v4394 = vsel %vm1842, %v4389, %v4393
  %v4395 = vrot.slane %v3390, 5
  %v4396 = vrot.slane %v3386, 6
  %v4397 = vor.u32 %v4395, %v4396
  %v4398 = vsel %vm1842, %v4393, %v4397
  %v4399 = vrot.slane %v3398, 5
  %v4400 = vrot.slane %v3394, 6
  %v4401 = vor.u32 %v4399, %v4400
  %v4402 = vsel %vm1842, %v4397, %v4401
  %v4403 = vrot.slane %v3406, 5
  %v4404 = vrot.slane %v3402, 6
  %v4405 = vor.u32 %v4403, %v4404
  %v4406 = vsel %vm1842, %v4401, %v4405
  %v4409 = vunpack.c.l.b16 %v4362
  %v4410 = vunpack.c.l.b16 %v4363
  %v4411 = vpack.c.b16 %v4410, %v4409
  %v4414 = vsel %vm642, %v4370, 0
  %v4417 = vsel %vm642, %v4374, 0
  %v4420 = vsel %vm642, %v4378, 0
  %v4423 = vsel %vm642, %v4382, 0
  %v4426 = vsel %vm642, %v4386, 0
  %v4429 = vsel %vm642, %v4390, 0
  %v4432 = vsel %vm642, %v4394, 0
  %v4435 = vsel %vm642, %v4398, 0
  %v4438 = vsel %vm642, %v4402, 0
  %v4441 = vsel %vm642, %v4406, 0
  %v4444 = vsel %vm642, %v4405, 0
  %4446 = vmatprep.subr.bf16.mxu0 0
  %4447 = vmatpush1.bf16.msra.mxu0 %v4411
  %4448 = vmatprep.subr.bf16.mxu0 0
  %4449 = vmatpush1.bf16.msra.mxu0 0
  %4450 = vmatprep.subr.bf16.mxu0 0
  %4451 = vmatpush1.bf16.msra.mxu0 0
  %4452 = vmatprep.subr.bf16.mxu0 0
  %4453 = vmatpush1.bf16.msra.mxu0 0
  %4454 = vmatprep.subr.bf16.mxu0 0
  %4455 = vmatpush1.bf16.msra.mxu0 0
  %4456 = vmatprep.subr.bf16.mxu0 0
  %4457 = vmatpush1.bf16.msra.mxu0 0
  %4458 = vmatprep.subr.bf16.mxu0 0
  %4459 = vmatpush1.bf16.msra.mxu0 0
  %4460 = vmatprep.subr.bf16.mxu0 0
  %4461 = vmatpush1.bf16.msra.mxu0 0
  %4462 = vmatprep.subr.bf16.mxu0 0
  %4463 = vmatpush1.bf16.msra.mxu0 0
  %4464 = vmatprep.subr.bf16.mxu0 0
  %4465 = vmatpush1.bf16.msra.mxu0 0
  %4466 = vmatprep.subr.bf16.mxu0 0
  %4467 = vmatpush1.bf16.msra.mxu0 0
  %4468 = vmatprep.subr.bf16.mxu0 0
  %4469 = vmatpush1.bf16.msra.mxu0 0
  %4470 = vmatprep.subr.bf16.mxu0 0
  %4471 = vmatpush1.bf16.msra.mxu0 0
  %4472 = vmatprep.subr.bf16.mxu0 0
  %4473 = vmatpush1.bf16.msra.mxu0 0
  %4474 = vmatprep.subr.bf16.mxu0 0
  %4475 = vmatpush1.bf16.msra.mxu0 0
  %4476 = vmatprep.subr.bf16.mxu0 0
  %4477 = vmatpush1.bf16.msra.mxu0 0
  %4478 = vmatprep.mubr.bf16.mxu0 0
  %4479 = vmatmul.mubr.bf16.gmra.mrb[0].mxu0 %v4414
  %v4480 = vpop.f32.mrb[0].mxu0
  %v4481 = vadd.f32 0.0, %v4480
  %v4482 = vpop.f32.mrb[0].mxu0
  %v4483 = vpop.f32.mrb[0].mxu0
  %v4484 = vadd.f32 0.0, %v4483
  %v4485 = vpop.f32.mrb[0].mxu0
  %4486 = vmatprep.mubr.bf16.mxu0 0
  %4487 = vmatmul.mubr.bf16.gmra.mrb[0].mxu0 %v4417
  %v4488 = vpop.f32.mrb[0].mxu0
  %v4489 = vadd.f32 0.0, %v4488
  %v4490 = vpop.f32.mrb[0].mxu0
  %v4491 = vpop.f32.mrb[0].mxu0
  %v4492 = vadd.f32 0.0, %v4491
  %v4493 = vpop.f32.mrb[0].mxu0
  %4494 = vmatprep.mubr.bf16.mxu0 0
  %4495 = vmatmul.mubr.bf16.gmra.mrb[0].mxu0 %v4420
  %v4496 = vpop.f32.mrb[0].mxu0
  %v4497 = vadd.f32 0.0, %v4496
  %v4498 = vpop.f32.mrb[0].mxu0
  %v4499 = vpop.f32.mrb[0].mxu0
  %v4500 = vadd.f32 0.0, %v4499
  %v4501 = vpop.f32.mrb[0].mxu0
  %4502 = vmatprep.mubr.bf16.mxu0 0
  %4503 = vmatmul.mubr.bf16.gmra.mrb[0].mxu0 %v4423
  %v4504 = vpop.f32.mrb[0].mxu0
  %v4505 = vadd.f32 0.0, %v4504
  %v4506 = vpop.f32.mrb[0].mxu0
  %v4507 = vpop.f32.mrb[0].mxu0
  %v4508 = vadd.f32 0.0, %v4507
  %v4509 = vpop.f32.mrb[0].mxu0
  %4510 = vmatprep.mubr.bf16.mxu0 0
  %4511 = vmatmul.mubr.bf16.gmra.mrb[0].mxu0 %v4426
  %v4512 = vpop.f32.mrb[0].mxu0
  %v4513 = vadd.f32 0.0, %v4512
  %v4514 = vpop.f32.mrb[0].mxu0
  %v4515 = vpop.f32.mrb[0].mxu0
  %v4516 = vadd.f32 0.0, %v4515
  %v4517 = vpop.f32.mrb[0].mxu0
  %4518 = vmatprep.mubr.bf16.mxu0 0
  %4519 = vmatmul.mubr.bf16.gmra.mrb[0].mxu0 %v4429
  %v4520 = vpop.f32.mrb[0].mxu0
  %v4521 = vadd.f32 0.0, %v4520
  %v4522 = vpop.f32.mrb[0].mxu0
  %v4523 = vpop.f32.mrb[0].mxu0
  %v4524 = vadd.f32 0.0, %v4523
  %v4525 = vpop.f32.mrb[0].mxu0
  %4526 = vmatprep.mubr.bf16.mxu0 0
  %4527 = vmatmul.mubr.bf16.gmra.mrb[0].mxu0 %v4432
  %v4528 = vpop.f32.mrb[0].mxu0
  %v4529 = vadd.f32 0.0, %v4528
  %v4530 = vpop.f32.mrb[0].mxu0
  %v4531 = vpop.f32.mrb[0].mxu0
  %v4532 = vadd.f32 0.0, %v4531
  %v4533 = vpop.f32.mrb[0].mxu0
  %4534 = vmatprep.mubr.bf16.mxu0 0
  %4535 = vmatmul.mubr.bf16.gmra.mrb[0].mxu0 %v4435
  %v4536 = vpop.f32.mrb[0].mxu0
  %v4537 = vadd.f32 0.0, %v4536
  %v4538 = vpop.f32.mrb[0].mxu0
  %v4539 = vpop.f32.mrb[0].mxu0
  %v4540 = vadd.f32 0.0, %v4539
  %v4541 = vpop.f32.mrb[0].mxu0
  %4542 = vmatprep.mubr.bf16.mxu0 0
  %4543 = vmatmul.mubr.bf16.gmra.mrb[0].mxu0 %v4438
  %v4544 = vpop.f32.mrb[0].mxu0
  %v4545 = vadd.f32 0.0, %v4544
  %v4546 = vpop.f32.mrb[0].mxu0
  %v4547 = vpop.f32.mrb[0].mxu0
  %v4548 = vadd.f32 0.0, %v4547
  %v4549 = vpop.f32.mrb[0].mxu0
  %4550 = vmatprep.mubr.bf16.mxu0 0
  %4551 = vmatmul.mubr.bf16.gmra.mrb[0].mxu0 %v4441
  %v4552 = vpop.f32.mrb[0].mxu0
  %v4553 = vadd.f32 0.0, %v4552
  %v4554 = vpop.f32.mrb[0].mxu0
  %v4555 = vpop.f32.mrb[0].mxu0
  %v4556 = vadd.f32 0.0, %v4555
  %v4557 = vpop.f32.mrb[0].mxu0
  %4558 = vmatprep.mubr.bf16.mxu0 0
  %4559 = vmatmul.mubr.bf16.gmra.mrb[0].mxu0 %v4444
  %v4560 = vpop.f32.mrb[0].mxu0
  %v4561 = vadd.f32 0.0, %v4560
  %v4562 = vpop.f32.mrb[0].mxu0
  %v4563 = vpop.f32.mrb[0].mxu0
  %v4564 = vpop.f32.mrb[0].mxu0
  %4565 = vdwg.mxu0
  %v4566 = vadd.f32 %v4340, %v4481
  %v4567 = vadd.f32 %v4341, %v4484
  %v4568 = vadd.f32 %v4342, %v4489
  %v4569 = vadd.f32 %v4343, %v4492
  %v4570 = vadd.f32 %v4344, %v4497
  %v4571 = vadd.f32 %v4345, %v4500
  %v4572 = vadd.f32 %v4346, %v4505
  %v4573 = vadd.f32 %v4347, %v4508
  %v4574 = vadd.f32 %v4348, %v4513
  %v4575 = vadd.f32 %v4349, %v4516
  %v4576 = vadd.f32 %v4350, %v4521
  %v4577 = vadd.f32 %v4351, %v4524
  %v4578 = vadd.f32 %v4352, %v4529
  %v4579 = vadd.f32 %v4353, %v4532
  %v4580 = vadd.f32 %v4354, %v4537
  %v4581 = vadd.f32 %v4355, %v4540
  %v4582 = vadd.f32 %v4356, %v4545
  %v4583 = vadd.f32 %v4357, %v4548
  %v4584 = vadd.f32 %v4358, %v4553
  %v4585 = vadd.f32 %v4359, %v4556
  %v4586 = vadd.f32 %v4360, %v4561
  %s4587 = scalar_lea.vmem %s10, 48
  %v4588 = vld [vmem:[%s4587] sm:$0xf]
  %v4589 = vld [vmem:[%s4587 + $0x4] sm:$0xf]
  %v4591 = vrot.slane %v3315, 1
  %v4592 = vsel %vm1134, %v3749, %v4591
  %v4595 = vunpack.c.l.b16 %v4588
  %v4596 = vunpack.c.l.b16 %v4589
  %v4597 = vpack.c.b16 %v4596, %v4595
  %v4600 = vsel %vm642, %v4592, 0
  %v4603 = vsel %vm642, %v4591, 0
  %4605 = vmatprep.subr.bf16.mxu0 0
  %4606 = vmatpush1.bf16.msra.mxu0 %v4597
  %4607 = vmatprep.subr.bf16.mxu0 0
  %4608 = vmatpush1.bf16.msra.mxu0 0
  %4609 = vmatprep.subr.bf16.mxu0 0
  %4610 = vmatpush1.bf16.msra.mxu0 0
  %4611 = vmatprep.subr.bf16.mxu0 0
  %4612 = vmatpush1.bf16.msra.mxu0 0
  %4613 = vmatprep.subr.bf16.mxu0 0
  %4614 = vmatpush1.bf16.msra.mxu0 0
  %4615 = vmatprep.subr.bf16.mxu0 0
  %4616 = vmatpush1.bf16.msra.mxu0 0
  %4617 = vmatprep.subr.bf16.mxu0 0
  %4618 = vmatpush1.bf16.msra.mxu0 0
  %4619 = vmatprep.subr.bf16.mxu0 0
  %4620 = vmatpush1.bf16.msra.mxu0 0
  %4621 = vmatprep.subr.bf16.mxu0 0
  %4622 = vmatpush1.bf16.msra.mxu0 0
  %4623 = vmatprep.subr.bf16.mxu0 0
  %4624 = vmatpush1.bf16.msra.mxu0 0
  %4625 = vmatprep.subr.bf16.mxu0 0
  %4626 = vmatpush1.bf16.msra.mxu0 0
  %4627 = vmatprep.subr.bf16.mxu0 0
  %4628 = vmatpush1.bf16.msra.mxu0 0
  %4629 = vmatprep.subr.bf16.mxu0 0
  %4630 = vmatpush1.bf16.msra.mxu0 0
  %4631 = vmatprep.subr.bf16.mxu0 0
  %4632 = vmatpush1.bf16.msra.mxu0 0
  %4633 = vmatprep.subr.bf16.mxu0 0
  %4634 = vmatpush1.bf16.msra.mxu0 0
  %4635 = vmatprep.subr.bf16.mxu0 0
  %4636 = vmatpush1.bf16.msra.mxu0 0
  %4637 = vmatprep.mubr.bf16.mxu0 0
  %4638 = vmatmul.mubr.bf16.gmra.mrb[0].mxu0 %v3761
  %v4639 = vpop.f32.mrb[0].mxu0
  %v4640 = vadd.f32 0.0, %v4639
  %v4641 = vpop.f32.mrb[0].mxu0
  %v4642 = vpop.f32.mrb[0].mxu0
  %v4643 = vadd.f32 0.0, %v4642
  %v4644 = vpop.f32.mrb[0].mxu0
  %4645 = vmatprep.mubr.bf16.mxu0 0
  %4646 = vmatmul.mubr.bf16.gmra.mrb[0].mxu0 %v3764
  %v4647 = vpop.f32.mrb[0].mxu0
  %v4648 = vadd.f32 0.0, %v4647
  %v4649 = vpop.f32.mrb[0].mxu0
  %v4650 = vpop.f32.mrb[0].mxu0
  %v4651 = vadd.f32 0.0, %v4650
  %v4652 = vpop.f32.mrb[0].mxu0
  %4653 = vmatprep.mubr.bf16.mxu0 0
  %4654 = vmatmul.mubr.bf16.gmra.mrb[0].mxu0 %v3767
  %v4655 = vpop.f32.mrb[0].mxu0
  %v4656 = vadd.f32 0.0, %v4655
  %v4657 = vpop.f32.mrb[0].mxu0
  %v4658 = vpop.f32.mrb[0].mxu0
  %v4659 = vadd.f32 0.0, %v4658
  %v4660 = vpop.f32.mrb[0].mxu0
  %4661 = vmatprep.mubr.bf16.mxu0 0
  %4662 = vmatmul.mubr.bf16.gmra.mrb[0].mxu0 %v3770
  %v4663 = vpop.f32.mrb[0].mxu0
  %v4664 = vadd.f32 0.0, %v4663
  %v4665 = vpop.f32.mrb[0].mxu0
  %v4666 = vpop.f32.mrb[0].mxu0
  %v4667 = vadd.f32 0.0, %v4666
  %v4668 = vpop.f32.mrb[0].mxu0
  %4669 = vmatprep.mubr.bf16.mxu0 0
  %4670 = vmatmul.mubr.bf16.gmra.mrb[0].mxu0 %v3773
  %v4671 = vpop.f32.mrb[0].mxu0
  %v4672 = vadd.f32 0.0, %v4671
  %v4673 = vpop.f32.mrb[0].mxu0
  %v4674 = vpop.f32.mrb[0].mxu0
  %v4675 = vadd.f32 0.0, %v4674
  %v4676 = vpop.f32.mrb[0].mxu0
  %4677 = vmatprep.mubr.bf16.mxu0 0
  %4678 = vmatmul.mubr.bf16.gmra.mrb[0].mxu0 %v3776
  %v4679 = vpop.f32.mrb[0].mxu0
  %v4680 = vadd.f32 0.0, %v4679
  %v4681 = vpop.f32.mrb[0].mxu0
  %v4682 = vpop.f32.mrb[0].mxu0
  %v4683 = vadd.f32 0.0, %v4682
  %v4684 = vpop.f32.mrb[0].mxu0
  %4685 = vmatprep.mubr.bf16.mxu0 0
  %4686 = vmatmul.mubr.bf16.gmra.mrb[0].mxu0 %v3779
  %v4687 = vpop.f32.mrb[0].mxu0
  %v4688 = vadd.f32 0.0, %v4687
  %v4689 = vpop.f32.mrb[0].mxu0
  %v4690 = vpop.f32.mrb[0].mxu0
  %v4691 = vadd.f32 0.0, %v4690
  %v4692 = vpop.f32.mrb[0].mxu0
  %4693 = vmatprep.mubr.bf16.mxu0 0
  %4694 = vmatmul.mubr.bf16.gmra.mrb[0].mxu0 %v3782
  %v4695 = vpop.f32.mrb[0].mxu0
  %v4696 = vadd.f32 0.0, %v4695
  %v4697 = vpop.f32.mrb[0].mxu0
  %v4698 = vpop.f32.mrb[0].mxu0
  %v4699 = vadd.f32 0.0, %v4698
  %v4700 = vpop.f32.mrb[0].mxu0
  %4701 = vmatprep.mubr.bf16.mxu0 0
  %4702 = vmatmul.mubr.bf16.gmra.mrb[0].mxu0 %v3785
  %v4703 = vpop.f32.mrb[0].mxu0
  %v4704 = vadd.f32 0.0, %v4703
  %v4705 = vpop.f32.mrb[0].mxu0
  %v4706 = vpop.f32.mrb[0].mxu0
  %v4707 = vadd.f32 0.0, %v4706
  %v4708 = vpop.f32.mrb[0].mxu0
  %4709 = vmatprep.mubr.bf16.mxu0 0
  %4710 = vmatmul.mubr.bf16.gmra.mrb[0].mxu0 %v4600
  %v4711 = vpop.f32.mrb[0].mxu0
  %v4712 = vadd.f32 0.0, %v4711
  %v4713 = vpop.f32.mrb[0].mxu0
  %v4714 = vpop.f32.mrb[0].mxu0
  %v4715 = vadd.f32 0.0, %v4714
  %v4716 = vpop.f32.mrb[0].mxu0
  %4717 = vmatprep.mubr.bf16.mxu0 0
  %4718 = vmatmul.mubr.bf16.gmra.mrb[0].mxu0 %v4603
  %v4719 = vpop.f32.mrb[0].mxu0
  %v4720 = vadd.f32 0.0, %v4719
  %v4721 = vpop.f32.mrb[0].mxu0
  %v4722 = vpop.f32.mrb[0].mxu0
  %v4723 = vpop.f32.mrb[0].mxu0
  %4724 = vdwg.mxu0
  %v4725 = vadd.f32 %v4566, %v4640
  %v4726 = vadd.f32 %v4567, %v4643
  %v4727 = vadd.f32 %v4568, %v4648
  %v4728 = vadd.f32 %v4569, %v4651
  %v4729 = vadd.f32 %v4570, %v4656
  %v4730 = vadd.f32 %v4571, %v4659
  %v4731 = vadd.f32 %v4572, %v4664
  %v4732 = vadd.f32 %v4573, %v4667
  %v4733 = vadd.f32 %v4574, %v4672
  %v4734 = vadd.f32 %v4575, %v4675
  %v4735 = vadd.f32 %v4576, %v4680
  %v4736 = vadd.f32 %v4577, %v4683
  %v4737 = vadd.f32 %v4578, %v4688
  %v4738 = vadd.f32 %v4579, %v4691
  %v4739 = vadd.f32 %v4580, %v4696
  %v4740 = vadd.f32 %v4581, %v4699
  %v4741 = vadd.f32 %v4582, %v4704
  %v4742 = vadd.f32 %v4583, %v4707
  %v4743 = vadd.f32 %v4584, %v4712
  %v4744 = vadd.f32 %v4585, %v4715
  %v4745 = vadd.f32 %v4586, %v4720
  %s4746 = scalar_lea.vmem %s10, 56
  %v4747 = vld [vmem:[%s4746] sm:$0xf]
  %v4748 = vld [vmem:[%s4746 + $0x4] sm:$0xf]
  %v4749 = vrot.slane %v3334, 1
  %v4750 = vrot.slane %v3330, 2
  %v4751 = vor.u32 %v4749, %v4750
  %v4752 = vrot.slane %v3342, 1
  %v4753 = vrot.slane %v3338, 2
  %v4754 = vor.u32 %v4752, %v4753
  %v4755 = vsel %vm2275, %v4751, %v4754
  %v4756 = vrot.slane %v3350, 1
  %v4757 = vrot.slane %v3346, 2
  %v4758 = vor.u32 %v4756, %v4757
  %v4759 = vsel %vm2275, %v4754, %v4758
  %v4760 = vrot.slane %v3358, 1
  %v4761 = vrot.slane %v3354, 2
  %v4762 = vor.u32 %v4760, %v4761
  %v4763 = vsel %vm2275, %v4758, %v4762
  %v4764 = vrot.slane %v3366, 1
  %v4765 = vrot.slane %v3362, 2
  %v4766 = vor.u32 %v4764, %v4765
  %v4767 = vsel %vm2275, %v4762, %v4766
  %v4768 = vrot.slane %v3374, 1
  %v4769 = vrot.slane %v3370, 2
  %v4770 = vor.u32 %v4768, %v4769
  %v4771 = vsel %vm2275, %v4766, %v4770
  %v4772 = vrot.slane %v3382, 1
  %v4773 = vrot.slane %v3378, 2
  %v4774 = vor.u32 %v4772, %v4773
  %v4775 = vsel %vm2275, %v4770, %v4774
  %v4776 = vrot.slane %v3390, 1
  %v4777 = vrot.slane %v3386, 2
  %v4778 = vor.u32 %v4776, %v4777
  %v4779 = vsel %vm2275, %v4774, %v4778
  %v4780 = vrot.slane %v3398, 1
  %v4781 = vrot.slane %v3394, 2
  %v4782 = vor.u32 %v4780, %v4781
  %v4783 = vsel %vm2275, %v4778, %v4782
  %v4784 = vrot.slane %v3406, 1
  %v4785 = vrot.slane %v3402, 2
  %v4786 = vor.u32 %v4784, %v4785
  %v4787 = vsel %vm2275, %v4782, %v4786
  %v4789 = vshrl.u32 %v3315, 16
  %v4791 = vrot.slane %v4789, 1
  %v4792 = vshll.u32 %v3315, 16
  %v4794 = vrot.slane %v4792, 2
  %v4795 = vor.u32 %v4791, %v4794
  %v4796 = vsel %vm2275, %v4786, %v4795
  %v4799 = vunpack.c.l.b16 %v4747
  %v4800 = vunpack.c.l.b16 %v4748
  %v4801 = vpack.c.b16 %v4800, %v4799
  %v4804 = vsel %vm642, %v4755, 0
  %v4807 = vsel %vm642, %v4759, 0
  %v4810 = vsel %vm642, %v4763, 0
  %v4813 = vsel %vm642, %v4767, 0
  %v4816 = vsel %vm642, %v4771, 0
  %v4819 = vsel %vm642, %v4775, 0
  %v4822 = vsel %vm642, %v4779, 0
  %v4825 = vsel %vm642, %v4783, 0
  %v4828 = vsel %vm642, %v4787, 0
  %v4831 = vsel %vm642, %v4796, 0
  %v4834 = vsel %vm642, %v4795, 0
  %4836 = vmatprep.subr.bf16.mxu0 0
  %4837 = vmatpush1.bf16.msra.mxu0 %v4801
  %4838 = vmatprep.subr.bf16.mxu0 0
  %4839 = vmatpush1.bf16.msra.mxu0 0
  %4840 = vmatprep.subr.bf16.mxu0 0
  %4841 = vmatpush1.bf16.msra.mxu0 0
  %4842 = vmatprep.subr.bf16.mxu0 0
  %4843 = vmatpush1.bf16.msra.mxu0 0
  %4844 = vmatprep.subr.bf16.mxu0 0
  %4845 = vmatpush1.bf16.msra.mxu0 0
  %4846 = vmatprep.subr.bf16.mxu0 0
  %4847 = vmatpush1.bf16.msra.mxu0 0
  %4848 = vmatprep.subr.bf16.mxu0 0
  %4849 = vmatpush1.bf16.msra.mxu0 0
  %4850 = vmatprep.subr.bf16.mxu0 0
  %4851 = vmatpush1.bf16.msra.mxu0 0
  %4852 = vmatprep.subr.bf16.mxu0 0
  %4853 = vmatpush1.bf16.msra.mxu0 0
  %4854 = vmatprep.subr.bf16.mxu0 0
  %4855 = vmatpush1.bf16.msra.mxu0 0
  %4856 = vmatprep.subr.bf16.mxu0 0
  %4857 = vmatpush1.bf16.msra.mxu0 0
  %4858 = vmatprep.subr.bf16.mxu0 0
  %4859 = vmatpush1.bf16.msra.mxu0 0
  %4860 = vmatprep.subr.bf16.mxu0 0
  %4861 = vmatpush1.bf16.msra.mxu0 0
  %4862 = vmatprep.subr.bf16.mxu0 0
  %4863 = vmatpush1.bf16.msra.mxu0 0
  %4864 = vmatprep.subr.bf16.mxu0 0
  %4865 = vmatpush1.bf16.msra.mxu0 0
  %4866 = vmatprep.subr.bf16.mxu0 0
  %4867 = vmatpush1.bf16.msra.mxu0 0
  %4868 = vmatprep.mubr.bf16.mxu0 0
  %4869 = vmatmul.mubr.bf16.gmra.mrb[0].mxu0 %v4804
  %v4870 = vpop.f32.mrb[0].mxu0
  %v4871 = vadd.f32 0.0, %v4870
  %v4872 = vpop.f32.mrb[0].mxu0
  %v4873 = vpop.f32.mrb[0].mxu0
  %v4874 = vadd.f32 0.0, %v4873
  %v4875 = vpop.f32.mrb[0].mxu0
  %4876 = vmatprep.mubr.bf16.mxu0 0
  %4877 = vmatmul.mubr.bf16.gmra.mrb[0].mxu0 %v4807
  %v4878 = vpop.f32.mrb[0].mxu0
  %v4879 = vadd.f32 0.0, %v4878
  %v4880 = vpop.f32.mrb[0].mxu0
  %v4881 = vpop.f32.mrb[0].mxu0
  %v4882 = vadd.f32 0.0, %v4881
  %v4883 = vpop.f32.mrb[0].mxu0
  %4884 = vmatprep.mubr.bf16.mxu0 0
  %4885 = vmatmul.mubr.bf16.gmra.mrb[0].mxu0 %v4810
  %v4886 = vpop.f32.mrb[0].mxu0
  %v4887 = vadd.f32 0.0, %v4886
  %v4888 = vpop.f32.mrb[0].mxu0
  %v4889 = vpop.f32.mrb[0].mxu0
  %v4890 = vadd.f32 0.0, %v4889
  %v4891 = vpop.f32.mrb[0].mxu0
  %4892 = vmatprep.mubr.bf16.mxu0 0
  %4893 = vmatmul.mubr.bf16.gmra.mrb[0].mxu0 %v4813
  %v4894 = vpop.f32.mrb[0].mxu0
  %v4895 = vadd.f32 0.0, %v4894
  %v4896 = vpop.f32.mrb[0].mxu0
  %v4897 = vpop.f32.mrb[0].mxu0
  %v4898 = vadd.f32 0.0, %v4897
  %v4899 = vpop.f32.mrb[0].mxu0
  %4900 = vmatprep.mubr.bf16.mxu0 0
  %4901 = vmatmul.mubr.bf16.gmra.mrb[0].mxu0 %v4816
  %v4902 = vpop.f32.mrb[0].mxu0
  %v4903 = vadd.f32 0.0, %v4902
  %v4904 = vpop.f32.mrb[0].mxu0
  %v4905 = vpop.f32.mrb[0].mxu0
  %v4906 = vadd.f32 0.0, %v4905
  %v4907 = vpop.f32.mrb[0].mxu0
  %4908 = vmatprep.mubr.bf16.mxu0 0
  %4909 = vmatmul.mubr.bf16.gmra.mrb[0].mxu0 %v4819
  %v4910 = vpop.f32.mrb[0].mxu0
  %v4911 = vadd.f32 0.0, %v4910
  %v4912 = vpop.f32.mrb[0].mxu0
  %v4913 = vpop.f32.mrb[0].mxu0
  %v4914 = vadd.f32 0.0, %v4913
  %v4915 = vpop.f32.mrb[0].mxu0
  %4916 = vmatprep.mubr.bf16.mxu0 0
  %4917 = vmatmul.mubr.bf16.gmra.mrb[0].mxu0 %v4822
  %v4918 = vpop.f32.mrb[0].mxu0
  %v4919 = vadd.f32 0.0, %v4918
  %v4920 = vpop.f32.mrb[0].mxu0
  %v4921 = vpop.f32.mrb[0].mxu0
  %v4922 = vadd.f32 0.0, %v4921
  %v4923 = vpop.f32.mrb[0].mxu0
  %4924 = vmatprep.mubr.bf16.mxu0 0
  %4925 = vmatmul.mubr.bf16.gmra.mrb[0].mxu0 %v4825
  %v4926 = vpop.f32.mrb[0].mxu0
  %v4927 = vadd.f32 0.0, %v4926
  %v4928 = vpop.f32.mrb[0].mxu0
  %v4929 = vpop.f32.mrb[0].mxu0
  %v4930 = vadd.f32 0.0, %v4929
  %v4931 = vpop.f32.mrb[0].mxu0
  %4932 = vmatprep.mubr.bf16.mxu0 0
  %4933 = vmatmul.mubr.bf16.gmra.mrb[0].mxu0 %v4828
  %v4934 = vpop.f32.mrb[0].mxu0
  %v4935 = vadd.f32 0.0, %v4934
  %v4936 = vpop.f32.mrb[0].mxu0
  %v4937 = vpop.f32.mrb[0].mxu0
  %v4938 = vadd.f32 0.0, %v4937
  %v4939 = vpop.f32.mrb[0].mxu0
  %4940 = vmatprep.mubr.bf16.mxu0 0
  %4941 = vmatmul.mubr.bf16.gmra.mrb[0].mxu0 %v4831
  %v4942 = vpop.f32.mrb[0].mxu0
  %v4943 = vadd.f32 0.0, %v4942
  %v4944 = vpop.f32.mrb[0].mxu0
  %v4945 = vpop.f32.mrb[0].mxu0
  %v4946 = vadd.f32 0.0, %v4945
  %v4947 = vpop.f32.mrb[0].mxu0
  %4948 = vmatprep.mubr.bf16.mxu0 0
  %4949 = vmatmul.mubr.bf16.gmra.mrb[0].mxu0 %v4834
  %v4950 = vpop.f32.mrb[0].mxu0
  %v4951 = vadd.f32 0.0, %v4950
  %v4952 = vpop.f32.mrb[0].mxu0
  %v4953 = vpop.f32.mrb[0].mxu0
  %v4954 = vpop.f32.mrb[0].mxu0
  %4955 = vdwg.mxu0
  %v4956 = vadd.f32 %v4725, %v4871
  %v4957 = vadd.f32 %v4726, %v4874
  %v4958 = vadd.f32 %v4727, %v4879
  %v4959 = vadd.f32 %v4728, %v4882
  %v4960 = vadd.f32 %v4729, %v4887
  %v4961 = vadd.f32 %v4730, %v4890
  %v4962 = vadd.f32 %v4731, %v4895
  %v4963 = vadd.f32 %v4732, %v4898
  %v4964 = vadd.f32 %v4733, %v4903
  %v4965 = vadd.f32 %v4734, %v4906
  %v4966 = vadd.f32 %v4735, %v4911
  %v4967 = vadd.f32 %v4736, %v4914
  %v4968 = vadd.f32 %v4737, %v4919
  %v4969 = vadd.f32 %v4738, %v4922
  %v4970 = vadd.f32 %v4739, %v4927
  %v4971 = vadd.f32 %v4740, %v4930
  %v4972 = vadd.f32 %v4741, %v4935
  %v4973 = vadd.f32 %v4742, %v4938
  %v4974 = vadd.f32 %v4743, %v4943
  %v4975 = vadd.f32 %v4744, %v4946
  %v4976 = vadd.f32 %v4745, %v4951
  %s4977 = scalar_lea.vmem %s10, 64
  %v4978 = vld [vmem:[%s4977] sm:$0xf]
  %v4979 = vld [vmem:[%s4977 + $0x4] sm:$0xf]
  %v4980 = vrot.slane %v3305, 2
  %v4981 = vrot.slane %v3306, 2
  %v4982 = vsel %vm2529, %v4980, %v4981
  %v4983 = vrot.slane %v3307, 2
  %v4984 = vsel %vm2529, %v4981, %v4983
  %v4985 = vrot.slane %v3308, 2
  %v4986 = vsel %vm2529, %v4983, %v4985
  %v4987 = vrot.slane %v3309, 2
  %v4988 = vsel %vm2529, %v4985, %v4987
  %v4989 = vrot.slane %v3310, 2
  %v4990 = vsel %vm2529, %v4987, %v4989
  %v4991 = vrot.slane %v3311, 2
  %v4992 = vsel %vm2529, %v4989, %v4991
  %v4993 = vrot.slane %v3312, 2
  %v4994 = vsel %vm2529, %v4991, %v4993
  %v4995 = vrot.slane %v3313, 2
  %v4996 = vsel %vm2529, %v4993, %v4995
  %v4997 = vrot.slane %v3314, 2
  %v4998 = vsel %vm2529, %v4995, %v4997
  %v4999 = vrot.slane %v3315, 2
  %v5000 = vsel %vm2529, %v4997, %v4999
  %v5003 = vunpack.c.l.b16 %v4978
  %v5004 = vunpack.c.l.b16 %v4979
  %v5005 = vpack.c.b16 %v5004, %v5003
  %v5008 = vsel %vm642, %v4982, 0
  %v5011 = vsel %vm642, %v4984, 0
  %v5014 = vsel %vm642, %v4986, 0
  %v5017 = vsel %vm642, %v4988, 0
  %v5020 = vsel %vm642, %v4990, 0
  %v5023 = vsel %vm642, %v4992, 0
  %v5026 = vsel %vm642, %v4994, 0
  %v5029 = vsel %vm642, %v4996, 0
  %v5032 = vsel %vm642, %v4998, 0
  %v5035 = vsel %vm642, %v5000, 0
  %v5038 = vsel %vm642, %v4999, 0
  %5040 = vmatprep.subr.bf16.mxu0 0
  %5041 = vmatpush1.bf16.msra.mxu0 %v5005
  %5042 = vmatprep.subr.bf16.mxu0 0
  %5043 = vmatpush1.bf16.msra.mxu0 0
  %5044 = vmatprep.subr.bf16.mxu0 0
  %5045 = vmatpush1.bf16.msra.mxu0 0
  %5046 = vmatprep.subr.bf16.mxu0 0
  %5047 = vmatpush1.bf16.msra.mxu0 0
  %5048 = vmatprep.subr.bf16.mxu0 0
  %5049 = vmatpush1.bf16.msra.mxu0 0
  %5050 = vmatprep.subr.bf16.mxu0 0
  %5051 = vmatpush1.bf16.msra.mxu0 0
  %5052 = vmatprep.subr.bf16.mxu0 0
  %5053 = vmatpush1.bf16.msra.mxu0 0
  %5054 = vmatprep.subr.bf16.mxu0 0
  %5055 = vmatpush1.bf16.msra.mxu0 0
  %5056 = vmatprep.subr.bf16.mxu0 0
  %5057 = vmatpush1.bf16.msra.mxu0 0
  %5058 = vmatprep.subr.bf16.mxu0 0
  %5059 = vmatpush1.bf16.msra.mxu0 0
  %5060 = vmatprep.subr.bf16.mxu0 0
  %5061 = vmatpush1.bf16.msra.mxu0 0
  %5062 = vmatprep.subr.bf16.mxu0 0
  %5063 = vmatpush1.bf16.msra.mxu0 0
  %5064 = vmatprep.subr.bf16.mxu0 0
  %5065 = vmatpush1.bf16.msra.mxu0 0
  %5066 = vmatprep.subr.bf16.mxu0 0
  %5067 = vmatpush1.bf16.msra.mxu0 0
  %5068 = vmatprep.subr.bf16.mxu0 0
  %5069 = vmatpush1.bf16.msra.mxu0 0
  %5070 = vmatprep.subr.bf16.mxu0 0
  %5071 = vmatpush1.bf16.msra.mxu0 0
  %5072 = vmatprep.mubr.bf16.mxu0 0
  %5073 = vmatmul.mubr.bf16.gmra.mrb[0].mxu0 %v5008
  %v5074 = vpop.f32.mrb[0].mxu0
  %v5075 = vadd.f32 0.0, %v5074
  %v5076 = vpop.f32.mrb[0].mxu0
  %v5077 = vpop.f32.mrb[0].mxu0
  %v5078 = vadd.f32 0.0, %v5077
  %v5079 = vpop.f32.mrb[0].mxu0
  %5080 = vmatprep.mubr.bf16.mxu0 0
  %5081 = vmatmul.mubr.bf16.gmra.mrb[0].mxu0 %v5011
  %v5082 = vpop.f32.mrb[0].mxu0
  %v5083 = vadd.f32 0.0, %v5082
  %v5084 = vpop.f32.mrb[0].mxu0
  %v5085 = vpop.f32.mrb[0].mxu0
  %v5086 = vadd.f32 0.0, %v5085
  %v5087 = vpop.f32.mrb[0].mxu0
  %5088 = vmatprep.mubr.bf16.mxu0 0
  %5089 = vmatmul.mubr.bf16.gmra.mrb[0].mxu0 %v5014
  %v5090 = vpop.f32.mrb[0].mxu0
  %v5091 = vadd.f32 0.0, %v5090
  %v5092 = vpop.f32.mrb[0].mxu0
  %v5093 = vpop.f32.mrb[0].mxu0
  %v5094 = vadd.f32 0.0, %v5093
  %v5095 = vpop.f32.mrb[0].mxu0
  %5096 = vmatprep.mubr.bf16.mxu0 0
  %5097 = vmatmul.mubr.bf16.gmra.mrb[0].mxu0 %v5017
  %v5098 = vpop.f32.mrb[0].mxu0
  %v5099 = vadd.f32 0.0, %v5098
  %v5100 = vpop.f32.mrb[0].mxu0
  %v5101 = vpop.f32.mrb[0].mxu0
  %v5102 = vadd.f32 0.0, %v5101
  %v5103 = vpop.f32.mrb[0].mxu0
  %5104 = vmatprep.mubr.bf16.mxu0 0
  %5105 = vmatmul.mubr.bf16.gmra.mrb[0].mxu0 %v5020
  %v5106 = vpop.f32.mrb[0].mxu0
  %v5107 = vadd.f32 0.0, %v5106
  %v5108 = vpop.f32.mrb[0].mxu0
  %v5109 = vpop.f32.mrb[0].mxu0
  %v5110 = vadd.f32 0.0, %v5109
  %v5111 = vpop.f32.mrb[0].mxu0
  %5112 = vmatprep.mubr.bf16.mxu0 0
  %5113 = vmatmul.mubr.bf16.gmra.mrb[0].mxu0 %v5023
  %v5114 = vpop.f32.mrb[0].mxu0
  %v5115 = vadd.f32 0.0, %v5114
  %v5116 = vpop.f32.mrb[0].mxu0
  %v5117 = vpop.f32.mrb[0].mxu0
  %v5118 = vadd.f32 0.0, %v5117
  %v5119 = vpop.f32.mrb[0].mxu0
  %5120 = vmatprep.mubr.bf16.mxu0 0
  %5121 = vmatmul.mubr.bf16.gmra.mrb[0].mxu0 %v5026
  %v5122 = vpop.f32.mrb[0].mxu0
  %v5123 = vadd.f32 0.0, %v5122
  %v5124 = vpop.f32.mrb[0].mxu0
  %v5125 = vpop.f32.mrb[0].mxu0
  %v5126 = vadd.f32 0.0, %v5125
  %v5127 = vpop.f32.mrb[0].mxu0
  %5128 = vmatprep.mubr.bf16.mxu0 0
  %5129 = vmatmul.mubr.bf16.gmra.mrb[0].mxu0 %v5029
  %v5130 = vpop.f32.mrb[0].mxu0
  %v5131 = vadd.f32 0.0, %v5130
  %v5132 = vpop.f32.mrb[0].mxu0
  %v5133 = vpop.f32.mrb[0].mxu0
  %v5134 = vadd.f32 0.0, %v5133
  %v5135 = vpop.f32.mrb[0].mxu0
  %5136 = vmatprep.mubr.bf16.mxu0 0
  %5137 = vmatmul.mubr.bf16.gmra.mrb[0].mxu0 %v5032
  %v5138 = vpop.f32.mrb[0].mxu0
  %v5139 = vadd.f32 0.0, %v5138
  %v5140 = vpop.f32.mrb[0].mxu0
  %v5141 = vpop.f32.mrb[0].mxu0
  %v5142 = vadd.f32 0.0, %v5141
  %v5143 = vpop.f32.mrb[0].mxu0
  %5144 = vmatprep.mubr.bf16.mxu0 0
  %5145 = vmatmul.mubr.bf16.gmra.mrb[0].mxu0 %v5035
  %v5146 = vpop.f32.mrb[0].mxu0
  %v5147 = vadd.f32 0.0, %v5146
  %v5148 = vpop.f32.mrb[0].mxu0
  %v5149 = vpop.f32.mrb[0].mxu0
  %v5150 = vadd.f32 0.0, %v5149
  %v5151 = vpop.f32.mrb[0].mxu0
  %5152 = vmatprep.mubr.bf16.mxu0 0
  %5153 = vmatmul.mubr.bf16.gmra.mrb[0].mxu0 %v5038
  %v5154 = vpop.f32.mrb[0].mxu0
  %v5155 = vadd.f32 0.0, %v5154
  %v5156 = vpop.f32.mrb[0].mxu0
  %v5157 = vpop.f32.mrb[0].mxu0
  %v5158 = vpop.f32.mrb[0].mxu0
  %5159 = vdwg.mxu0
  %v5160 = vadd.f32 %v4956, %v5075
  %v5161 = vadd.f32 %v4957, %v5078
  %v5162 = vadd.f32 %v4958, %v5083
  %v5163 = vadd.f32 %v4959, %v5086
  %v5164 = vadd.f32 %v4960, %v5091
  %v5165 = vadd.f32 %v4961, %v5094
  %v5166 = vadd.f32 %v4962, %v5099
  %v5167 = vadd.f32 %v4963, %v5102
  %v5168 = vadd.f32 %v4964, %v5107
  %v5169 = vadd.f32 %v4965, %v5110
  %v5170 = vadd.f32 %v4966, %v5115
  %v5171 = vadd.f32 %v4967, %v5118
  %v5172 = vadd.f32 %v4968, %v5123
  %v5173 = vadd.f32 %v4969, %v5126
  %v5174 = vadd.f32 %v4970, %v5131
  %v5175 = vadd.f32 %v4971, %v5134
  %v5176 = vadd.f32 %v4972, %v5139
  %v5177 = vadd.f32 %v4973, %v5142
  %v5178 = vadd.f32 %v4974, %v5147
  %v5179 = vadd.f32 %v4975, %v5150
  %v5180 = vadd.f32 %v4976, %v5155
  %v5182 = vlaneseq
  %v5183 = vshrl.u32 %v5182, 7
  %v5184 = vsub.s32 0, %v5183
  %v5185 = vrot.slane %v3316, %v5184
  %v5187 = vadd.f32 %v5160, %v5185
  %v5188 = vadd.f32 %v5161, %v5185
  %v5189 = vadd.f32 %v5162, %v5185
  %v5190 = vadd.f32 %v5163, %v5185
  %v5191 = vadd.f32 %v5164, %v5185
  %v5192 = vadd.f32 %v5165, %v5185
  %v5193 = vadd.f32 %v5166, %v5185
  %v5194 = vadd.f32 %v5167, %v5185
  %v5195 = vadd.f32 %v5168, %v5185
  %v5196 = vadd.f32 %v5169, %v5185
  %v5197 = vadd.f32 %v5170, %v5185
  %v5198 = vadd.f32 %v5171, %v5185
  %v5199 = vadd.f32 %v5172, %v5185
  %v5200 = vadd.f32 %v5173, %v5185
  %v5201 = vadd.f32 %v5174, %v5185
  %v5202 = vadd.f32 %v5175, %v5185
  %v5203 = vadd.f32 %v5176, %v5185
  %v5204 = vadd.f32 %v5177, %v5185
  %v5205 = vadd.f32 %v5178, %v5185
  %v5206 = vadd.f32 %v5179, %v5185
  %v5207 = vadd.f32 %v5180, %v5185
  %v5208 = vld [vmem:[%s12] sm:$0x1]
  %v5209 = vld [vmem:[%s13] sm:$0x1]
  %v5210 = vrot.slane %v369, 4
  %v5211 = vrot.slane %v374, 4
  %v5212 = vsel %vm215, %v5210, %v5211
  %v5213 = vrot.slane %v379, 4
  %v5214 = vsel %vm215, %v5211, %v5213
  %v5215 = vrot.slane %v384, 4
  %v5216 = vsel %vm215, %v5213, %v5215
  %v5217 = vrot.slane %v389, 4
  %v5218 = vsel %vm215, %v5215, %v5217
  %v5219 = vrot.slane %v394, 4
  %v5220 = vsel %vm215, %v5217, %v5219
  %v5221 = vrot.slane %v399, 4
  %v5222 = vsel %vm215, %v5219, %v5221
  %v5223 = vrot.slane %v404, 4
  %v5224 = vsel %vm215, %v5221, %v5223
  %v5225 = vrot.slane %v409, 4
  %v5226 = vsel %vm215, %v5223, %v5225
  %v5227 = vrot.slane %v414, 4
  %v5228 = vsel %vm215, %v5225, %v5227
  %v5229 = vrot.slane %v419, 4
  %v5230 = vsel %vm215, %v5227, %v5229
  %v5231 = vrot.slane %v424, 4
  %v5232 = vsel %vm215, %v5229, %v5231
  %v5233 = vrot.slane %v429, 4
  %v5234 = vsel %vm215, %v5231, %v5233
  %v5235 = vrot.slane %v434, 4
  %v5236 = vsel %vm215, %v5233, %v5235
  %v5237 = vrot.slane %v439, 4
  %v5238 = vsel %vm215, %v5235, %v5237
  %v5239 = vrot.slane %v444, 4
  %v5240 = vsel %vm215, %v5237, %v5239
  %v5241 = vrot.slane %v449, 4
  %v5242 = vsel %vm215, %v5239, %v5241
  %v5243 = vrot.slane %v454, 4
  %v5244 = vsel %vm215, %v5241, %v5243
  %v5245 = vrot.slane %v459, 4
  %v5246 = vsel %vm215, %v5243, %v5245
  %v5247 = vrot.slane %v464, 4
  %v5248 = vsel %vm215, %v5245, %v5247
  %v5249 = vrot.slane %v469, 4
  %v5250 = vsel %vm215, %v5247, %v5249
  %v5272 = vmul.f32 %v5187, %v5212
  %v5273 = vmul.f32 %v5188, %v5214
  %v5274 = vmul.f32 %v5189, %v5216
  %v5275 = vmul.f32 %v5190, %v5218
  %v5276 = vmul.f32 %v5191, %v5220
  %v5277 = vmul.f32 %v5192, %v5222
  %v5278 = vmul.f32 %v5193, %v5224
  %v5279 = vmul.f32 %v5194, %v5226
  %v5280 = vmul.f32 %v5195, %v5228
  %v5281 = vmul.f32 %v5196, %v5230
  %v5282 = vmul.f32 %v5197, %v5232
  %v5283 = vmul.f32 %v5198, %v5234
  %v5284 = vmul.f32 %v5199, %v5236
  %v5285 = vmul.f32 %v5200, %v5238
  %v5286 = vmul.f32 %v5201, %v5240
  %v5287 = vmul.f32 %v5202, %v5242
  %v5288 = vmul.f32 %v5203, %v5244
  %v5289 = vmul.f32 %v5204, %v5246
  %v5290 = vmul.f32 %v5205, %v5248
  %v5291 = vmul.f32 %v5206, %v5250
  %v5292 = vmul.f32 %v5207, %v5249
  %v5293 = vsel %vm642, %v5272, 0.0
  %v5294 = vsel %vm642, %v5273, 0.0
  %v5295 = vadd.f32 %v5293, %v5294
  %v5296 = vsel %vm642, %v5274, 0.0
  %v5297 = vadd.f32 %v5295, %v5296
  %v5298 = vsel %vm642, %v5275, 0.0
  %v5299 = vadd.f32 %v5297, %v5298
  %v5300 = vsel %vm642, %v5276, 0.0
  %v5301 = vadd.f32 %v5299, %v5300
  %v5302 = vsel %vm642, %v5277, 0.0
  %v5303 = vadd.f32 %v5301, %v5302
  %v5304 = vsel %vm642, %v5278, 0.0
  %v5305 = vadd.f32 %v5303, %v5304
  %v5306 = vsel %vm642, %v5279, 0.0
  %v5307 = vadd.f32 %v5305, %v5306
  %v5308 = vsel %vm642, %v5280, 0.0
  %v5309 = vadd.f32 %v5307, %v5308
  %v5310 = vsel %vm642, %v5281, 0.0
  %v5311 = vadd.f32 %v5309, %v5310
  %v5312 = vsel %vm642, %v5282, 0.0
  %v5313 = vadd.f32 %v5311, %v5312
  %v5314 = vsel %vm642, %v5283, 0.0
  %v5315 = vadd.f32 %v5313, %v5314
  %v5316 = vsel %vm642, %v5284, 0.0
  %v5317 = vadd.f32 %v5315, %v5316
  %v5318 = vsel %vm642, %v5285, 0.0
  %v5319 = vadd.f32 %v5317, %v5318
  %v5320 = vsel %vm642, %v5286, 0.0
  %v5321 = vadd.f32 %v5319, %v5320
  %v5322 = vsel %vm642, %v5287, 0.0
  %v5323 = vadd.f32 %v5321, %v5322
  %v5324 = vsel %vm642, %v5288, 0.0
  %v5325 = vadd.f32 %v5323, %v5324
  %v5326 = vsel %vm642, %v5289, 0.0
  %v5327 = vadd.f32 %v5325, %v5326
  %v5328 = vsel %vm642, %v5290, 0.0
  %v5329 = vadd.f32 %v5327, %v5328
  %v5330 = vsel %vm642, %v5291, 0.0
  %v5331 = vadd.f32 %v5329, %v5330
  %vm5332 = vcmask 123904
  %v5333 = vsel %vm5332, %v5292, 0.0
  %v5334 = vadd.f32 %v5331, %v5333
  %v5335 = vrot.slane %v5334, 4
  %v5336 = vadd.f32 %v5334, %v5335
  %v5337 = vrot.slane %v5336, 2
  %v5338 = vadd.f32 %v5336, %v5337
  %v5339 = vrot.slane %v5338, 1
  %v5340 = vadd.f32 %v5338, %v5339
  %v5342 = vsel %vm642, %v5340, 0
  %5344 = vmatprep.subr.mxu0 0.0
  %5345 = vmatpush1.msra.mxu0 %v74
  %5346 = vmatprep.subr.mxu0 0.0
  %5347 = vmatpush1.msra.mxu0 %v75
  %5348 = vmatprep.subr.mxu0 0.0
  %5349 = vmatpush1.msra.mxu0 0.0
  %5350 = vmatprep.subr.mxu0 0.0
  %5351 = vmatpush1.msra.mxu0 0.0
  %5352 = vmatprep.subr.mxu0 0.0
  %5353 = vmatpush1.msra.mxu0 0.0
  %5354 = vmatprep.subr.mxu0 0.0
  %5355 = vmatpush1.msra.mxu0 0.0
  %5356 = vmatprep.subr.mxu0 0.0
  %5357 = vmatpush1.msra.mxu0 0.0
  %5358 = vmatprep.subr.mxu0 0.0
  %5359 = vmatpush1.msra.mxu0 0.0
  %5360 = vmatprep.subr.mxu0 0.0
  %5361 = vmatpush1.msra.mxu0 0.0
  %5362 = vmatprep.subr.mxu0 0.0
  %5363 = vmatpush1.msra.mxu0 0.0
  %5364 = vmatprep.subr.mxu0 0.0
  %5365 = vmatpush1.msra.mxu0 0.0
  %5366 = vmatprep.subr.mxu0 0.0
  %5367 = vmatpush1.msra.mxu0 0.0
  %5368 = vmatprep.subr.mxu0 0.0
  %5369 = vmatpush1.msra.mxu0 0.0
  %5370 = vmatprep.subr.mxu0 0.0
  %5371 = vmatpush1.msra.mxu0 0.0
  %5372 = vmatprep.subr.mxu0 0.0
  %5373 = vmatpush1.msra.mxu0 0.0
  %5374 = vmatprep.subr.mxu0 0.0
  %5375 = vmatpush1.msra.mxu0 0.0
  %5376 = vmatprep.subr.mxu0 0.0
  %5377 = vmatpush1.msra.mxu0 0.0
  %5378 = vmatprep.subr.mxu0 0.0
  %5379 = vmatpush1.msra.mxu0 0.0
  %5380 = vmatprep.subr.mxu0 0.0
  %5381 = vmatpush1.msra.mxu0 0.0
  %5382 = vmatprep.subr.mxu0 0.0
  %5383 = vmatpush1.msra.mxu0 0.0
  %5384 = vmatprep.subr.mxu0 0.0
  %5385 = vmatpush1.msra.mxu0 0.0
  %5386 = vmatprep.subr.mxu0 0.0
  %5387 = vmatpush1.msra.mxu0 0.0
  %5388 = vmatprep.subr.mxu0 0.0
  %5389 = vmatpush1.msra.mxu0 0.0
  %5390 = vmatprep.subr.mxu0 0.0
  %5391 = vmatpush1.msra.mxu0 0.0
  %5392 = vmatprep.subr.mxu0 0.0
  %5393 = vmatpush1.msra.mxu0 0.0
  %5394 = vmatprep.subr.mxu0 0.0
  %5395 = vmatpush1.msra.mxu0 0.0
  %5396 = vmatprep.subr.mxu0 0.0
  %5397 = vmatpush1.msra.mxu0 0.0
  %5398 = vmatprep.subr.mxu0 0.0
  %5399 = vmatpush1.msra.mxu0 0.0
  %5400 = vmatprep.subr.mxu0 0.0
  %5401 = vmatpush1.msra.mxu0 0.0
  %5402 = vmatprep.subr.mxu0 0.0
  %5403 = vmatpush1.msra.mxu0 0.0
  %5404 = vmatprep.subr.mxu0 0.0
  %5405 = vmatpush1.msra.mxu0 0.0
  %5406 = vmatprep.subr.mxu0 0.0
  %5407 = vmatpush1.msra.mxu0 0.0
  %5408 = vmatprep.mubr.f32.mxu0 0.0
  %5409 = vmatmul.mubr.f32.gmra.mrb[0].mxu0 %v5342
  %v5410 = vpop.f32.mrb[0].mxu0
  %v5411 = vadd.f32 0.0, %v5410
  %v5412 = vpop.f32.mrb[0].mxu0
  %5413 = vdwg.mxu0
  %v5414 = vmul.f32 %v5411, 0.001953125
  %v5415 = vlaneseq
  %v5416 = vshrl.u32 %v5415, 7
  %v5417 = vsub.s32 0, %v5416
  %v5418 = vrot.slane %v5414, %v5417
  %v5419 = vsub.f32 %v5272, %v5418
  %v5420 = vsub.f32 %v5273, %v5418
  %v5421 = vsub.f32 %v5274, %v5418
  %v5422 = vsub.f32 %v5275, %v5418
  %v5423 = vsub.f32 %v5276, %v5418
  %v5424 = vsub.f32 %v5277, %v5418
  %v5425 = vsub.f32 %v5278, %v5418
  %v5426 = vsub.f32 %v5279, %v5418
  %v5427 = vsub.f32 %v5280, %v5418
  %v5428 = vsub.f32 %v5281, %v5418
  %v5429 = vsub.f32 %v5282, %v5418
  %v5430 = vsub.f32 %v5283, %v5418
  %v5431 = vsub.f32 %v5284, %v5418
  %v5432 = vsub.f32 %v5285, %v5418
  %v5433 = vsub.f32 %v5286, %v5418
  %v5434 = vsub.f32 %v5287, %v5418
  %v5435 = vsub.f32 %v5288, %v5418
  %v5436 = vsub.f32 %v5289, %v5418
  %v5437 = vsub.f32 %v5290, %v5418
  %v5438 = vsub.f32 %v5291, %v5418
  %v5439 = vsub.f32 %v5292, %v5418
  %v5440 = vmul.f32 %v5419, %v5212
  %v5441 = vmul.f32 %v5420, %v5214
  %v5442 = vmul.f32 %v5421, %v5216
  %v5443 = vmul.f32 %v5422, %v5218
  %v5444 = vmul.f32 %v5423, %v5220
  %v5445 = vmul.f32 %v5424, %v5222
  %v5446 = vmul.f32 %v5425, %v5224
  %v5447 = vmul.f32 %v5426, %v5226
  %v5448 = vmul.f32 %v5427, %v5228
  %v5449 = vmul.f32 %v5428, %v5230
  %v5450 = vmul.f32 %v5429, %v5232
  %v5451 = vmul.f32 %v5430, %v5234
  %v5452 = vmul.f32 %v5431, %v5236
  %v5453 = vmul.f32 %v5432, %v5238
  %v5454 = vmul.f32 %v5433, %v5240
  %v5455 = vmul.f32 %v5434, %v5242
  %v5456 = vmul.f32 %v5435, %v5244
  %v5457 = vmul.f32 %v5436, %v5246
  %v5458 = vmul.f32 %v5437, %v5248
  %v5459 = vmul.f32 %v5438, %v5250
  %v5460 = vmul.f32 %v5439, %v5249
  %v5461 = vmul.f32 %v5440, %v5440
  %v5462 = vmul.f32 %v5441, %v5441
  %v5463 = vmul.f32 %v5442, %v5442
  %v5464 = vmul.f32 %v5443, %v5443
  %v5465 = vmul.f32 %v5444, %v5444
  %v5466 = vmul.f32 %v5445, %v5445
  %v5467 = vmul.f32 %v5446, %v5446
  %v5468 = vmul.f32 %v5447, %v5447
  %v5469 = vmul.f32 %v5448, %v5448
  %v5470 = vmul.f32 %v5449, %v5449
  %v5471 = vmul.f32 %v5450, %v5450
  %v5472 = vmul.f32 %v5451, %v5451
  %v5473 = vmul.f32 %v5452, %v5452
  %v5474 = vmul.f32 %v5453, %v5453
  %v5475 = vmul.f32 %v5454, %v5454
  %v5476 = vmul.f32 %v5455, %v5455
  %v5477 = vmul.f32 %v5456, %v5456
  %v5478 = vmul.f32 %v5457, %v5457
  %v5479 = vmul.f32 %v5458, %v5458
  %v5480 = vmul.f32 %v5459, %v5459
  %v5481 = vmul.f32 %v5460, %v5460
  %v5482 = vsel %vm642, %v5461, 0.0
  %v5483 = vsel %vm642, %v5462, 0.0
  %v5484 = vadd.f32 %v5482, %v5483
  %v5485 = vsel %vm642, %v5463, 0.0
  %v5486 = vadd.f32 %v5484, %v5485
  %v5487 = vsel %vm642, %v5464, 0.0
  %v5488 = vadd.f32 %v5486, %v5487
  %v5489 = vsel %vm642, %v5465, 0.0
  %v5490 = vadd.f32 %v5488, %v5489
  %v5491 = vsel %vm642, %v5466, 0.0
  %v5492 = vadd.f32 %v5490, %v5491
  %v5493 = vsel %vm642, %v5467, 0.0
  %v5494 = vadd.f32 %v5492, %v5493
  %v5495 = vsel %vm642, %v5468, 0.0
  %v5496 = vadd.f32 %v5494, %v5495
  %v5497 = vsel %vm642, %v5469, 0.0
  %v5498 = vadd.f32 %v5496, %v5497
  %v5499 = vsel %vm642, %v5470, 0.0
  %v5500 = vadd.f32 %v5498, %v5499
  %v5501 = vsel %vm642, %v5471, 0.0
  %v5502 = vadd.f32 %v5500, %v5501
  %v5503 = vsel %vm642, %v5472, 0.0
  %v5504 = vadd.f32 %v5502, %v5503
  %v5505 = vsel %vm642, %v5473, 0.0
  %v5506 = vadd.f32 %v5504, %v5505
  %v5507 = vsel %vm642, %v5474, 0.0
  %v5508 = vadd.f32 %v5506, %v5507
  %v5509 = vsel %vm642, %v5475, 0.0
  %v5510 = vadd.f32 %v5508, %v5509
  %v5511 = vsel %vm642, %v5476, 0.0
  %v5512 = vadd.f32 %v5510, %v5511
  %v5513 = vsel %vm642, %v5477, 0.0
  %v5514 = vadd.f32 %v5512, %v5513
  %v5515 = vsel %vm642, %v5478, 0.0
  %v5516 = vadd.f32 %v5514, %v5515
  %v5517 = vsel %vm642, %v5479, 0.0
  %v5518 = vadd.f32 %v5516, %v5517
  %v5519 = vsel %vm642, %v5480, 0.0
  %v5520 = vadd.f32 %v5518, %v5519
  %v5521 = vsel %vm5332, %v5481, 0.0
  %v5522 = vadd.f32 %v5520, %v5521
  %v5523 = vrot.slane %v5522, 4
  %v5524 = vadd.f32 %v5522, %v5523
  %v5525 = vrot.slane %v5524, 2
  %v5526 = vadd.f32 %v5524, %v5525
  %v5527 = vrot.slane %v5526, 1
  %v5528 = vadd.f32 %v5526, %v5527
  %v5530 = vsel %vm642, %v5528, 0
  %5532 = vmatprep.subr.mxu0 0.0
  %5533 = vmatpush1.msra.mxu0 %v74
  %5534 = vmatprep.subr.mxu0 0.0
  %5535 = vmatpush1.msra.mxu0 %v75
  %5536 = vmatprep.subr.mxu0 0.0
  %5537 = vmatpush1.msra.mxu0 0.0
  %5538 = vmatprep.subr.mxu0 0.0
  %5539 = vmatpush1.msra.mxu0 0.0
  %5540 = vmatprep.subr.mxu0 0.0
  %5541 = vmatpush1.msra.mxu0 0.0
  %5542 = vmatprep.subr.mxu0 0.0
  %5543 = vmatpush1.msra.mxu0 0.0
  %5544 = vmatprep.subr.mxu0 0.0
  %5545 = vmatpush1.msra.mxu0 0.0
  %5546 = vmatprep.subr.mxu0 0.0
  %5547 = vmatpush1.msra.mxu0 0.0
  %5548 = vmatprep.subr.mxu0 0.0
  %5549 = vmatpush1.msra.mxu0 0.0
  %5550 = vmatprep.subr.mxu0 0.0
  %5551 = vmatpush1.msra.mxu0 0.0
  %5552 = vmatprep.subr.mxu0 0.0
  %5553 = vmatpush1.msra.mxu0 0.0
  %5554 = vmatprep.subr.mxu0 0.0
  %5555 = vmatpush1.msra.mxu0 0.0
  %5556 = vmatprep.subr.mxu0 0.0
  %5557 = vmatpush1.msra.mxu0 0.0
  %5558 = vmatprep.subr.mxu0 0.0
  %5559 = vmatpush1.msra.mxu0 0.0
  %5560 = vmatprep.subr.mxu0 0.0
  %5561 = vmatpush1.msra.mxu0 0.0
  %5562 = vmatprep.subr.mxu0 0.0
  %5563 = vmatpush1.msra.mxu0 0.0
  %5564 = vmatprep.subr.mxu0 0.0
  %5565 = vmatpush1.msra.mxu0 0.0
  %5566 = vmatprep.subr.mxu0 0.0
  %5567 = vmatpush1.msra.mxu0 0.0
  %5568 = vmatprep.subr.mxu0 0.0
  %5569 = vmatpush1.msra.mxu0 0.0
  %5570 = vmatprep.subr.mxu0 0.0
  %5571 = vmatpush1.msra.mxu0 0.0
  %5572 = vmatprep.subr.mxu0 0.0
  %5573 = vmatpush1.msra.mxu0 0.0
  %5574 = vmatprep.subr.mxu0 0.0
  %5575 = vmatpush1.msra.mxu0 0.0
  %5576 = vmatprep.subr.mxu0 0.0
  %5577 = vmatpush1.msra.mxu0 0.0
  %5578 = vmatprep.subr.mxu0 0.0
  %5579 = vmatpush1.msra.mxu0 0.0
  %5580 = vmatprep.subr.mxu0 0.0
  %5581 = vmatpush1.msra.mxu0 0.0
  %5582 = vmatprep.subr.mxu0 0.0
  %5583 = vmatpush1.msra.mxu0 0.0
  %5584 = vmatprep.subr.mxu0 0.0
  %5585 = vmatpush1.msra.mxu0 0.0
  %5586 = vmatprep.subr.mxu0 0.0
  %5587 = vmatpush1.msra.mxu0 0.0
  %5588 = vmatprep.subr.mxu0 0.0
  %5589 = vmatpush1.msra.mxu0 0.0
  %5590 = vmatprep.subr.mxu0 0.0
  %5591 = vmatpush1.msra.mxu0 0.0
  %5592 = vmatprep.subr.mxu0 0.0
  %5593 = vmatpush1.msra.mxu0 0.0
  %5594 = vmatprep.subr.mxu0 0.0
  %5595 = vmatpush1.msra.mxu0 0.0
  %5596 = vmatprep.mubr.f32.mxu0 0.0
  %5597 = vmatmul.mubr.f32.gmra.mrb[0].mxu0 %v5530
  %v5598 = vpop.f32.mrb[0].mxu0
  %v5599 = vadd.f32 0.0, %v5598
  %v5600 = vpop.f32.mrb[0].mxu0
  %5601 = vdwg.mxu0
  %v5602 = vmul.f32 %v5599, 0.001953125
  %v5603 = vadd.f32 %v5602, 1e-05
  %v5604 = vrsqrt.pop %v5603
  %v5605 = vmul.f32 %v5604, %v5208
  %v5606 = vlaneseq
  %v5607 = vshrl.u32 %v5606, 7
  %v5608 = vsub.s32 0, %v5607
  %v5609 = vrot.slane %v5605, %v5608
  %v5610 = vmul.f32 %v5440, %v5609
  %v5611 = vmul.f32 %v5441, %v5609
  %v5612 = vmul.f32 %v5442, %v5609
  %v5613 = vmul.f32 %v5443, %v5609
  %v5614 = vmul.f32 %v5444, %v5609
  %v5615 = vmul.f32 %v5445, %v5609
  %v5616 = vmul.f32 %v5446, %v5609
  %v5617 = vmul.f32 %v5447, %v5609
  %v5618 = vmul.f32 %v5448, %v5609
  %v5619 = vmul.f32 %v5449, %v5609
  %v5620 = vmul.f32 %v5450, %v5609
  %v5621 = vmul.f32 %v5451, %v5609
  %v5622 = vmul.f32 %v5452, %v5609
  %v5623 = vmul.f32 %v5453, %v5609
  %v5624 = vmul.f32 %v5454, %v5609
  %v5625 = vmul.f32 %v5455, %v5609
  %v5626 = vmul.f32 %v5456, %v5609
  %v5627 = vmul.f32 %v5457, %v5609
  %v5628 = vmul.f32 %v5458, %v5609
  %v5629 = vmul.f32 %v5459, %v5609
  %v5630 = vmul.f32 %v5460, %v5609
  %v5632 = vlaneseq
  %v5633 = vshrl.u32 %v5632, 7
  %v5634 = vsub.s32 0, %v5633
  %v5635 = vrot.slane %v5209, %v5634
  %v5637 = vadd.f32 %v5610, %v5635
  %v5638 = vadd.f32 %v5611, %v5635
  %v5639 = vadd.f32 %v5612, %v5635
  %v5640 = vadd.f32 %v5613, %v5635
  %v5641 = vadd.f32 %v5614, %v5635
  %v5642 = vadd.f32 %v5615, %v5635
  %v5643 = vadd.f32 %v5616, %v5635
  %v5644 = vadd.f32 %v5617, %v5635
  %v5645 = vadd.f32 %v5618, %v5635
  %v5646 = vadd.f32 %v5619, %v5635
  %v5647 = vadd.f32 %v5620, %v5635
  %v5648 = vadd.f32 %v5621, %v5635
  %v5649 = vadd.f32 %v5622, %v5635
  %v5650 = vadd.f32 %v5623, %v5635
  %v5651 = vadd.f32 %v5624, %v5635
  %v5652 = vadd.f32 %v5625, %v5635
  %v5653 = vadd.f32 %v5626, %v5635
  %v5654 = vadd.f32 %v5627, %v5635
  %v5655 = vadd.f32 %v5628, %v5635
  %v5656 = vadd.f32 %v5629, %v5635
  %v5657 = vadd.f32 %v5630, %v5635
  %v5658 = vmax.f32 %v5637, 0.0
  %v5659 = vmax.f32 %v5638, 0.0
  %v5660 = vmax.f32 %v5639, 0.0
  %v5661 = vmax.f32 %v5640, 0.0
  %v5662 = vmax.f32 %v5641, 0.0
  %v5663 = vmax.f32 %v5642, 0.0
  %v5664 = vmax.f32 %v5643, 0.0
  %v5665 = vmax.f32 %v5644, 0.0
  %v5666 = vmax.f32 %v5645, 0.0
  %v5667 = vmax.f32 %v5646, 0.0
  %v5668 = vmax.f32 %v5647, 0.0
  %v5669 = vmax.f32 %v5648, 0.0
  %v5670 = vmax.f32 %v5649, 0.0
  %v5671 = vmax.f32 %v5650, 0.0
  %v5672 = vmax.f32 %v5651, 0.0
  %v5673 = vmax.f32 %v5652, 0.0
  %v5674 = vmax.f32 %v5653, 0.0
  %v5675 = vmax.f32 %v5654, 0.0
  %v5676 = vmax.f32 %v5655, 0.0
  %v5677 = vmax.f32 %v5656, 0.0
  %v5678 = vmax.f32 %v5657, 0.0
  %v5679 = vmul.f32 %v5658, %v5212
  %v5680 = vmul.f32 %v5659, %v5214
  %v5681 = vmul.f32 %v5660, %v5216
  %v5682 = vmul.f32 %v5661, %v5218
  %v5683 = vmul.f32 %v5662, %v5220
  %v5684 = vmul.f32 %v5663, %v5222
  %v5685 = vmul.f32 %v5664, %v5224
  %v5686 = vmul.f32 %v5665, %v5226
  %v5687 = vmul.f32 %v5666, %v5228
  %v5688 = vmul.f32 %v5667, %v5230
  %v5689 = vmul.f32 %v5668, %v5232
  %v5690 = vmul.f32 %v5669, %v5234
  %v5691 = vmul.f32 %v5670, %v5236
  %v5692 = vmul.f32 %v5671, %v5238
  %v5693 = vmul.f32 %v5672, %v5240
  %v5694 = vmul.f32 %v5673, %v5242
  %v5695 = vmul.f32 %v5674, %v5244
  %v5696 = vmul.f32 %v5675, %v5246
  %v5697 = vmul.f32 %v5676, %v5248
  %v5698 = vmul.f32 %v5677, %v5250
  %v5699 = vmul.f32 %v5678, %v5249
  %5700 = vst.msk [vmem:[%s14] sm:$0xff] %vm642, %v5679
  %5701 = vst.msk [vmem:[%s14 + $0x8] sm:$0xff] %vm642, %v5680
  %5702 = vst.msk [vmem:[%s14 + $0x10] sm:$0xff] %vm642, %v5681
  %5703 = vst.msk [vmem:[%s14 + $0x18] sm:$0xff] %vm642, %v5682
  %5704 = vst.msk [vmem:[%s14 + $0x20] sm:$0xff] %vm642, %v5683
  %5705 = vst.msk [vmem:[%s14 + $0x28] sm:$0xff] %vm642, %v5684
  %5706 = vst.msk [vmem:[%s14 + $0x30] sm:$0xff] %vm642, %v5685
  %5707 = vst.msk [vmem:[%s14 + $0x38] sm:$0xff] %vm642, %v5686
  %5708 = vst.msk [vmem:[%s14 + $0x40] sm:$0xff] %vm642, %v5687
  %5709 = vst.msk [vmem:[%s14 + $0x48] sm:$0xff] %vm642, %v5688
  %5710 = vst.msk [vmem:[%s14 + $0x50] sm:$0xff] %vm642, %v5689
  %5711 = vst.msk [vmem:[%s14 + $0x58] sm:$0xff] %vm642, %v5690
  %5712 = vst.msk [vmem:[%s14 + $0x60] sm:$0xff] %vm642, %v5691
  %5713 = vst.msk [vmem:[%s14 + $0x68] sm:$0xff] %vm642, %v5692
  %5714 = vst.msk [vmem:[%s14 + $0x70] sm:$0xff] %vm642, %v5693
  %5715 = vst.msk [vmem:[%s14 + $0x78] sm:$0xff] %vm642, %v5694
  %5716 = vst.msk [vmem:[%s14 + $0x80] sm:$0xff] %vm642, %v5695
  %5717 = vst.msk [vmem:[%s14 + $0x88] sm:$0xff] %vm642, %v5696
  %5718 = vst.msk [vmem:[%s14 + $0x90] sm:$0xff] %vm642, %v5697
  %5719 = vst.msk [vmem:[%s14 + $0x98] sm:$0xff] %vm642, %v5698
  %5720 = vst.msk [vmem:[%s14 + $0xa0] sm:$0x3] %vm5332, %v5699
  // Predicated region
  $region58: #{decoder_forward.1} parent=0 // pred_check
    _
  $region59: #{decoder_forward.1} parent=0 // pred_check_branch
    %5722 = sbr.rel (0) target = $region61
  $region60: #{decoder_forward.1} parent=0 // pred_region
    _
  $region61: #{decoder_forward.1} parent=0 // pred_fallthru
    _
  // Predicated region
  $region62: #{decoder_forward.1} parent=0 // pred_check
    _
  $region63: #{decoder_forward.1} parent=0 // pred_check_branch
    %5724 = sbr.rel (0) target = $region65
  $region64: #{decoder_forward.1} parent=0 // pred_region
    _
  $region65: #{decoder_forward.1} parent=0 // pred_fallthru
    _

</llo_original>
